<compile_context>
chip_gen: v7x
topology: tpu7x:2x2x1
jax: 0.10.0
libtpu: 0.0.40
codegen_flags: <defaults>
</compile_context>

<pallas_src>
import functools
import math

import numpy as np
import jax
import jax.numpy as jnp
from jax.experimental import pallas as pl
from jax.experimental.pallas import tpu as pltpu


def _vmem_capacity_bytes(default=64 << 20):
    """Physical per-core VMEM bytes (v5e/v6e: 128 MiB, v7x: 64 MiB)."""
    try:
        info = pltpu.get_tpu_info()
        for attr in ("vmem_capacity_bytes", "vmem_bytes", "vmem_size_bytes"):
            v = getattr(info, attr, None)
            if v:
                return int(v)
    except Exception:
        pass
    return default


# ----------------------------------------------------------------------------
# Path (a): HBM->HBM DMA scatter.
# ----------------------------------------------------------------------------
def _dma_scatter_kernel(x_hbm, o_hbm, sem, *, n_j, n_rows, n_cols, stride, H, W,
                        ring):
    """Single invocation: one HBM->HBM DMA per contributing patch rectangle.

    x_hbm : (N, C, P, P) in HBM     o_hbm : (C, H, W) in HBM
    sem   : ring of DMA semaphores keeping up to `ring` copies in flight.
    """
    inflight = []
    k = 0
    for i in range(n_rows):
        ty = i * stride
        h = min(stride, H - ty)
        for j in range(n_cols):
            tx = j * stride
            w = min(stride, W - tx)
            idx = i * n_j + j
            cp = pltpu.make_async_copy(
                x_hbm.at[idx, :, :h, :w],
                o_hbm.at[:, ty:ty + h, tx:tx + w],
                sem.at[k % ring],
            )
            if k >= ring:
                inflight[k - ring].wait()   # recycle this semaphore slot
            cp.start()
            inflight.append(cp)
            k += 1
    # Drain the ring.
    for cp in inflight[max(0, k - ring):]:
        cp.wait()


# ----------------------------------------------------------------------------
# Path (b): BlockSpec-pipelined VMEM paste (tiny strides).
# ----------------------------------------------------------------------------
def _paste_kernel(x_ref, o_ref, *, stride, block_h, n_full_cols, tail_cols):
    """One grid step: paste one row-strip of patches for one channel block.

    x_ref : (rows_per_strip, n_cols_used, c_blk, P, P)  patches of this strip
    o_ref : (c_blk, block_h, W)                         output row strip
    """
    rows_per_strip = x_ref.shape[0]
    # Static offsets/extents -> static VMEM slice stores; each in-bounds output
    # element of the strip is written exactly once.
    # TODO(synk): for very large W/stride (hundreds of columns per strip) switch
    # the column loop to lax.fori_loop over full-width columns (pl.ds starts
    # with pl.multiple_of hints) to bound code size; at those sizes the
    # HBM->HBM DMA-scatter path is usually selected anyway.
    # TODO(synk): vreg micro-opt from review (not implemented): blend the few
    # patches covering each 128-lane output tile with pltpu.roll + iota masks
    # and store unmasked full-width tiles instead of lane-misaligned vst.msk.
    for l in range(rows_per_strip):
        ty = l * stride
        h = min(stride, block_h - ty)
        if h <= 0:
            break
        for j in range(n_full_cols):
            tx = j * stride
            o_ref[:, ty:ty + h, tx:tx + stride] = x_ref[l, j, :, :h, :stride]
        for j, tx, w in tail_cols:   # at most one partial-width right-edge column
            o_ref[:, ty:ty + h, tx:tx + w] = x_ref[l, j, :, :h, :w]


# ----------------------------------------------------------------------------
# Wrapper.
# ----------------------------------------------------------------------------
def patch_reduction_overlap(
    x, H, W, patch_size=128, overlap_factor=2, *,
    use_dma_scatter=None,     # None -> auto: DMA rows >= dma_min_row_bytes
    dma_min_row_bytes=256,
    dma_ring=8,
    vmem_budget_bytes=None,   # None -> derived from this chip's VMEM capacity
):
    stride = patch_size - overlap_factor
    assert 1 <= stride <= patch_size, "need 0 <= overlap_factor < patch_size"
    H_pad = H + patch_size - H % stride
    W_pad = W + patch_size - W % stride
    n_i = H_pad // stride
    n_j = W_pad // stride

    N, C, ph, pw = x.shape
    assert ph == patch_size and pw == patch_size
    assert N == n_i * n_j, f"expected {n_i * n_j} patches, got {N}"

    itemsize = np.dtype(x.dtype).itemsize
    # Patches that actually contribute to the cropped [:, :H, :W] output.
    n_rows_used = -(-H // stride)
    n_cols_used = -(-W // stride)

    if use_dma_scatter is None:
        use_dma_scatter = stride * itemsize >= dma_min_row_bytes

    # -------------------- (a) HBM->HBM DMA scatter --------------------------
    if use_dma_scatter:
        ring = max(1, int(dma_ring))
        kernel = functools.partial(
            _dma_scatter_kernel, n_j=n_j, n_rows=n_rows_used,
            n_cols=n_cols_used, stride=stride, H=H, W=W, ring=ring)
        return pl.pallas_call(
            kernel,
            out_shape=jax.ShapeDtypeStruct((C, H, W), x.dtype),
            grid=(1,),
            in_specs=[pl.BlockSpec(memory_space=pl.ANY)],
            out_specs=pl.BlockSpec(memory_space=pl.ANY),
            scratch_shapes=[pltpu.SemaphoreType.DMA((ring,))],
            compiler_params=pltpu.CompilerParams(has_side_effects=True),
        )(x)

    # -------------------- (b) BlockSpec-pipelined VMEM path -----------------
    # Row-strip height: smallest multiple of `stride` that is sublane-aligned
    # so the output BlockSpec satisfies the (8,128) rule; fall back to full H
    # (full-dim blocks are always legal) for small images.
    sublane = max(8, 32 // max(itemsize, 1))
    rows_per_strip = sublane // math.gcd(stride, sublane)
    block_h = rows_per_strip * stride
    if block_h >= H:
        block_h = H
        rows_per_strip = n_rows_used
        n_strips = 1
    else:
        n_strips = -(-H // block_h)

    # View x as (n_i, n_j, C, P, P) so each strip fetches only the n_cols_used
    # patch columns that contribute (free bandwidth win when W_pad >> W).
    x5 = jnp.reshape(x, (n_i, n_j, C, patch_size, patch_size))

    # Per-generation VMEM budgeting: v7x (64 MiB physical) -> limit cap ~50 MiB,
    # budget ~35 MiB; v5e/v6e (128 MiB) -> cap ~100 MiB, budget ~70 MiB so the
    # chooser keeps full-C blocks and fewer grid steps.
    vmem_cap = _vmem_capacity_bytes()
    vmem_limit_cap = int(vmem_cap * 0.78)
    if vmem_budget_bytes is None:
        vmem_budget_bytes = int(vmem_limit_cap * 0.70)

    per_c_bytes = (rows_per_strip * n_cols_used * patch_size * patch_size
                   + block_h * W) * itemsize
    # Prefer c_blk == C (contiguous, full-C input blocks DMA best); the strip is
    # already minimal height, so only cut channels if double-buffered blocks
    # do not fit the budget.
    c_blk = 1
    for d in range(C, 0, -1):
        if C % d == 0 and 2 * d * per_c_bytes <= vmem_budget_bytes:
            c_blk = d
            break
    # TODO(synk): if even c_blk == 1 busts the budget (huge W with tiny stride),
    # additionally block over output-column groups of lcm(stride, 128).

    block_bytes = c_blk * per_c_bytes
    vmem_limit = int(min(vmem_limit_cap, max(32 << 20, int(2.5 * block_bytes))))

    n_full_cols = min(n_cols_used, W // stride)
    tail_cols = tuple((j, j * stride, W - j * stride)
                      for j in range(n_full_cols, n_cols_used))

    kernel = functools.partial(
        _paste_kernel, stride=stride, block_h=block_h,
        n_full_cols=n_full_cols, tail_cols=tail_cols)

    # TODO(synk): on v7x, sweep pipeline_mode=pl.Buffered(3) on the input spec
    # (a few % when the in-fetch and out-writeback DMAs contend for HBM).
    return pl.pallas_call(
        kernel,
        out_shape=jax.ShapeDtypeStruct((C, H, W), x.dtype),
        grid=(C // c_blk, n_strips),
        in_specs=[
            pl.BlockSpec(
                (rows_per_strip, n_cols_used, c_blk, patch_size, patch_size),
                lambda c, s: (s, 0, c, 0, 0)),
        ],
        out_specs=pl.BlockSpec((c_blk, block_h, W), lambda c, s: (c, s, 0)),
        compiler_params=pltpu.CompilerParams(
            dimension_semantics=("parallel", "parallel"),
            vmem_limit_bytes=vmem_limit,
        ),
    )(x5)


# ----------------------------------------------------------------------------
# Reference + self-test.
# ----------------------------------------------------------------------------
def _reference(x_np, H, W, patch_size, overlap_factor):
    stride = patch_size - overlap_factor
    H_pad = H + patch_size - H % stride
    W_pad = W + patch_size - W % stride
    C = x_np.shape[1]
    canvas = np.zeros((C, H_pad, W_pad), dtype=x_np.dtype)
    idx = 0
    for i in range(H_pad // stride):
        for j in range(W_pad // stride):
            ty, tx = i * stride, j * stride
            canvas[:, ty:ty + patch_size, tx:tx + patch_size] = x_np[idx]
            idx += 1
    return canvas[:, :H, :W]


def _run_case(key, H, W, patch_size, overlap_factor, C, **kw):
    stride = patch_size - overlap_factor
    H_pad = H + patch_size - H % stride
    W_pad = W + patch_size - W % stride
    N = (H_pad // stride) * (W_pad // stride)
    x = jax.random.normal(key, (N, C, patch_size, patch_size), dtype=jnp.float32)
    out = jax.block_until_ready(
        patch_reduction_overlap(x, H, W, patch_size, overlap_factor, **kw))
    ref = _reference(np.asarray(x), H, W, patch_size, overlap_factor)
    np.testing.assert_array_equal(np.asarray(out), ref)


if __name__ == "__main__":
    key = jax.random.PRNGKey(0)
    k1, k2, k3 = jax.random.split(key, 3)

    # 1) VMEM/BlockSpec path (tiny stride): patch=16, overlap=2 (stride 14),
    #    H=W=224, C=4 -> 17x17 = 289 patches, grid = (1 channel blk, 4 strips).
    _run_case(k1, H=224, W=224, patch_size=16, overlap_factor=2, C=4)

    # 2) HBM->HBM DMA-scatter path (module default patch_size=128, stride 126):
    #    H=W=136, C=3 -> 2x2 = 4 patches, 4 rectangle DMAs, no vector stores.
    _run_case(k2, H=136, W=136, patch_size=128, overlap_factor=2, C=3)

    # 3) VMEM path with ragged tails: H not divisible by the 56-row strip and
    #    W not divisible by stride (boundary blocks + partial right column).
    _run_case(k3, H=226, W=225, patch_size=16, overlap_factor=2, C=2)

    print("KERNEL_OK")
</pallas_src>

<mosaic_0001>
module attributes {stable_mosaic.version = 11 : i64} {
  func.func @_paste_kernel(%arg0: i32, %arg1: i32, %arg2: memref<4x16x4x16x16xf32, #tpu.memory_space<vmem>>, %arg3: memref<4x56x224xf32, #tpu.memory_space<vmem>>) attributes {dimension_semantics = [#tpu.dimension_semantics<parallel>, #tpu.dimension_semantics<parallel>], iteration_bounds = array<i64: 1, 4>, scalar_prefetch = 0 : i64, scratch_operands = 0 : i64, tpu.core_type = #tpu.core_type<tc>, window_params = [{transform_indices = @transform_0, window_bounds = array<i64: 4, 16, 4, 16, 16>}, {transform_indices = @transform_1, window_bounds = array<i64: 4, 56, 224>}]} {
    %c0 = arith.constant 0 : index
    %c0_0 = arith.constant 0 : index
    %c0_1 = arith.constant 0 : index
    %c0_2 = arith.constant 0 : index
    %c0_3 = arith.constant 0 : index
    %0 = vector.load %arg2[%c0, %c0_0, %c0_1, %c0_2, %c0_3] : memref<4x16x4x16x16xf32, #tpu.memory_space<vmem>>, vector<1x1x4x14x14xf32>
    %1 = vector.shape_cast %0 : vector<1x1x4x14x14xf32> to vector<4x14x14xf32>
    %c0_4 = arith.constant 0 : index
    %c0_5 = arith.constant 0 : index
    %c0_6 = arith.constant 0 : index
    %2 = vector.load %arg3[%c0_4, %c0_5, %c0_6] : memref<4x56x224xf32, #tpu.memory_space<vmem>>, vector<4x14x14xf32>
    tpu.vector_store %arg3[%c0_4, %c0_5, %c0_6], %1 {strides = array<i32>} : memref<4x56x224xf32, #tpu.memory_space<vmem>>, vector<4x14x14xf32>,
    %c0_7 = arith.constant 0 : index
    %c1 = arith.constant 1 : index
    %c0_8 = arith.constant 0 : index
    %c0_9 = arith.constant 0 : index
    %c0_10 = arith.constant 0 : index
    %3 = vector.load %arg2[%c0_7, %c1, %c0_8, %c0_9, %c0_10] : memref<4x16x4x16x16xf32, #tpu.memory_space<vmem>>, vector<1x1x4x14x14xf32>
    %4 = vector.shape_cast %3 : vector<1x1x4x14x14xf32> to vector<4x14x14xf32>
    %c0_11 = arith.constant 0 : index
    %c0_12 = arith.constant 0 : index
    %c14 = arith.constant 14 : index
    %5 = vector.load %arg3[%c0_11, %c0_12, %c14] : memref<4x56x224xf32, #tpu.memory_space<vmem>>, vector<4x14x14xf32>
    tpu.vector_store %arg3[%c0_11, %c0_12, %c14], %4 {strides = array<i32>} : memref<4x56x224xf32, #tpu.memory_space<vmem>>, vector<4x14x14xf32>,
    %c0_13 = arith.constant 0 : index
    %c2 = arith.constant 2 : index
    %c0_14 = arith.constant 0 : index
    %c0_15 = arith.constant 0 : index
    %c0_16 = arith.constant 0 : index
    %6 = vector.load %arg2[%c0_13, %c2, %c0_14, %c0_15, %c0_16] : memref<4x16x4x16x16xf32, #tpu.memory_space<vmem>>, vector<1x1x4x14x14xf32>
    %7 = vector.shape_cast %6 : vector<1x1x4x14x14xf32> to vector<4x14x14xf32>
    %c0_17 = arith.constant 0 : index
    %c0_18 = arith.constant 0 : index
    %c28 = arith.constant 28 : index
    %8 = vector.load %arg3[%c0_17, %c0_18, %c28] : memref<4x56x224xf32, #tpu.memory_space<vmem>>, vector<4x14x14xf32>
    tpu.vector_store %arg3[%c0_17, %c0_18, %c28], %7 {strides = array<i32>} : memref<4x56x224xf32, #tpu.memory_space<vmem>>, vector<4x14x14xf32>,
    %c0_19 = arith.constant 0 : index
    %c3 = arith.constant 3 : index
    %c0_20 = arith.constant 0 : index
    %c0_21 = arith.constant 0 : index
    %c0_22 = arith.constant 0 : index
    %9 = vector.load %arg2[%c0_19, %c3, %c0_20, %c0_21, %c0_22] : memref<4x16x4x16x16xf32, #tpu.memory_space<vmem>>, vector<1x1x4x14x14xf32>
    %10 = vector.shape_cast %9 : vector<1x1x4x14x14xf32> to vector<4x14x14xf32>
    %c0_23 = arith.constant 0 : index
    %c0_24 = arith.constant 0 : index
    %c42 = arith.constant 42 : index
    %11 = vector.load %arg3[%c0_23, %c0_24, %c42] : memref<4x56x224xf32, #tpu.memory_space<vmem>>, vector<4x14x14xf32>
    tpu.vector_store %arg3[%c0_23, %c0_24, %c42], %10 {strides = array<i32>} : memref<4x56x224xf32, #tpu.memory_space<vmem>>, vector<4x14x14xf32>,
    %c0_25 = arith.constant 0 : index
    %c4 = arith.constant 4 : index
    %c0_26 = arith.constant 0 : index
    %c0_27 = arith.constant 0 : index
    %c0_28 = arith.constant 0 : index
    %12 = vector.load %arg2[%c0_25, %c4, %c0_26, %c0_27, %c0_28] : memref<4x16x4x16x16xf32, #tpu.memory_space<vmem>>, vector<1x1x4x14x14xf32>
    %13 = vector.shape_cast %12 : vector<1x1x4x14x14xf32> to vector<4x14x14xf32>
    %c0_29 = arith.constant 0 : index
    %c0_30 = arith.constant 0 : index
    %c56 = arith.constant 56 : index
    %14 = vector.load %arg3[%c0_29, %c0_30, %c56] : memref<4x56x224xf32, #tpu.memory_space<vmem>>, vector<4x14x14xf32>
    tpu.vector_store %arg3[%c0_29, %c0_30, %c56], %13 {strides = array<i32>} : memref<4x56x224xf32, #tpu.memory_space<vmem>>, vector<4x14x14xf32>,
    %c0_31 = arith.constant 0 : index
    %c5 = arith.constant 5 : index
    %c0_32 = arith.constant 0 : index
    %c0_33 = arith.constant 0 : index
    %c0_34 = arith.constant 0 : index
    %15 = vector.load %arg2[%c0_31, %c5, %c0_32, %c0_33, %c0_34] : memref<4x16x4x16x16xf32, #tpu.memory_space<vmem>>, vector<1x1x4x14x14xf32>
    %16 = vector.shape_cast %15 : vector<1x1x4x14x14xf32> to vector<4x14x14xf32>
    %c0_35 = arith.constant 0 : index
    %c0_36 = arith.constant 0 : index
    %c70 = arith.constant 70 : index
    %17 = vector.load %arg3[%c0_35, %c0_36, %c70] : memref<4x56x224xf32, #tpu.memory_space<vmem>>, vector<4x14x14xf32>
    tpu.vector_store %arg3[%c0_35, %c0_36, %c70], %16 {strides = array<i32>} : memref<4x56x224xf32, #tpu.memory_space<vmem>>, vector<4x14x14xf32>,
    %c0_37 = arith.constant 0 : index
    %c6 = arith.constant 6 : index
    %c0_38 = arith.constant 0 : index
    %c0_39 = arith.constant 0 : index
    %c0_40 = arith.constant 0 : index
    %18 = vector.load %arg2[%c0_37, %c6, %c0_38, %c0_39, %c0_40] : memref<4x16x4x16x16xf32, #tpu.memory_space<vmem>>, vector<1x1x4x14x14xf32>
    %19 = vector.shape_cast %18 : vector<1x1x4x14x14xf32> to vector<4x14x14xf32>
    %c0_41 = arith.constant 0 : index
    %c0_42 = arith.constant 0 : index
    %c84 = arith.constant 84 : index
    %20 = vector.load %arg3[%c0_41, %c0_42, %c84] : memref<4x56x224xf32, #tpu.memory_space<vmem>>, vector<4x14x14xf32>
    tpu.vector_store %arg3[%c0_41, %c0_42, %c84], %19 {strides = array<i32>} : memref<4x56x224xf32, #tpu.memory_space<vmem>>, vector<4x14x14xf32>,
    %c0_43 = arith.constant 0 : index
    %c7 = arith.constant 7 : index
    %c0_44 = arith.constant 0 : index
    %c0_45 = arith.constant 0 : index
    %c0_46 = arith.constant 0 : index
    %21 = vector.load %arg2[%c0_43, %c7, %c0_44, %c0_45, %c0_46] : memref<4x16x4x16x16xf32, #tpu.memory_space<vmem>>, vector<1x1x4x14x14xf32>
    %22 = vector.shape_cast %21 : vector<1x1x4x14x14xf32> to vector<4x14x14xf32>
    %c0_47 = arith.constant 0 : index
    %c0_48 = arith.constant 0 : index
    %c98 = arith.constant 98 : index
    %23 = vector.load %arg3[%c0_47, %c0_48, %c98] : memref<4x56x224xf32, #tpu.memory_space<vmem>>, vector<4x14x14xf32>
    tpu.vector_store %arg3[%c0_47, %c0_48, %c98], %22 {strides = array<i32>} : memref<4x56x224xf32, #tpu.memory_space<vmem>>, vector<4x14x14xf32>,
    %c0_49 = arith.constant 0 : index
    %c8 = arith.constant 8 : index
    %c0_50 = arith.constant 0 : index
    %c0_51 = arith.constant 0 : index
    %c0_52 = arith.constant 0 : index
    %24 = vector.load %arg2[%c0_49, %c8, %c0_50, %c0_51, %c0_52] : memref<4x16x4x16x16xf32, #tpu.memory_space<vmem>>, vector<1x1x4x14x14xf32>
    %25 = vector.shape_cast %24 : vector<1x1x4x14x14xf32> to vector<4x14x14xf32>
    %c0_53 = arith.constant 0 : index
    %c0_54 = arith.constant 0 : index
    %c112 = arith.constant 112 : index
    %26 = vector.load %arg3[%c0_53, %c0_54, %c112] : memref<4x56x224xf32, #tpu.memory_space<vmem>>, vector<4x14x14xf32>
    tpu.vector_store %arg3[%c0_53, %c0_54, %c112], %25 {strides = array<i32>} : memref<4x56x224xf32, #tpu.memory_space<vmem>>, vector<4x14x14xf32>,
    %c0_55 = arith.constant 0 : index
    %c9 = arith.constant 9 : index
    %c0_56 = arith.constant 0 : index
    %c0_57 = arith.constant 0 : index
    %c0_58 = arith.constant 0 : index
    %27 = vector.load %arg2[%c0_55, %c9, %c0_56, %c0_57, %c0_58] : memref<4x16x4x16x16xf32, #tpu.memory_space<vmem>>, vector<1x1x4x14x14xf32>
    %28 = vector.shape_cast %27 : vector<1x1x4x14x14xf32> to vector<4x14x14xf32>
    %c0_59 = arith.constant 0 : index
    %c0_60 = arith.constant 0 : index
    %c126 = arith.constant 126 : index
    %29 = vector.load %arg3[%c0_59, %c0_60, %c126] : memref<4x56x224xf32, #tpu.memory_space<vmem>>, vector<4x14x14xf32>
    tpu.vector_store %arg3[%c0_59, %c0_60, %c126], %28 {strides = array<i32>} : memref<4x56x224xf32, #tpu.memory_space<vmem>>, vector<4x14x14xf32>,
    %c0_61 = arith.constant 0 : index
    %c10 = arith.constant 10 : index
    %c0_62 = arith.constant 0 : index
    %c0_63 = arith.constant 0 : index
    %c0_64 = arith.constant 0 : index
    %30 = vector.load %arg2[%c0_61, %c10, %c0_62, %c0_63, %c0_64] : memref<4x16x4x16x16xf32, #tpu.memory_space<vmem>>, vector<1x1x4x14x14xf32>
    %31 = vector.shape_cast %30 : vector<1x1x4x14x14xf32> to vector<4x14x14xf32>
    %c0_65 = arith.constant 0 : index
    %c0_66 = arith.constant 0 : index
    %c140 = arith.constant 140 : index
    %32 = vector.load %arg3[%c0_65, %c0_66, %c140] : memref<4x56x224xf32, #tpu.memory_space<vmem>>, vector<4x14x14xf32>
    tpu.vector_store %arg3[%c0_65, %c0_66, %c140], %31 {strides = array<i32>} : memref<4x56x224xf32, #tpu.memory_space<vmem>>, vector<4x14x14xf32>,
    %c0_67 = arith.constant 0 : index
    %c11 = arith.constant 11 : index
    %c0_68 = arith.constant 0 : index
    %c0_69 = arith.constant 0 : index
    %c0_70 = arith.constant 0 : index
    %33 = vector.load %arg2[%c0_67, %c11, %c0_68, %c0_69, %c0_70] : memref<4x16x4x16x16xf32, #tpu.memory_space<vmem>>, vector<1x1x4x14x14xf32>
    %34 = vector.shape_cast %33 : vector<1x1x4x14x14xf32> to vector<4x14x14xf32>
    %c0_71 = arith.constant 0 : index
    %c0_72 = arith.constant 0 : index
    %c154 = arith.constant 154 : index
    %35 = vector.load %arg3[%c0_71, %c0_72, %c154] : memref<4x56x224xf32, #tpu.memory_space<vmem>>, vector<4x14x14xf32>
    tpu.vector_store %arg3[%c0_71, %c0_72, %c154], %34 {strides = array<i32>} : memref<4x56x224xf32, #tpu.memory_space<vmem>>, vector<4x14x14xf32>,
    %c0_73 = arith.constant 0 : index
    %c12 = arith.constant 12 : index
    %c0_74 = arith.constant 0 : index
    %c0_75 = arith.constant 0 : index
    %c0_76 = arith.constant 0 : index
    %36 = vector.load %arg2[%c0_73, %c12, %c0_74, %c0_75, %c0_76] : memref<4x16x4x16x16xf32, #tpu.memory_space<vmem>>, vector<1x1x4x14x14xf32>
    %37 = vector.shape_cast %36 : vector<1x1x4x14x14xf32> to vector<4x14x14xf32>
    %c0_77 = arith.constant 0 : index
    %c0_78 = arith.constant 0 : index
    %c168 = arith.constant 168 : index
    %38 = vector.load %arg3[%c0_77, %c0_78, %c168] : memref<4x56x224xf32, #tpu.memory_space<vmem>>, vector<4x14x14xf32>
    tpu.vector_store %arg3[%c0_77, %c0_78, %c168], %37 {strides = array<i32>} : memref<4x56x224xf32, #tpu.memory_space<vmem>>, vector<4x14x14xf32>,
    %c0_79 = arith.constant 0 : index
    %c13 = arith.constant 13 : index
    %c0_80 = arith.constant 0 : index
    %c0_81 = arith.constant 0 : index
    %c0_82 = arith.constant 0 : index
    %39 = vector.load %arg2[%c0_79, %c13, %c0_80, %c0_81, %c0_82] : memref<4x16x4x16x16xf32, #tpu.memory_space<vmem>>, vector<1x1x4x14x14xf32>
    %40 = vector.shape_cast %39 : vector<1x1x4x14x14xf32> to vector<4x14x14xf32>
    %c0_83 = arith.constant 0 : index
    %c0_84 = arith.constant 0 : index
    %c182 = arith.constant 182 : index
    %41 = vector.load %arg3[%c0_83, %c0_84, %c182] : memref<4x56x224xf32, #tpu.memory_space<vmem>>, vector<4x14x14xf32>
    tpu.vector_store %arg3[%c0_83, %c0_84, %c182], %40 {strides = array<i32>} : memref<4x56x224xf32, #tpu.memory_space<vmem>>, vector<4x14x14xf32>,
    %c0_85 = arith.constant 0 : index
    %c14_86 = arith.constant 14 : index
    %c0_87 = arith.constant 0 : index
    %c0_88 = arith.constant 0 : index
    %c0_89 = arith.constant 0 : index
    %42 = vector.load %arg2[%c0_85, %c14_86, %c0_87, %c0_88, %c0_89] : memref<4x16x4x16x16xf32, #tpu.memory_space<vmem>>, vector<1x1x4x14x14xf32>
    %43 = vector.shape_cast %42 : vector<1x1x4x14x14xf32> to vector<4x14x14xf32>
    %c0_90 = arith.constant 0 : index
    %c0_91 = arith.constant 0 : index
    %c196 = arith.constant 196 : index
    %44 = vector.load %arg3[%c0_90, %c0_91, %c196] : memref<4x56x224xf32, #tpu.memory_space<vmem>>, vector<4x14x14xf32>
    tpu.vector_store %arg3[%c0_90, %c0_91, %c196], %43 {strides = array<i32>} : memref<4x56x224xf32, #tpu.memory_space<vmem>>, vector<4x14x14xf32>,
    %c0_92 = arith.constant 0 : index
    %c15 = arith.constant 15 : index
    %c0_93 = arith.constant 0 : index
    %c0_94 = arith.constant 0 : index
    %c0_95 = arith.constant 0 : index
    %45 = vector.load %arg2[%c0_92, %c15, %c0_93, %c0_94, %c0_95] : memref<4x16x4x16x16xf32, #tpu.memory_space<vmem>>, vector<1x1x4x14x14xf32>
    %46 = vector.shape_cast %45 : vector<1x1x4x14x14xf32> to vector<4x14x14xf32>
    %c0_96 = arith.constant 0 : index
    %c0_97 = arith.constant 0 : index
    %c210 = arith.constant 210 : index
    %47 = vector.load %arg3[%c0_96, %c0_97, %c210] : memref<4x56x224xf32, #tpu.memory_space<vmem>>, vector<4x14x14xf32>
    tpu.vector_store %arg3[%c0_96, %c0_97, %c210], %46 {strides = array<i32>} : memref<4x56x224xf32, #tpu.memory_space<vmem>>, vector<4x14x14xf32>,
    %c1_98 = arith.constant 1 : index
    %c0_99 = arith.constant 0 : index
    %c0_100 = arith.constant 0 : index
    %c0_101 = arith.constant 0 : index
    %c0_102 = arith.constant 0 : index
    %48 = vector.load %arg2[%c1_98, %c0_99, %c0_100, %c0_101, %c0_102] : memref<4x16x4x16x16xf32, #tpu.memory_space<vmem>>, vector<1x1x4x14x14xf32>
    %49 = vector.shape_cast %48 : vector<1x1x4x14x14xf32> to vector<4x14x14xf32>
    %c0_103 = arith.constant 0 : index
    %c14_104 = arith.constant 14 : index
    %c0_105 = arith.constant 0 : index
    %50 = vector.load %arg3[%c0_103, %c14_104, %c0_105] : memref<4x56x224xf32, #tpu.memory_space<vmem>>, vector<4x14x14xf32>
    tpu.vector_store %arg3[%c0_103, %c14_104, %c0_105], %49 {strides = array<i32>} : memref<4x56x224xf32, #tpu.memory_space<vmem>>, vector<4x14x14xf32>,
    %c1_106 = arith.constant 1 : index
    %c1_107 = arith.constant 1 : index
    %c0_108 = arith.constant 0 : index
    %c0_109 = arith.constant 0 : index
    %c0_110 = arith.constant 0 : index
    %51 = vector.load %arg2[%c1_106, %c1_107, %c0_108, %c0_109, %c0_110] : memref<4x16x4x16x16xf32, #tpu.memory_space<vmem>>, vector<1x1x4x14x14xf32>
    %52 = vector.shape_cast %51 : vector<1x1x4x14x14xf32> to vector<4x14x14xf32>
    %c0_111 = arith.constant 0 : index
    %c14_112 = arith.constant 14 : index
    %c14_113 = arith.constant 14 : index
    %53 = vector.load %arg3[%c0_111, %c14_112, %c14_113] : memref<4x56x224xf32, #tpu.memory_space<vmem>>, vector<4x14x14xf32>
    tpu.vector_store %arg3[%c0_111, %c14_112, %c14_113], %52 {strides = array<i32>} : memref<4x56x224xf32, #tpu.memory_space<vmem>>, vector<4x14x14xf32>,
    %c1_114 = arith.constant 1 : index
    %c2_115 = arith.constant 2 : index
    %c0_116 = arith.constant 0 : index
    %c0_117 = arith.constant 0 : index
    %c0_118 = arith.constant 0 : index
    %54 = vector.load %arg2[%c1_114, %c2_115, %c0_116, %c0_117, %c0_118] : memref<4x16x4x16x16xf32, #tpu.memory_space<vmem>>, vector<1x1x4x14x14xf32>
    %55 = vector.shape_cast %54 : vector<1x1x4x14x14xf32> to vector<4x14x14xf32>
    %c0_119 = arith.constant 0 : index
    %c14_120 = arith.constant 14 : index
    %c28_121 = arith.constant 28 : index
    %56 = vector.load %arg3[%c0_119, %c14_120, %c28_121] : memref<4x56x224xf32, #tpu.memory_space<vmem>>, vector<4x14x14xf32>
    tpu.vector_store %arg3[%c0_119, %c14_120, %c28_121], %55 {strides = array<i32>} : memref<4x56x224xf32, #tpu.memory_space<vmem>>, vector<4x14x14xf32>,
    %c1_122 = arith.constant 1 : index
    %c3_123 = arith.constant 3 : index
    %c0_124 = arith.constant 0 : index
    %c0_125 = arith.constant 0 : index
    %c0_126 = arith.constant 0 : index
    %57 = vector.load %arg2[%c1_122, %c3_123, %c0_124, %c0_125, %c0_126] : memref<4x16x4x16x16xf32, #tpu.memory_space<vmem>>, vector<1x1x4x14x14xf32>
    %58 = vector.shape_cast %57 : vector<1x1x4x14x14xf32> to vector<4x14x14xf32>
    %c0_127 = arith.constant 0 : index
    %c14_128 = arith.constant 14 : index
    %c42_129 = arith.constant 42 : index
    %59 = vector.load %arg3[%c0_127, %c14_128, %c42_129] : memref<4x56x224xf32, #tpu.memory_space<vmem>>, vector<4x14x14xf32>
    tpu.vector_store %arg3[%c0_127, %c14_128, %c42_129], %58 {strides = array<i32>} : memref<4x56x224xf32, #tpu.memory_space<vmem>>, vector<4x14x14xf32>,
    %c1_130 = arith.constant 1 : index
    %c4_131 = arith.constant 4 : index
    %c0_132 = arith.constant 0 : index
    %c0_133 = arith.constant 0 : index
    %c0_134 = arith.constant 0 : index
    %60 = vector.load %arg2[%c1_130, %c4_131, %c0_132, %c0_133, %c0_134] : memref<4x16x4x16x16xf32, #tpu.memory_space<vmem>>, vector<1x1x4x14x14xf32>
    %61 = vector.shape_cast %60 : vector<1x1x4x14x14xf32> to vector<4x14x14xf32>
    %c0_135 = arith.constant 0 : index
    %c14_136 = arith.constant 14 : index
    %c56_137 = arith.constant 56 : index
    %62 = vector.load %arg3[%c0_135, %c14_136, %c56_137] : memref<4x56x224xf32, #tpu.memory_space<vmem>>, vector<4x14x14xf32>
    tpu.vector_store %arg3[%c0_135, %c14_136, %c56_137], %61 {strides = array<i32>} : memref<4x56x224xf32, #tpu.memory_space<vmem>>, vector<4x14x14xf32>,
    %c1_138 = arith.constant 1 : index
    %c5_139 = arith.constant 5 : index
    %c0_140 = arith.constant 0 : index
    %c0_141 = arith.constant 0 : index
    %c0_142 = arith.constant 0 : index
    %63 = vector.load %arg2[%c1_138, %c5_139, %c0_140, %c0_141, %c0_142] : memref<4x16x4x16x16xf32, #tpu.memory_space<vmem>>, vector<1x1x4x14x14xf32>
    %64 = vector.shape_cast %63 : vector<1x1x4x14x14xf32> to vector<4x14x14xf32>
    %c0_143 = arith.constant 0 : index
    %c14_144 = arith.constant 14 : index
    %c70_145 = arith.constant 70 : index
    %65 = vector.load %arg3[%c0_143, %c14_144, %c70_145] : memref<4x56x224xf32, #tpu.memory_space<vmem>>, vector<4x14x14xf32>
    tpu.vector_store %arg3[%c0_143, %c14_144, %c70_145], %64 {strides = array<i32>} : memref<4x56x224xf32, #tpu.memory_space<vmem>>, vector<4x14x14xf32>,
    %c1_146 = arith.constant 1 : index
    %c6_147 = arith.constant 6 : index
    %c0_148 = arith.constant 0 : index
    %c0_149 = arith.constant 0 : index
    %c0_150 = arith.constant 0 : index
    %66 = vector.load %arg2[%c1_146, %c6_147, %c0_148, %c0_149, %c0_150] : memref<4x16x4x16x16xf32, #tpu.memory_space<vmem>>, vector<1x1x4x14x14xf32>
    %67 = vector.shape_cast %66 : vector<1x1x4x14x14xf32> to vector<4x14x14xf32>
    %c0_151 = arith.constant 0 : index
    %c14_152 = arith.constant 14 : index
    %c84_153 = arith.constant 84 : index
    %68 = vector.load %arg3[%c0_151, %c14_152, %c84_153] : memref<4x56x224xf32, #tpu.memory_space<vmem>>, vector<4x14x14xf32>
    tpu.vector_store %arg3[%c0_151, %c14_152, %c84_153], %67 {strides = array<i32>} : memref<4x56x224xf32, #tpu.memory_space<vmem>>, vector<4x14x14xf32>,
    %c1_154 = arith.constant 1 : index
    %c7_155 = arith.constant 7 : index
    %c0_156 = arith.constant 0 : index
    %c0_157 = arith.constant 0 : index
    %c0_158 = arith.constant 0 : index
    %69 = vector.load %arg2[%c1_154, %c7_155, %c0_156, %c0_157, %c0_158] : memref<4x16x4x16x16xf32, #tpu.memory_space<vmem>>, vector<1x1x4x14x14xf32>
    %70 = vector.shape_cast %69 : vector<1x1x4x14x14xf32> to vector<4x14x14xf32>
    %c0_159 = arith.constant 0 : index
    %c14_160 = arith.constant 14 : index
    %c98_161 = arith.constant 98 : index
    %71 = vector.load %arg3[%c0_159, %c14_160, %c98_161] : memref<4x56x224xf32, #tpu.memory_space<vmem>>, vector<4x14x14xf32>
    tpu.vector_store %arg3[%c0_159, %c14_160, %c98_161], %70 {strides = array<i32>} : memref<4x56x224xf32, #tpu.memory_space<vmem>>, vector<4x14x14xf32>,
    %c1_162 = arith.constant 1 : index
    %c8_163 = arith.constant 8 : index
    %c0_164 = arith.constant 0 : index
    %c0_165 = arith.constant 0 : index
    %c0_166 = arith.constant 0 : index
    %72 = vector.load %arg2[%c1_162, %c8_163, %c0_164, %c0_165, %c0_166] : memref<4x16x4x16x16xf32, #tpu.memory_space<vmem>>, vector<1x1x4x14x14xf32>
    %73 = vector.shape_cast %72 : vector<1x1x4x14x14xf32> to vector<4x14x14xf32>
    %c0_167 = arith.constant 0 : index
    %c14_168 = arith.constant 14 : index
    %c112_169 = arith.constant 112 : index
    %74 = vector.load %arg3[%c0_167, %c14_168, %c112_169] : memref<4x56x224xf32, #tpu.memory_space<vmem>>, vector<4x14x14xf32>
    tpu.vector_store %arg3[%c0_167, %c14_168, %c112_169], %73 {strides = array<i32>} : memref<4x56x224xf32, #tpu.memory_space<vmem>>, vector<4x14x14xf32>,
    %c1_170 = arith.constant 1 : index
    %c9_171 = arith.constant 9 : index
    %c0_172 = arith.constant 0 : index
    %c0_173 = arith.constant 0 : index
    %c0_174 = arith.constant 0 : index
    %75 = vector.load %arg2[%c1_170, %c9_171, %c0_172, %c0_173, %c0_174] : memref<4x16x4x16x16xf32, #tpu.memory_space<vmem>>, vector<1x1x4x14x14xf32>
    %76 = vector.shape_cast %75 : vector<1x1x4x14x14xf32> to vector<4x14x14xf32>
    %c0_175 = arith.constant 0 : index
    %c14_176 = arith.constant 14 : index
    %c126_177 = arith.constant 126 : index
    %77 = vector.load %arg3[%c0_175, %c14_176, %c126_177] : memref<4x56x224xf32, #tpu.memory_space<vmem>>, vector<4x14x14xf32>
    tpu.vector_store %arg3[%c0_175, %c14_176, %c126_177], %76 {strides = array<i32>} : memref<4x56x224xf32, #tpu.memory_space<vmem>>, vector<4x14x14xf32>,
    %c1_178 = arith.constant 1 : index
    %c10_179 = arith.constant 10 : index
    %c0_180 = arith.constant 0 : index
    %c0_181 = arith.constant 0 : index
    %c0_182 = arith.constant 0 : index
    %78 = vector.load %arg2[%c1_178, %c10_179, %c0_180, %c0_181, %c0_182] : memref<4x16x4x16x16xf32, #tpu.memory_space<vmem>>, vector<1x1x4x14x14xf32>
    %79 = vector.shape_cast %78 : vector<1x1x4x14x14xf32> to vector<4x14x14xf32>
    %c0_183 = arith.constant 0 : index
    %c14_184 = arith.constant 14 : index
    %c140_185 = arith.constant 140 : index
    %80 = vector.load %arg3[%c0_183, %c14_184, %c140_185] : memref<4x56x224xf32, #tpu.memory_space<vmem>>, vector<4x14x14xf32>
    tpu.vector_store %arg3[%c0_183, %c14_184, %c140_185], %79 {strides = array<i32>} : memref<4x56x224xf32, #tpu.memory_space<vmem>>, vector<4x14x14xf32>,
    %c1_186 = arith.constant 1 : index
    %c11_187 = arith.constant 11 : index
    %c0_188 = arith.constant 0 : index
    %c0_189 = arith.constant 0 : index
    %c0_190 = arith.constant 0 : index
    %81 = vector.load %arg2[%c1_186, %c11_187, %c0_188, %c0_189, %c0_190] : memref<4x16x4x16x16xf32, #tpu.memory_space<vmem>>, vector<1x1x4x14x14xf32>
    %82 = vector.shape_cast %81 : vector<1x1x4x14x14xf32> to vector<4x14x14xf32>
    %c0_191 = arith.constant 0 : index
    %c14_192 = arith.constant 14 : index
    %c154_193 = arith.constant 154 : index
    %83 = vector.load %arg3[%c0_191, %c14_192, %c154_193] : memref<4x56x224xf32, #tpu.memory_space<vmem>>, vector<4x14x14xf32>
    tpu.vector_store %arg3[%c0_191, %c14_192, %c154_193], %82 {strides = array<i32>} : memref<4x56x224xf32, #tpu.memory_space<vmem>>, vector<4x14x14xf32>,
    %c1_194 = arith.constant 1 : index
    %c12_195 = arith.constant 12 : index
    %c0_196 = arith.constant 0 : index
    %c0_197 = arith.constant 0 : index
    %c0_198 = arith.constant 0 : index
    %84 = vector.load %arg2[%c1_194, %c12_195, %c0_196, %c0_197, %c0_198] : memref<4x16x4x16x16xf32, #tpu.memory_space<vmem>>, vector<1x1x4x14x14xf32>
    %85 = vector.shape_cast %84 : vector<1x1x4x14x14xf32> to vector<4x14x14xf32>
    %c0_199 = arith.constant 0 : index
    %c14_200 = arith.constant 14 : index
    %c168_201 = arith.constant 168 : index
    %86 = vector.load %arg3[%c0_199, %c14_200, %c168_201] : memref<4x56x224xf32, #tpu.memory_space<vmem>>, vector<4x14x14xf32>
    tpu.vector_store %arg3[%c0_199, %c14_200, %c168_201], %85 {strides = array<i32>} : memref<4x56x224xf32, #tpu.memory_space<vmem>>, vector<4x14x14xf32>,
    %c1_202 = arith.constant 1 : index
    %c13_203 = arith.constant 13 : index
    %c0_204 = arith.constant 0 : index
    %c0_205 = arith.constant 0 : index
    %c0_206 = arith.constant 0 : index
    %87 = vector.load %arg2[%c1_202, %c13_203, %c0_204, %c0_205, %c0_206] : memref<4x16x4x16x16xf32, #tpu.memory_space<vmem>>, vector<1x1x4x14x14xf32>
    %88 = vector.shape_cast %87 : vector<1x1x4x14x14xf32> to vector<4x14x14xf32>
    %c0_207 = arith.constant 0 : index
    %c14_208 = arith.constant 14 : index
    %c182_209 = arith.constant 182 : index
    %89 = vector.load %arg3[%c0_207, %c14_208, %c182_209] : memref<4x56x224xf32, #tpu.memory_space<vmem>>, vector<4x14x14xf32>
    tpu.vector_store %arg3[%c0_207, %c14_208, %c182_209], %88 {strides = array<i32>} : memref<4x56x224xf32, #tpu.memory_space<vmem>>, vector<4x14x14xf32>,
    %c1_210 = arith.constant 1 : index
    %c14_211 = arith.constant 14 : index
    %c0_212 = arith.constant 0 : index
    %c0_213 = arith.constant 0 : index
    %c0_214 = arith.constant 0 : index
    %90 = vector.load %arg2[%c1_210, %c14_211, %c0_212, %c0_213, %c0_214] : memref<4x16x4x16x16xf32, #tpu.memory_space<vmem>>, vector<1x1x4x14x14xf32>
    %91 = vector.shape_cast %90 : vector<1x1x4x14x14xf32> to vector<4x14x14xf32>
    %c0_215 = arith.constant 0 : index
    %c14_216 = arith.constant 14 : index
    %c196_217 = arith.constant 196 : index
    %92 = vector.load %arg3[%c0_215, %c14_216, %c196_217] : memref<4x56x224xf32, #tpu.memory_space<vmem>>, vector<4x14x14xf32>
    tpu.vector_store %arg3[%c0_215, %c14_216, %c196_217], %91 {strides = array<i32>} : memref<4x56x224xf32, #tpu.memory_space<vmem>>, vector<4x14x14xf32>,
    %c1_218 = arith.constant 1 : index
    %c15_219 = arith.constant 15 : index
    %c0_220 = arith.constant 0 : index
    %c0_221 = arith.constant 0 : index
    %c0_222 = arith.constant 0 : index
    %93 = vector.load %arg2[%c1_218, %c15_219, %c0_220, %c0_221, %c0_222] : memref<4x16x4x16x16xf32, #tpu.memory_space<vmem>>, vector<1x1x4x14x14xf32>
    %94 = vector.shape_cast %93 : vector<1x1x4x14x14xf32> to vector<4x14x14xf32>
    %c0_223 = arith.constant 0 : index
    %c14_224 = arith.constant 14 : index
    %c210_225 = arith.constant 210 : index
    %95 = vector.load %arg3[%c0_223, %c14_224, %c210_225] : memref<4x56x224xf32, #tpu.memory_space<vmem>>, vector<4x14x14xf32>
    tpu.vector_store %arg3[%c0_223, %c14_224, %c210_225], %94 {strides = array<i32>} : memref<4x56x224xf32, #tpu.memory_space<vmem>>, vector<4x14x14xf32>,
    %c2_226 = arith.constant 2 : index
    %c0_227 = arith.constant 0 : index
    %c0_228 = arith.constant 0 : index
    %c0_229 = arith.constant 0 : index
    %c0_230 = arith.constant 0 : index
    %96 = vector.load %arg2[%c2_226, %c0_227, %c0_228, %c0_229, %c0_230] : memref<4x16x4x16x16xf32, #tpu.memory_space<vmem>>, vector<1x1x4x14x14xf32>
    %97 = vector.shape_cast %96 : vector<1x1x4x14x14xf32> to vector<4x14x14xf32>
    %c0_231 = arith.constant 0 : index
    %c28_232 = arith.constant 28 : index
    %c0_233 = arith.constant 0 : index
    %98 = vector.load %arg3[%c0_231, %c28_232, %c0_233] : memref<4x56x224xf32, #tpu.memory_space<vmem>>, vector<4x14x14xf32>
    tpu.vector_store %arg3[%c0_231, %c28_232, %c0_233], %97 {strides = array<i32>} : memref<4x56x224xf32, #tpu.memory_space<vmem>>, vector<4x14x14xf32>,
    %c2_234 = arith.constant 2 : index
    %c1_235 = arith.constant 1 : index
    %c0_236 = arith.constant 0 : index
    %c0_237 = arith.constant 0 : index
    %c0_238 = arith.constant 0 : index
    %99 = vector.load %arg2[%c2_234, %c1_235, %c0_236, %c0_237, %c0_238] : memref<4x16x4x16x16xf32, #tpu.memory_space<vmem>>, vector<1x1x4x14x14xf32>
    %100 = vector.shape_cast %99 : vector<1x1x4x14x14xf32> to vector<4x14x14xf32>
    %c0_239 = arith.constant 0 : index
    %c28_240 = arith.constant 28 : index
    %c14_241 = arith.constant 14 : index
    %101 = vector.load %arg3[%c0_239, %c28_240, %c14_241] : memref<4x56x224xf32, #tpu.memory_space<vmem>>, vector<4x14x14xf32>
    tpu.vector_store %arg3[%c0_239, %c28_240, %c14_241], %100 {strides = array<i32>} : memref<4x56x224xf32, #tpu.memory_space<vmem>>, vector<4x14x14xf32>,
    %c2_242 = arith.constant 2 : index
    %c2_243 = arith.constant 2 : index
    %c0_244 = arith.constant 0 : index
    %c0_245 = arith.constant 0 : index
    %c0_246 = arith.constant 0 : index
    %102 = vector.load %arg2[%c2_242, %c2_243, %c0_244, %c0_245, %c0_246] : memref<4x16x4x16x16xf32, #tpu.memory_space<vmem>>, vector<1x1x4x14x14xf32>
    %103 = vector.shape_cast %102 : vector<1x1x4x14x14xf32> to vector<4x14x14xf32>
    %c0_247 = arith.constant 0 : index
    %c28_248 = arith.constant 28 : index
    %c28_249 = arith.constant 28 : index
    %104 = vector.load %arg3[%c0_247, %c28_248, %c28_249] : memref<4x56x224xf32, #tpu.memory_space<vmem>>, vector<4x14x14xf32>
    tpu.vector_store %arg3[%c0_247, %c28_248, %c28_249], %103 {strides = array<i32>} : memref<4x56x224xf32, #tpu.memory_space<vmem>>, vector<4x14x14xf32>,
    %c2_250 = arith.constant 2 : index
    %c3_251 = arith.constant 3 : index
    %c0_252 = arith.constant 0 : index
    %c0_253 = arith.constant 0 : index
    %c0_254 = arith.constant 0 : index
    %105 = vector.load %arg2[%c2_250, %c3_251, %c0_252, %c0_253, %c0_254] : memref<4x16x4x16x16xf32, #tpu.memory_space<vmem>>, vector<1x1x4x14x14xf32>
    %106 = vector.shape_cast %105 : vector<1x1x4x14x14xf32> to vector<4x14x14xf32>
    %c0_255 = arith.constant 0 : index
    %c28_256 = arith.constant 28 : index
    %c42_257 = arith.constant 42 : index
    %107 = vector.load %arg3[%c0_255, %c28_256, %c42_257] : memref<4x56x224xf32, #tpu.memory_space<vmem>>, vector<4x14x14xf32>
    tpu.vector_store %arg3[%c0_255, %c28_256, %c42_257], %106 {strides = array<i32>} : memref<4x56x224xf32, #tpu.memory_space<vmem>>, vector<4x14x14xf32>,
    %c2_258 = arith.constant 2 : index
    %c4_259 = arith.constant 4 : index
    %c0_260 = arith.constant 0 : index
    %c0_261 = arith.constant 0 : index
    %c0_262 = arith.constant 0 : index
    %108 = vector.load %arg2[%c2_258, %c4_259, %c0_260, %c0_261, %c0_262] : memref<4x16x4x16x16xf32, #tpu.memory_space<vmem>>, vector<1x1x4x14x14xf32>
    %109 = vector.shape_cast %108 : vector<1x1x4x14x14xf32> to vector<4x14x14xf32>
    %c0_263 = arith.constant 0 : index
    %c28_264 = arith.constant 28 : index
    %c56_265 = arith.constant 56 : index
    %110 = vector.load %arg3[%c0_263, %c28_264, %c56_265] : memref<4x56x224xf32, #tpu.memory_space<vmem>>, vector<4x14x14xf32>
    tpu.vector_store %arg3[%c0_263, %c28_264, %c56_265], %109 {strides = array<i32>} : memref<4x56x224xf32, #tpu.memory_space<vmem>>, vector<4x14x14xf32>,
    %c2_266 = arith.constant 2 : index
    %c5_267 = arith.constant 5 : index
    %c0_268 = arith.constant 0 : index
    %c0_269 = arith.constant 0 : index
    %c0_270 = arith.constant 0 : index
    %111 = vector.load %arg2[%c2_266, %c5_267, %c0_268, %c0_269, %c0_270] : memref<4x16x4x16x16xf32, #tpu.memory_space<vmem>>, vector<1x1x4x14x14xf32>
    %112 = vector.shape_cast %111 : vector<1x1x4x14x14xf32> to vector<4x14x14xf32>
    %c0_271 = arith.constant 0 : index
    %c28_272 = arith.constant 28 : index
    %c70_273 = arith.constant 70 : index
    %113 = vector.load %arg3[%c0_271, %c28_272, %c70_273] : memref<4x56x224xf32, #tpu.memory_space<vmem>>, vector<4x14x14xf32>
    tpu.vector_store %arg3[%c0_271, %c28_272, %c70_273], %112 {strides = array<i32>} : memref<4x56x224xf32, #tpu.memory_space<vmem>>, vector<4x14x14xf32>,
    %c2_274 = arith.constant 2 : index
    %c6_275 = arith.constant 6 : index
    %c0_276 = arith.constant 0 : index
    %c0_277 = arith.constant 0 : index
    %c0_278 = arith.constant 0 : index
    %114 = vector.load %arg2[%c2_274, %c6_275, %c0_276, %c0_277, %c0_278] : memref<4x16x4x16x16xf32, #tpu.memory_space<vmem>>, vector<1x1x4x14x14xf32>
    %115 = vector.shape_cast %114 : vector<1x1x4x14x14xf32> to vector<4x14x14xf32>
    %c0_279 = arith.constant 0 : index
    %c28_280 = arith.constant 28 : index
    %c84_281 = arith.constant 84 : index
    %116 = vector.load %arg3[%c0_279, %c28_280, %c84_281] : memref<4x56x224xf32, #tpu.memory_space<vmem>>, vector<4x14x14xf32>
    tpu.vector_store %arg3[%c0_279, %c28_280, %c84_281], %115 {strides = array<i32>} : memref<4x56x224xf32, #tpu.memory_space<vmem>>, vector<4x14x14xf32>,
    %c2_282 = arith.constant 2 : index
    %c7_283 = arith.constant 7 : index
    %c0_284 = arith.constant 0 : index
    %c0_285 = arith.constant 0 : index
    %c0_286 = arith.constant 0 : index
    %117 = vector.load %arg2[%c2_282, %c7_283, %c0_284, %c0_285, %c0_286] : memref<4x16x4x16x16xf32, #tpu.memory_space<vmem>>, vector<1x1x4x14x14xf32>
    %118 = vector.shape_cast %117 : vector<1x1x4x14x14xf32> to vector<4x14x14xf32>
    %c0_287 = arith.constant 0 : index
    %c28_288 = arith.constant 28 : index
    %c98_289 = arith.constant 98 : index
    %119 = vector.load %arg3[%c0_287, %c28_288, %c98_289] : memref<4x56x224xf32, #tpu.memory_space<vmem>>, vector<4x14x14xf32>
    tpu.vector_store %arg3[%c0_287, %c28_288, %c98_289], %118 {strides = array<i32>} : memref<4x56x224xf32, #tpu.memory_space<vmem>>, vector<4x14x14xf32>,
    %c2_290 = arith.constant 2 : index
    %c8_291 = arith.constant 8 : index
    %c0_292 = arith.constant 0 : index
    %c0_293 = arith.constant 0 : index
    %c0_294 = arith.constant 0 : index
    %120 = vector.load %arg2[%c2_290, %c8_291, %c0_292, %c0_293, %c0_294] : memref<4x16x4x16x16xf32, #tpu.memory_space<vmem>>, vector<1x1x4x14x14xf32>
    %121 = vector.shape_cast %120 : vector<1x1x4x14x14xf32> to vector<4x14x14xf32>
    %c0_295 = arith.constant 0 : index
    %c28_296 = arith.constant 28 : index
    %c112_297 = arith.constant 112 : index
    %122 = vector.load %arg3[%c0_295, %c28_296, %c112_297] : memref<4x56x224xf32, #tpu.memory_space<vmem>>, vector<4x14x14xf32>
    tpu.vector_store %arg3[%c0_295, %c28_296, %c112_297], %121 {strides = array<i32>} : memref<4x56x224xf32, #tpu.memory_space<vmem>>, vector<4x14x14xf32>,
    %c2_298 = arith.constant 2 : index
    %c9_299 = arith.constant 9 : index
    %c0_300 = arith.constant 0 : index
    %c0_301 = arith.constant 0 : index
    %c0_302 = arith.constant 0 : index
    %123 = vector.load %arg2[%c2_298, %c9_299, %c0_300, %c0_301, %c0_302] : memref<4x16x4x16x16xf32, #tpu.memory_space<vmem>>, vector<1x1x4x14x14xf32>
    %124 = vector.shape_cast %123 : vector<1x1x4x14x14xf32> to vector<4x14x14xf32>
    %c0_303 = arith.constant 0 : index
    %c28_304 = arith.constant 28 : index
    %c126_305 = arith.constant 126 : index
    %125 = vector.load %arg3[%c0_303, %c28_304, %c126_305] : memref<4x56x224xf32, #tpu.memory_space<vmem>>, vector<4x14x14xf32>
    tpu.vector_store %arg3[%c0_303, %c28_304, %c126_305], %124 {strides = array<i32>} : memref<4x56x224xf32, #tpu.memory_space<vmem>>, vector<4x14x14xf32>,
    %c2_306 = arith.constant 2 : index
    %c10_307 = arith.constant 10 : index
    %c0_308 = arith.constant 0 : index
    %c0_309 = arith.constant 0 : index
    %c0_310 = arith.constant 0 : index
    %126 = vector.load %arg2[%c2_306, %c10_307, %c0_308, %c0_309, %c0_310] : memref<4x16x4x16x16xf32, #tpu.memory_space<vmem>>, vector<1x1x4x14x14xf32>
    %127 = vector.shape_cast %126 : vector<1x1x4x14x14xf32> to vector<4x14x14xf32>
    %c0_311 = arith.constant 0 : index
    %c28_312 = arith.constant 28 : index
    %c140_313 = arith.constant 140 : index
    %128 = vector.load %arg3[%c0_311, %c28_312, %c140_313] : memref<4x56x224xf32, #tpu.memory_space<vmem>>, vector<4x14x14xf32>
    tpu.vector_store %arg3[%c0_311, %c28_312, %c140_313], %127 {strides = array<i32>} : memref<4x56x224xf32, #tpu.memory_space<vmem>>, vector<4x14x14xf32>,
    %c2_314 = arith.constant 2 : index
    %c11_315 = arith.constant 11 : index
    %c0_316 = arith.constant 0 : index
    %c0_317 = arith.constant 0 : index
    %c0_318 = arith.constant 0 : index
    %129 = vector.load %arg2[%c2_314, %c11_315, %c0_316, %c0_317, %c0_318] : memref<4x16x4x16x16xf32, #tpu.memory_space<vmem>>, vector<1x1x4x14x14xf32>
    %130 = vector.shape_cast %129 : vector<1x1x4x14x14xf32> to vector<4x14x14xf32>
    %c0_319 = arith.constant 0 : index
    %c28_320 = arith.constant 28 : index
    %c154_321 = arith.constant 154 : index
    %131 = vector.load %arg3[%c0_319, %c28_320, %c154_321] : memref<4x56x224xf32, #tpu.memory_space<vmem>>, vector<4x14x14xf32>
    tpu.vector_store %arg3[%c0_319, %c28_320, %c154_321], %130 {strides = array<i32>} : memref<4x56x224xf32, #tpu.memory_space<vmem>>, vector<4x14x14xf32>,
    %c2_322 = arith.constant 2 : index
    %c12_323 = arith.constant 12 : index
    %c0_324 = arith.constant 0 : index
    %c0_325 = arith.constant 0 : index
    %c0_326 = arith.constant 0 : index
    %132 = vector.load %arg2[%c2_322, %c12_323, %c0_324, %c0_325, %c0_326] : memref<4x16x4x16x16xf32, #tpu.memory_space<vmem>>, vector<1x1x4x14x14xf32>
    %133 = vector.shape_cast %132 : vector<1x1x4x14x14xf32> to vector<4x14x14xf32>
    %c0_327 = arith.constant 0 : index
    %c28_328 = arith.constant 28 : index
    %c168_329 = arith.constant 168 : index
    %134 = vector.load %arg3[%c0_327, %c28_328, %c168_329] : memref<4x56x224xf32, #tpu.memory_space<vmem>>, vector<4x14x14xf32>
    tpu.vector_store %arg3[%c0_327, %c28_328, %c168_329], %133 {strides = array<i32>} : memref<4x56x224xf32, #tpu.memory_space<vmem>>, vector<4x14x14xf32>,
    %c2_330 = arith.constant 2 : index
    %c13_331 = arith.constant 13 : index
    %c0_332 = arith.constant 0 : index
    %c0_333 = arith.constant 0 : index
    %c0_334 = arith.constant 0 : index
    %135 = vector.load %arg2[%c2_330, %c13_331, %c0_332, %c0_333, %c0_334] : memref<4x16x4x16x16xf32, #tpu.memory_space<vmem>>, vector<1x1x4x14x14xf32>
    %136 = vector.shape_cast %135 : vector<1x1x4x14x14xf32> to vector<4x14x14xf32>
    %c0_335 = arith.constant 0 : index
    %c28_336 = arith.constant 28 : index
    %c182_337 = arith.constant 182 : index
    %137 = vector.load %arg3[%c0_335, %c28_336, %c182_337] : memref<4x56x224xf32, #tpu.memory_space<vmem>>, vector<4x14x14xf32>
    tpu.vector_store %arg3[%c0_335, %c28_336, %c182_337], %136 {strides = array<i32>} : memref<4x56x224xf32, #tpu.memory_space<vmem>>, vector<4x14x14xf32>,
    %c2_338 = arith.constant 2 : index
    %c14_339 = arith.constant 14 : index
    %c0_340 = arith.constant 0 : index
    %c0_341 = arith.constant 0 : index
    %c0_342 = arith.constant 0 : index
    %138 = vector.load %arg2[%c2_338, %c14_339, %c0_340, %c0_341, %c0_342] : memref<4x16x4x16x16xf32, #tpu.memory_space<vmem>>, vector<1x1x4x14x14xf32>
    %139 = vector.shape_cast %138 : vector<1x1x4x14x14xf32> to vector<4x14x14xf32>
    %c0_343 = arith.constant 0 : index
    %c28_344 = arith.constant 28 : index
    %c196_345 = arith.constant 196 : index
    %140 = vector.load %arg3[%c0_343, %c28_344, %c196_345] : memref<4x56x224xf32, #tpu.memory_space<vmem>>, vector<4x14x14xf32>
    tpu.vector_store %arg3[%c0_343, %c28_344, %c196_345], %139 {strides = array<i32>} : memref<4x56x224xf32, #tpu.memory_space<vmem>>, vector<4x14x14xf32>,
    %c2_346 = arith.constant 2 : index
    %c15_347 = arith.constant 15 : index
    %c0_348 = arith.constant 0 : index
    %c0_349 = arith.constant 0 : index
    %c0_350 = arith.constant 0 : index
    %141 = vector.load %arg2[%c2_346, %c15_347, %c0_348, %c0_349, %c0_350] : memref<4x16x4x16x16xf32, #tpu.memory_space<vmem>>, vector<1x1x4x14x14xf32>
    %142 = vector.shape_cast %141 : vector<1x1x4x14x14xf32> to vector<4x14x14xf32>
    %c0_351 = arith.constant 0 : index
    %c28_352 = arith.constant 28 : index
    %c210_353 = arith.constant 210 : index
    %143 = vector.load %arg3[%c0_351, %c28_352, %c210_353] : memref<4x56x224xf32, #tpu.memory_space<vmem>>, vector<4x14x14xf32>
    tpu.vector_store %arg3[%c0_351, %c28_352, %c210_353], %142 {strides = array<i32>} : memref<4x56x224xf32, #tpu.memory_space<vmem>>, vector<4x14x14xf32>,
    %c3_354 = arith.constant 3 : index
    %c0_355 = arith.constant 0 : index
    %c0_356 = arith.constant 0 : index
    %c0_357 = arith.constant 0 : index
    %c0_358 = arith.constant 0 : index
    %144 = vector.load %arg2[%c3_354, %c0_355, %c0_356, %c0_357, %c0_358] : memref<4x16x4x16x16xf32, #tpu.memory_space<vmem>>, vector<1x1x4x14x14xf32>
    %145 = vector.shape_cast %144 : vector<1x1x4x14x14xf32> to vector<4x14x14xf32>
    %c0_359 = arith.constant 0 : index
    %c42_360 = arith.constant 42 : index
    %c0_361 = arith.constant 0 : index
    %146 = vector.load %arg3[%c0_359, %c42_360, %c0_361] : memref<4x56x224xf32, #tpu.memory_space<vmem>>, vector<4x14x14xf32>
    tpu.vector_store %arg3[%c0_359, %c42_360, %c0_361], %145 {strides = array<i32>} : memref<4x56x224xf32, #tpu.memory_space<vmem>>, vector<4x14x14xf32>,
    %c3_362 = arith.constant 3 : index
    %c1_363 = arith.constant 1 : index
    %c0_364 = arith.constant 0 : index
    %c0_365 = arith.constant 0 : index
    %c0_366 = arith.constant 0 : index
    %147 = vector.load %arg2[%c3_362, %c1_363, %c0_364, %c0_365, %c0_366] : memref<4x16x4x16x16xf32, #tpu.memory_space<vmem>>, vector<1x1x4x14x14xf32>
    %148 = vector.shape_cast %147 : vector<1x1x4x14x14xf32> to vector<4x14x14xf32>
    %c0_367 = arith.constant 0 : index
    %c42_368 = arith.constant 42 : index
    %c14_369 = arith.constant 14 : index
    %149 = vector.load %arg3[%c0_367, %c42_368, %c14_369] : memref<4x56x224xf32, #tpu.memory_space<vmem>>, vector<4x14x14xf32>
    tpu.vector_store %arg3[%c0_367, %c42_368, %c14_369], %148 {strides = array<i32>} : memref<4x56x224xf32, #tpu.memory_space<vmem>>, vector<4x14x14xf32>,
    %c3_370 = arith.constant 3 : index
    %c2_371 = arith.constant 2 : index
    %c0_372 = arith.constant 0 : index
    %c0_373 = arith.constant 0 : index
    %c0_374 = arith.constant 0 : index
    %150 = vector.load %arg2[%c3_370, %c2_371, %c0_372, %c0_373, %c0_374] : memref<4x16x4x16x16xf32, #tpu.memory_space<vmem>>, vector<1x1x4x14x14xf32>
    %151 = vector.shape_cast %150 : vector<1x1x4x14x14xf32> to vector<4x14x14xf32>
    %c0_375 = arith.constant 0 : index
    %c42_376 = arith.constant 42 : index
    %c28_377 = arith.constant 28 : index
    %152 = vector.load %arg3[%c0_375, %c42_376, %c28_377] : memref<4x56x224xf32, #tpu.memory_space<vmem>>, vector<4x14x14xf32>
    tpu.vector_store %arg3[%c0_375, %c42_376, %c28_377], %151 {strides = array<i32>} : memref<4x56x224xf32, #tpu.memory_space<vmem>>, vector<4x14x14xf32>,
    %c3_378 = arith.constant 3 : index
    %c3_379 = arith.constant 3 : index
    %c0_380 = arith.constant 0 : index
    %c0_381 = arith.constant 0 : index
    %c0_382 = arith.constant 0 : index
    %153 = vector.load %arg2[%c3_378, %c3_379, %c0_380, %c0_381, %c0_382] : memref<4x16x4x16x16xf32, #tpu.memory_space<vmem>>, vector<1x1x4x14x14xf32>
    %154 = vector.shape_cast %153 : vector<1x1x4x14x14xf32> to vector<4x14x14xf32>
    %c0_383 = arith.constant 0 : index
    %c42_384 = arith.constant 42 : index
    %c42_385 = arith.constant 42 : index
    %155 = vector.load %arg3[%c0_383, %c42_384, %c42_385] : memref<4x56x224xf32, #tpu.memory_space<vmem>>, vector<4x14x14xf32>
    tpu.vector_store %arg3[%c0_383, %c42_384, %c42_385], %154 {strides = array<i32>} : memref<4x56x224xf32, #tpu.memory_space<vmem>>, vector<4x14x14xf32>,
    %c3_386 = arith.constant 3 : index
    %c4_387 = arith.constant 4 : index
    %c0_388 = arith.constant 0 : index
    %c0_389 = arith.constant 0 : index
    %c0_390 = arith.constant 0 : index
    %156 = vector.load %arg2[%c3_386, %c4_387, %c0_388, %c0_389, %c0_390] : memref<4x16x4x16x16xf32, #tpu.memory_space<vmem>>, vector<1x1x4x14x14xf32>
    %157 = vector.shape_cast %156 : vector<1x1x4x14x14xf32> to vector<4x14x14xf32>
    %c0_391 = arith.constant 0 : index
    %c42_392 = arith.constant 42 : index
    %c56_393 = arith.constant 56 : index
    %158 = vector.load %arg3[%c0_391, %c42_392, %c56_393] : memref<4x56x224xf32, #tpu.memory_space<vmem>>, vector<4x14x14xf32>
    tpu.vector_store %arg3[%c0_391, %c42_392, %c56_393], %157 {strides = array<i32>} : memref<4x56x224xf32, #tpu.memory_space<vmem>>, vector<4x14x14xf32>,
    %c3_394 = arith.constant 3 : index
    %c5_395 = arith.constant 5 : index
    %c0_396 = arith.constant 0 : index
    %c0_397 = arith.constant 0 : index
    %c0_398 = arith.constant 0 : index
    %159 = vector.load %arg2[%c3_394, %c5_395, %c0_396, %c0_397, %c0_398] : memref<4x16x4x16x16xf32, #tpu.memory_space<vmem>>, vector<1x1x4x14x14xf32>
    %160 = vector.shape_cast %159 : vector<1x1x4x14x14xf32> to vector<4x14x14xf32>
    %c0_399 = arith.constant 0 : index
    %c42_400 = arith.constant 42 : index
    %c70_401 = arith.constant 70 : index
    %161 = vector.load %arg3[%c0_399, %c42_400, %c70_401] : memref<4x56x224xf32, #tpu.memory_space<vmem>>, vector<4x14x14xf32>
    tpu.vector_store %arg3[%c0_399, %c42_400, %c70_401], %160 {strides = array<i32>} : memref<4x56x224xf32, #tpu.memory_space<vmem>>, vector<4x14x14xf32>,
    %c3_402 = arith.constant 3 : index
    %c6_403 = arith.constant 6 : index
    %c0_404 = arith.constant 0 : index
    %c0_405 = arith.constant 0 : index
    %c0_406 = arith.constant 0 : index
    %162 = vector.load %arg2[%c3_402, %c6_403, %c0_404, %c0_405, %c0_406] : memref<4x16x4x16x16xf32, #tpu.memory_space<vmem>>, vector<1x1x4x14x14xf32>
    %163 = vector.shape_cast %162 : vector<1x1x4x14x14xf32> to vector<4x14x14xf32>
    %c0_407 = arith.constant 0 : index
    %c42_408 = arith.constant 42 : index
    %c84_409 = arith.constant 84 : index
    %164 = vector.load %arg3[%c0_407, %c42_408, %c84_409] : memref<4x56x224xf32, #tpu.memory_space<vmem>>, vector<4x14x14xf32>
    tpu.vector_store %arg3[%c0_407, %c42_408, %c84_409], %163 {strides = array<i32>} : memref<4x56x224xf32, #tpu.memory_space<vmem>>, vector<4x14x14xf32>,
    %c3_410 = arith.constant 3 : index
    %c7_411 = arith.constant 7 : index
    %c0_412 = arith.constant 0 : index
    %c0_413 = arith.constant 0 : index
    %c0_414 = arith.constant 0 : index
    %165 = vector.load %arg2[%c3_410, %c7_411, %c0_412, %c0_413, %c0_414] : memref<4x16x4x16x16xf32, #tpu.memory_space<vmem>>, vector<1x1x4x14x14xf32>
    %166 = vector.shape_cast %165 : vector<1x1x4x14x14xf32> to vector<4x14x14xf32>
    %c0_415 = arith.constant 0 : index
    %c42_416 = arith.constant 42 : index
    %c98_417 = arith.constant 98 : index
    %167 = vector.load %arg3[%c0_415, %c42_416, %c98_417] : memref<4x56x224xf32, #tpu.memory_space<vmem>>, vector<4x14x14xf32>
    tpu.vector_store %arg3[%c0_415, %c42_416, %c98_417], %166 {strides = array<i32>} : memref<4x56x224xf32, #tpu.memory_space<vmem>>, vector<4x14x14xf32>,
    %c3_418 = arith.constant 3 : index
    %c8_419 = arith.constant 8 : index
    %c0_420 = arith.constant 0 : index
    %c0_421 = arith.constant 0 : index
    %c0_422 = arith.constant 0 : index
    %168 = vector.load %arg2[%c3_418, %c8_419, %c0_420, %c0_421, %c0_422] : memref<4x16x4x16x16xf32, #tpu.memory_space<vmem>>, vector<1x1x4x14x14xf32>
    %169 = vector.shape_cast %168 : vector<1x1x4x14x14xf32> to vector<4x14x14xf32>
    %c0_423 = arith.constant 0 : index
    %c42_424 = arith.constant 42 : index
    %c112_425 = arith.constant 112 : index
    %170 = vector.load %arg3[%c0_423, %c42_424, %c112_425] : memref<4x56x224xf32, #tpu.memory_space<vmem>>, vector<4x14x14xf32>
    tpu.vector_store %arg3[%c0_423, %c42_424, %c112_425], %169 {strides = array<i32>} : memref<4x56x224xf32, #tpu.memory_space<vmem>>, vector<4x14x14xf32>,
    %c3_426 = arith.constant 3 : index
    %c9_427 = arith.constant 9 : index
    %c0_428 = arith.constant 0 : index
    %c0_429 = arith.constant 0 : index
    %c0_430 = arith.constant 0 : index
    %171 = vector.load %arg2[%c3_426, %c9_427, %c0_428, %c0_429, %c0_430] : memref<4x16x4x16x16xf32, #tpu.memory_space<vmem>>, vector<1x1x4x14x14xf32>
    %172 = vector.shape_cast %171 : vector<1x1x4x14x14xf32> to vector<4x14x14xf32>
    %c0_431 = arith.constant 0 : index
    %c42_432 = arith.constant 42 : index
    %c126_433 = arith.constant 126 : index
    %173 = vector.load %arg3[%c0_431, %c42_432, %c126_433] : memref<4x56x224xf32, #tpu.memory_space<vmem>>, vector<4x14x14xf32>
    tpu.vector_store %arg3[%c0_431, %c42_432, %c126_433], %172 {strides = array<i32>} : memref<4x56x224xf32, #tpu.memory_space<vmem>>, vector<4x14x14xf32>,
    %c3_434 = arith.constant 3 : index
    %c10_435 = arith.constant 10 : index
    %c0_436 = arith.constant 0 : index
    %c0_437 = arith.constant 0 : index
    %c0_438 = arith.constant 0 : index
    %174 = vector.load %arg2[%c3_434, %c10_435, %c0_436, %c0_437, %c0_438] : memref<4x16x4x16x16xf32, #tpu.memory_space<vmem>>, vector<1x1x4x14x14xf32>
    %175 = vector.shape_cast %174 : vector<1x1x4x14x14xf32> to vector<4x14x14xf32>
    %c0_439 = arith.constant 0 : index
    %c42_440 = arith.constant 42 : index
    %c140_441 = arith.constant 140 : index
    %176 = vector.load %arg3[%c0_439, %c42_440, %c140_441] : memref<4x56x224xf32, #tpu.memory_space<vmem>>, vector<4x14x14xf32>
    tpu.vector_store %arg3[%c0_439, %c42_440, %c140_441], %175 {strides = array<i32>} : memref<4x56x224xf32, #tpu.memory_space<vmem>>, vector<4x14x14xf32>,
    %c3_442 = arith.constant 3 : index
    %c11_443 = arith.constant 11 : index
    %c0_444 = arith.constant 0 : index
    %c0_445 = arith.constant 0 : index
    %c0_446 = arith.constant 0 : index
    %177 = vector.load %arg2[%c3_442, %c11_443, %c0_444, %c0_445, %c0_446] : memref<4x16x4x16x16xf32, #tpu.memory_space<vmem>>, vector<1x1x4x14x14xf32>
    %178 = vector.shape_cast %177 : vector<1x1x4x14x14xf32> to vector<4x14x14xf32>
    %c0_447 = arith.constant 0 : index
    %c42_448 = arith.constant 42 : index
    %c154_449 = arith.constant 154 : index
    %179 = vector.load %arg3[%c0_447, %c42_448, %c154_449] : memref<4x56x224xf32, #tpu.memory_space<vmem>>, vector<4x14x14xf32>
    tpu.vector_store %arg3[%c0_447, %c42_448, %c154_449], %178 {strides = array<i32>} : memref<4x56x224xf32, #tpu.memory_space<vmem>>, vector<4x14x14xf32>,
    %c3_450 = arith.constant 3 : index
    %c12_451 = arith.constant 12 : index
    %c0_452 = arith.constant 0 : index
    %c0_453 = arith.constant 0 : index
    %c0_454 = arith.constant 0 : index
    %180 = vector.load %arg2[%c3_450, %c12_451, %c0_452, %c0_453, %c0_454] : memref<4x16x4x16x16xf32, #tpu.memory_space<vmem>>, vector<1x1x4x14x14xf32>
    %181 = vector.shape_cast %180 : vector<1x1x4x14x14xf32> to vector<4x14x14xf32>
    %c0_455 = arith.constant 0 : index
    %c42_456 = arith.constant 42 : index
    %c168_457 = arith.constant 168 : index
    %182 = vector.load %arg3[%c0_455, %c42_456, %c168_457] : memref<4x56x224xf32, #tpu.memory_space<vmem>>, vector<4x14x14xf32>
    tpu.vector_store %arg3[%c0_455, %c42_456, %c168_457], %181 {strides = array<i32>} : memref<4x56x224xf32, #tpu.memory_space<vmem>>, vector<4x14x14xf32>,
    %c3_458 = arith.constant 3 : index
    %c13_459 = arith.constant 13 : index
    %c0_460 = arith.constant 0 : index
    %c0_461 = arith.constant 0 : index
    %c0_462 = arith.constant 0 : index
    %183 = vector.load %arg2[%c3_458, %c13_459, %c0_460, %c0_461, %c0_462] : memref<4x16x4x16x16xf32, #tpu.memory_space<vmem>>, vector<1x1x4x14x14xf32>
    %184 = vector.shape_cast %183 : vector<1x1x4x14x14xf32> to vector<4x14x14xf32>
    %c0_463 = arith.constant 0 : index
    %c42_464 = arith.constant 42 : index
    %c182_465 = arith.constant 182 : index
    %185 = vector.load %arg3[%c0_463, %c42_464, %c182_465] : memref<4x56x224xf32, #tpu.memory_space<vmem>>, vector<4x14x14xf32>
    tpu.vector_store %arg3[%c0_463, %c42_464, %c182_465], %184 {strides = array<i32>} : memref<4x56x224xf32, #tpu.memory_space<vmem>>, vector<4x14x14xf32>,
    %c3_466 = arith.constant 3 : index
    %c14_467 = arith.constant 14 : index
    %c0_468 = arith.constant 0 : index
    %c0_469 = arith.constant 0 : index
    %c0_470 = arith.constant 0 : index
    %186 = vector.load %arg2[%c3_466, %c14_467, %c0_468, %c0_469, %c0_470] : memref<4x16x4x16x16xf32, #tpu.memory_space<vmem>>, vector<1x1x4x14x14xf32>
    %187 = vector.shape_cast %186 : vector<1x1x4x14x14xf32> to vector<4x14x14xf32>
    %c0_471 = arith.constant 0 : index
    %c42_472 = arith.constant 42 : index
    %c196_473 = arith.constant 196 : index
    %188 = vector.load %arg3[%c0_471, %c42_472, %c196_473] : memref<4x56x224xf32, #tpu.memory_space<vmem>>, vector<4x14x14xf32>
    tpu.vector_store %arg3[%c0_471, %c42_472, %c196_473], %187 {strides = array<i32>} : memref<4x56x224xf32, #tpu.memory_space<vmem>>, vector<4x14x14xf32>,
    %c3_474 = arith.constant 3 : index
    %c15_475 = arith.constant 15 : index
    %c0_476 = arith.constant 0 : index
    %c0_477 = arith.constant 0 : index
    %c0_478 = arith.constant 0 : index
    %189 = vector.load %arg2[%c3_474, %c15_475, %c0_476, %c0_477, %c0_478] : memref<4x16x4x16x16xf32, #tpu.memory_space<vmem>>, vector<1x1x4x14x14xf32>
    %190 = vector.shape_cast %189 : vector<1x1x4x14x14xf32> to vector<4x14x14xf32>
    %c0_479 = arith.constant 0 : index
    %c42_480 = arith.constant 42 : index
    %c210_481 = arith.constant 210 : index
    %191 = vector.load %arg3[%c0_479, %c42_480, %c210_481] : memref<4x56x224xf32, #tpu.memory_space<vmem>>, vector<4x14x14xf32>
    tpu.vector_store %arg3[%c0_479, %c42_480, %c210_481], %190 {strides = array<i32>} : memref<4x56x224xf32, #tpu.memory_space<vmem>>, vector<4x14x14xf32>,
    return
  }
  func.func @transform_0(%arg0: i32, %arg1: i32) -> (i32, i32, i32, i32, i32) {
    %c0_i32 = arith.constant 0 : i32
    %c0_i32_0 = arith.constant 0 : i32
    %c0_i32_1 = arith.constant 0 : i32
    %c0_i32_2 = arith.constant 0 : i32
    return %arg1, %c0_i32, %arg0, %c0_i32_0, %c0_i32_1 : i32, i32, i32, i32, i32
  }
  func.func @transform_1(%arg0: i32, %arg1: i32) -> (i32, i32, i32) {
    %c0_i32 = arith.constant 0 : i32
    %c0_i32_0 = arith.constant 0 : i32
    return %arg0, %arg1, %c0_i32 : i32, i32, i32
  }
}

</mosaic_0001>

<llo_original>
// kernel: tpu_custom_call.1
$region0: #{tpu_custom_call.1}
  #allocation0 [shape = 'u32[]', space=smem, size = 0x4, offset = 0x4, fixed_abs, tag = 'smem constant byte address 0x4 - core index']
  #allocation1 [shape = 'u32[144,128]{1,0:T(1,128)}', space=vmem, size = 0x12000, scoped, tag = 'internal scratch']
  #allocation5 [shape = 's32[]', space=sflag, size = 0x4, offset = 0, fixed_abs, tag = 'sflag constant byte address 0x0 - dummy sync flag']
  %s0 = inlined_call_operand.vmem [shape: f32[17,17,4,16,16], index: 0, kind: input, shape index: {}]
  %s1 = inlined_call_operand.hbm [shape: f32[4,224,224], index: 1, kind: output, shape index: {}]
  %s2 = sld [smem:[#allocation0]]
  $region75: #{tpu_custom_call.1} parent=0
    _
  %s4 = ssub.s32 1, %s2
  %s5 = scalar_select 0, %s4, %s2
  $region1: #{tpu_custom_call.1} parent=0
    #allocation2 [shape = 'u8[4194304]{0}', space=vmem, size = 0x400000, scoped, tag = 'input window, operand 0']
    #allocation3 [shape = 'u8[458752]{0}', space=vmem, size = 0x70000, scoped, tag = 'output window, operand 0']
    #allocation4 [shape = 's32[2]{0}', space=sflag, size = 0x8, scoped, tag = 'scoped memory for tpu_custom_call.1']
    %6 = vsyncpa [#allocation4], 0
    %s7 = scalar_lea.sflag [#allocation4], 1
    %8 = vsyncpa %s7, 0
    loop: start=0, step=1, limit=6
    $region2: #{tpu_custom_call.1} parent=1 // loop_pre_header
      _
    $region3: #{tpu_custom_call.1} parent=1 // loop_header
      %s10 = sphi 0, %s14
      %p11 = scmp.ge.s32.totalorder %s10, 6
      %s17 = sphi 0, %s29
      %s18 = sphi 0, %s25
      %s19 = sphi 0, %s17
      %s20 = sphi 0, %s18
      %s21 = sphi 0, %s19
      %s22 = sphi 0, %s20
      %s34 = sphi 0, %s36
      %s37 = sphi 0, %s34
      %s38 = sphi 0, %s37
      %s54 = sphi 0, %s38
      %s62 = sphi 0, %s64
      %s65 = sphi 0, %s62
      %s66 = sphi 0, %s65
      %s82 = sphi 0, %s66
    $region4: #{tpu_custom_call.1} parent=1 // loop_header_branch
      %13 = sbr.rel (%p11) target = $region8
    $region5: #{tpu_custom_call.1} parent=1 // loop_body
      %s15 = ssub.s32 %s10, 1
      %s16 = ssub.s32 %s10, 2
      %s23 = sadd.s32 1, %s18
      %p24 = scmp.ge.s32.totalorder %s23, 4
      %s25 = scalar_select %p24, 0, %s23
      %s26 = sadd.s32 1, %s17
      %s27 = scalar_select %p24, %s26, %s17
      %p28 = scmp.ge.s32.totalorder %s27, 1
      %s29 = scalar_select %p28, 0, %s27
      %s30 = ssub.s32 %s18, %s25
      %s31 = ssub.s32 %s17, %s29
      %s32 = sor.u32 %s30, %s31
      %p33 = scmp.eq.s32.totalorder %s32, 0
      %s35 = sadd.s32 %s34, 1
      %s36 = scalar_select %p33, %s34, %s35
      %p39 = pneg %p33
      %p40 = scmp.eq.s32.totalorder %s10, 3
      %p41 = por %p39, %p40
      %p42 = scmp.ne.s32.totalorder %s34, %s37
      %p43 = scmp.eq.s32.totalorder %s10, 0
      %p44 = por %p42, %p43
      %p45 = scmp.ne.s32.totalorder %s34, %s37
      %p46 = scmp.eq.s32.totalorder %s15, 3
      %p47 = por %p45, %p46
      %p48 = scmp.ne.s32.totalorder %s37, %s38
      %p49 = scmp.eq.s32.totalorder %s15, 0
      %p50 = por %p48, %p49
      %p51 = scmp.ne.s32.totalorder %s37, %s38
      %p52 = scmp.eq.s32.totalorder %s16, 3
      %p53 = por %p51, %p52
      %p55 = scmp.ne.s32.totalorder %s38, %s54
      %p56 = scmp.eq.s32.totalorder %s16, 0
      %p57 = por %p55, %p56
      %s58 = ssub.s32 %s17, %s29
      %s59 = ssub.s32 %s18, %s25
      %s60 = sor.u32 %s58, %s59
      %p61 = scmp.eq.s32.totalorder %s60, 0
      %s63 = sadd.s32 %s62, 1
      %s64 = scalar_select %p61, %s62, %s63
      %p67 = pneg %p61
      %p68 = scmp.eq.s32.totalorder %s10, 3
      %p69 = por %p67, %p68
      %p70 = scmp.ne.s32.totalorder %s62, %s65
      %p71 = scmp.eq.s32.totalorder %s10, 0
      %p72 = por %p70, %p71
      %p73 = scmp.ne.s32.totalorder %s62, %s65
      %p74 = scmp.eq.s32.totalorder %s15, 3
      %p75 = por %p73, %p74
      %p76 = scmp.ne.s32.totalorder %s65, %s66
      %p77 = scmp.eq.s32.totalorder %s15, 0
      %p78 = por %p76, %p77
      %p79 = scmp.ne.s32.totalorder %s65, %s66
      %p80 = scmp.eq.s32.totalorder %s16, 3
      %p81 = por %p79, %p80
      %p83 = scmp.ne.s32.totalorder %s66, %s82
      %p84 = scmp.eq.s32.totalorder %s16, 0
      %p85 = por %p83, %p84
      %p86 = scmp.le.s32.totalorder 1, %s10
      %p87 = scmp.lt.s32.totalorder %s10, 5
      %p88 = pnand %p86, %p87
      %p89 = pneg %p88
      // Predicated region
      $region9: #{tpu_custom_call.1} parent=5 // pred_check
        _
      $region10: #{tpu_custom_call.1} parent=5 // pred_check_branch
        %91 = sbr.rel (%p88) target = $region12
      $region11: #{tpu_custom_call.1} parent=5 // pred_region
        %s92 = ssub.s32 %s10, 1
      $region12: #{tpu_custom_call.1} parent=5 // pred_fallthru
        _
      %p93 = scmp.lt.s32.totalorder %s10, 4
      // Predicated region
      $region13: #{tpu_custom_call.1} parent=5 // pred_check
        %p94 = pneg %p93
      $region14: #{tpu_custom_call.1} parent=5 // pred_check_branch
        %96 = sbr.rel (%p94) target = $region16
      $region15: #{tpu_custom_call.1} parent=5 // pred_region
        // Predicated region
        $region17: #{tpu_custom_call.1} parent=15 // pred_check
          %p97 = pneg %p44
        $region18: #{tpu_custom_call.1} parent=15 // pred_check_branch
          %99 = sbr.rel (%p97) target = $region20
        $region19: #{tpu_custom_call.1} parent=15 // pred_region
          %s100 = sand.u32 %s34, 1
          %s101 = sand.u32 %s34, 1
          %s102 = smul.addr %s101, 4096
          %s103 = scalar_lea.vmem [#allocation2], %s102
          %s104 = smul.u32 4, %s18
          %s105 = smul.u32 4, %s17
          %s106 = ssub.s32 17, %s104
          %p107 = scmp.lt.s32.totalorder %s106, 4
          %s108 = scalar_select %p107, %s106, 4
          %s109 = smul.u32 128, %s108
          %s110 = smul.u32 %s109, 16
          %s111 = smul.u32 %s110, 4
          %s112 = smul.u32 %s111, 2
          %p113 = scmp.ne.s32.totalorder 0, %s112
          %s114 = smul.addr %s105, 2
          %s115 = smul.addr %s104, 136
          %s116 = sadd.s32 %s114, %s115
          %s117 = smul.addr %s116, 8
          %s118 = scalar_lea.vmem %s0, %s117
          // Predicated region
          $region21: #{tpu_custom_call.1} parent=19 // pred_check
            %p119 = pneg %p113
          $region22: #{tpu_custom_call.1} parent=19 // pred_check_branch
            %121 = sbr.rel (%p119) target = $region24
          $region23: #{tpu_custom_call.1} parent=19 // pred_region
            // Predicated region
            $region25: #{tpu_custom_call.1} parent=23 // pred_check
              _
            $region26: #{tpu_custom_call.1} parent=23 // pred_check_branch
              %123 = sbr.rel (0) target = $region28
            $region27: #{tpu_custom_call.1} parent=23 // pred_region
              // Predicated region
              $region40: #{tpu_custom_call.1} parent=27 // pred_check
                _
              $region41: #{tpu_custom_call.1} parent=27 // pred_check_branch
                %400 = sbr.rel (0) target = $region43
              $region42: #{tpu_custom_call.1} parent=27 // pred_region
                // While loop
                $region44: #{tpu_custom_call.1} parent=42 // loop_pre_header
                  _
                $region45: #{tpu_custom_call.1} parent=42 // loop_header
                  %s402 = sphi 0, %s404
                  %p403 = scmp.ge.s32.totalorder %s402, %s108
                  %s407 = sphi 0, %s668
                  %s408 = sphi %s118, %s671
                  %s409 = sphi %s103, %s672
                $region46: #{tpu_custom_call.1} parent=42 // loop_header_branch
                  %406 = sbr.rel (%p403) target = $region50
                $region47: #{tpu_custom_call.1} parent=42 // loop_body
                  %v410 = vld [vmem:[%s408] sm:$0xff]
                  %411 = vst [vmem:[%s409] sm:$0xff] %v410
                  %v412 = vld [vmem:[%s408 + $0x8] sm:$0xff]
                  %413 = vst [vmem:[%s409 + $0x8] sm:$0xff] %v412
                  %v414 = vld [vmem:[%s408 + $0x10] sm:$0xff]
                  %415 = vst [vmem:[%s409 + $0x10] sm:$0xff] %v414
                  %v416 = vld [vmem:[%s408 + $0x18] sm:$0xff]
                  %417 = vst [vmem:[%s409 + $0x18] sm:$0xff] %v416
                  %v418 = vld [vmem:[%s408 + $0x20] sm:$0xff]
                  %419 = vst [vmem:[%s409 + $0x20] sm:$0xff] %v418
                  %v420 = vld [vmem:[%s408 + $0x28] sm:$0xff]
                  %421 = vst [vmem:[%s409 + $0x28] sm:$0xff] %v420
                  %v422 = vld [vmem:[%s408 + $0x30] sm:$0xff]
                  %423 = vst [vmem:[%s409 + $0x30] sm:$0xff] %v422
                  %v424 = vld [vmem:[%s408 + $0x38] sm:$0xff]
                  %425 = vst [vmem:[%s409 + $0x38] sm:$0xff] %v424
                  %v426 = vld [vmem:[%s408 + $0x40] sm:$0xff]
                  %427 = vst [vmem:[%s409 + $0x40] sm:$0xff] %v426
                  %v428 = vld [vmem:[%s408 + $0x48] sm:$0xff]
                  %429 = vst [vmem:[%s409 + $0x48] sm:$0xff] %v428
                  %v430 = vld [vmem:[%s408 + $0x50] sm:$0xff]
                  %431 = vst [vmem:[%s409 + $0x50] sm:$0xff] %v430
                  %v432 = vld [vmem:[%s408 + $0x58] sm:$0xff]
                  %433 = vst [vmem:[%s409 + $0x58] sm:$0xff] %v432
                  %v434 = vld [vmem:[%s408 + $0x60] sm:$0xff]
                  %435 = vst [vmem:[%s409 + $0x60] sm:$0xff] %v434
                  %v436 = vld [vmem:[%s408 + $0x68] sm:$0xff]
                  %437 = vst [vmem:[%s409 + $0x68] sm:$0xff] %v436
                  %v438 = vld [vmem:[%s408 + $0x70] sm:$0xff]
                  %439 = vst [vmem:[%s409 + $0x70] sm:$0xff] %v438
                  %v440 = vld [vmem:[%s408 + $0x78] sm:$0xff]
                  %441 = vst [vmem:[%s409 + $0x78] sm:$0xff] %v440
                  %v442 = vld [vmem:[%s408 + $0x80] sm:$0xff]
                  %443 = vst [vmem:[%s409 + $0x80] sm:$0xff] %v442
                  %v444 = vld [vmem:[%s408 + $0x88] sm:$0xff]
                  %445 = vst [vmem:[%s409 + $0x88] sm:$0xff] %v444
                  %v446 = vld [vmem:[%s408 + $0x90] sm:$0xff]
                  %447 = vst [vmem:[%s409 + $0x90] sm:$0xff] %v446
                  %v448 = vld [vmem:[%s408 + $0x98] sm:$0xff]
                  %449 = vst [vmem:[%s409 + $0x98] sm:$0xff] %v448
                  %v450 = vld [vmem:[%s408 + $0xa0] sm:$0xff]
                  %451 = vst [vmem:[%s409 + $0xa0] sm:$0xff] %v450
                  %v452 = vld [vmem:[%s408 + $0xa8] sm:$0xff]
                  %453 = vst [vmem:[%s409 + $0xa8] sm:$0xff] %v452
                  %v454 = vld [vmem:[%s408 + $0xb0] sm:$0xff]
                  %455 = vst [vmem:[%s409 + $0xb0] sm:$0xff] %v454
                  %v456 = vld [vmem:[%s408 + $0xb8] sm:$0xff]
                  %457 = vst [vmem:[%s409 + $0xb8] sm:$0xff] %v456
                  %v458 = vld [vmem:[%s408 + $0xc0] sm:$0xff]
                  %459 = vst [vmem:[%s409 + $0xc0] sm:$0xff] %v458
                  %v460 = vld [vmem:[%s408 + $0xc8] sm:$0xff]
                  %461 = vst [vmem:[%s409 + $0xc8] sm:$0xff] %v460
                  %v462 = vld [vmem:[%s408 + $0xd0] sm:$0xff]
                  %463 = vst [vmem:[%s409 + $0xd0] sm:$0xff] %v462
                  %v464 = vld [vmem:[%s408 + $0xd8] sm:$0xff]
                  %465 = vst [vmem:[%s409 + $0xd8] sm:$0xff] %v464
                  %v466 = vld [vmem:[%s408 + $0xe0] sm:$0xff]
                  %467 = vst [vmem:[%s409 + $0xe0] sm:$0xff] %v466
                  %v468 = vld [vmem:[%s408 + $0xe8] sm:$0xff]
                  %469 = vst [vmem:[%s409 + $0xe8] sm:$0xff] %v468
                  %v470 = vld [vmem:[%s408 + $0xf0] sm:$0xff]
                  %471 = vst [vmem:[%s409 + $0xf0] sm:$0xff] %v470
                  %v472 = vld [vmem:[%s408 + $0xf8] sm:$0xff]
                  %473 = vst [vmem:[%s409 + $0xf8] sm:$0xff] %v472
                  %v474 = vld [vmem:[%s408 + $0x100] sm:$0xff]
                  %475 = vst [vmem:[%s409 + $0x100] sm:$0xff] %v474
                  %v476 = vld [vmem:[%s408 + $0x108] sm:$0xff]
                  %477 = vst [vmem:[%s409 + $0x108] sm:$0xff] %v476
                  %v478 = vld [vmem:[%s408 + $0x110] sm:$0xff]
                  %479 = vst [vmem:[%s409 + $0x110] sm:$0xff] %v478
                  %v480 = vld [vmem:[%s408 + $0x118] sm:$0xff]
                  %481 = vst [vmem:[%s409 + $0x118] sm:$0xff] %v480
                  %v482 = vld [vmem:[%s408 + $0x120] sm:$0xff]
                  %483 = vst [vmem:[%s409 + $0x120] sm:$0xff] %v482
                  %v484 = vld [vmem:[%s408 + $0x128] sm:$0xff]
                  %485 = vst [vmem:[%s409 + $0x128] sm:$0xff] %v484
                  %v486 = vld [vmem:[%s408 + $0x130] sm:$0xff]
                  %487 = vst [vmem:[%s409 + $0x130] sm:$0xff] %v486
                  %v488 = vld [vmem:[%s408 + $0x138] sm:$0xff]
                  %489 = vst [vmem:[%s409 + $0x138] sm:$0xff] %v488
                  %v490 = vld [vmem:[%s408 + $0x140] sm:$0xff]
                  %491 = vst [vmem:[%s409 + $0x140] sm:$0xff] %v490
                  %v492 = vld [vmem:[%s408 + $0x148] sm:$0xff]
                  %493 = vst [vmem:[%s409 + $0x148] sm:$0xff] %v492
                  %v494 = vld [vmem:[%s408 + $0x150] sm:$0xff]
                  %495 = vst [vmem:[%s409 + $0x150] sm:$0xff] %v494
                  %v496 = vld [vmem:[%s408 + $0x158] sm:$0xff]
                  %497 = vst [vmem:[%s409 + $0x158] sm:$0xff] %v496
                  %v498 = vld [vmem:[%s408 + $0x160] sm:$0xff]
                  %499 = vst [vmem:[%s409 + $0x160] sm:$0xff] %v498
                  %v500 = vld [vmem:[%s408 + $0x168] sm:$0xff]
                  %501 = vst [vmem:[%s409 + $0x168] sm:$0xff] %v500
                  %v502 = vld [vmem:[%s408 + $0x170] sm:$0xff]
                  %503 = vst [vmem:[%s409 + $0x170] sm:$0xff] %v502
                  %v504 = vld [vmem:[%s408 + $0x178] sm:$0xff]
                  %505 = vst [vmem:[%s409 + $0x178] sm:$0xff] %v504
                  %v506 = vld [vmem:[%s408 + $0x180] sm:$0xff]
                  %507 = vst [vmem:[%s409 + $0x180] sm:$0xff] %v506
                  %v508 = vld [vmem:[%s408 + $0x188] sm:$0xff]
                  %509 = vst [vmem:[%s409 + $0x188] sm:$0xff] %v508
                  %v510 = vld [vmem:[%s408 + $0x190] sm:$0xff]
                  %511 = vst [vmem:[%s409 + $0x190] sm:$0xff] %v510
                  %v512 = vld [vmem:[%s408 + $0x198] sm:$0xff]
                  %513 = vst [vmem:[%s409 + $0x198] sm:$0xff] %v512
                  %v514 = vld [vmem:[%s408 + $0x1a0] sm:$0xff]
                  %515 = vst [vmem:[%s409 + $0x1a0] sm:$0xff] %v514
                  %v516 = vld [vmem:[%s408 + $0x1a8] sm:$0xff]
                  %517 = vst [vmem:[%s409 + $0x1a8] sm:$0xff] %v516
                  %v518 = vld [vmem:[%s408 + $0x1b0] sm:$0xff]
                  %519 = vst [vmem:[%s409 + $0x1b0] sm:$0xff] %v518
                  %v520 = vld [vmem:[%s408 + $0x1b8] sm:$0xff]
                  %521 = vst [vmem:[%s409 + $0x1b8] sm:$0xff] %v520
                  %v522 = vld [vmem:[%s408 + $0x1c0] sm:$0xff]
                  %523 = vst [vmem:[%s409 + $0x1c0] sm:$0xff] %v522
                  %v524 = vld [vmem:[%s408 + $0x1c8] sm:$0xff]
                  %525 = vst [vmem:[%s409 + $0x1c8] sm:$0xff] %v524
                  %v526 = vld [vmem:[%s408 + $0x1d0] sm:$0xff]
                  %527 = vst [vmem:[%s409 + $0x1d0] sm:$0xff] %v526
                  %v528 = vld [vmem:[%s408 + $0x1d8] sm:$0xff]
                  %529 = vst [vmem:[%s409 + $0x1d8] sm:$0xff] %v528
                  %v530 = vld [vmem:[%s408 + $0x1e0] sm:$0xff]
                  %531 = vst [vmem:[%s409 + $0x1e0] sm:$0xff] %v530
                  %v532 = vld [vmem:[%s408 + $0x1e8] sm:$0xff]
                  %533 = vst [vmem:[%s409 + $0x1e8] sm:$0xff] %v532
                  %v534 = vld [vmem:[%s408 + $0x1f0] sm:$0xff]
                  %535 = vst [vmem:[%s409 + $0x1f0] sm:$0xff] %v534
                  %v536 = vld [vmem:[%s408 + $0x1f8] sm:$0xff]
                  %537 = vst [vmem:[%s409 + $0x1f8] sm:$0xff] %v536
                  %v538 = vld [vmem:[%s408 + $0x200] sm:$0xff]
                  %539 = vst [vmem:[%s409 + $0x200] sm:$0xff] %v538
                  %v540 = vld [vmem:[%s408 + $0x208] sm:$0xff]
                  %541 = vst [vmem:[%s409 + $0x208] sm:$0xff] %v540
                  %v542 = vld [vmem:[%s408 + $0x210] sm:$0xff]
                  %543 = vst [vmem:[%s409 + $0x210] sm:$0xff] %v542
                  %v544 = vld [vmem:[%s408 + $0x218] sm:$0xff]
                  %545 = vst [vmem:[%s409 + $0x218] sm:$0xff] %v544
                  %v546 = vld [vmem:[%s408 + $0x220] sm:$0xff]
                  %547 = vst [vmem:[%s409 + $0x220] sm:$0xff] %v546
                  %v548 = vld [vmem:[%s408 + $0x228] sm:$0xff]
                  %549 = vst [vmem:[%s409 + $0x228] sm:$0xff] %v548
                  %v550 = vld [vmem:[%s408 + $0x230] sm:$0xff]
                  %551 = vst [vmem:[%s409 + $0x230] sm:$0xff] %v550
                  %v552 = vld [vmem:[%s408 + $0x238] sm:$0xff]
                  %553 = vst [vmem:[%s409 + $0x238] sm:$0xff] %v552
                  %v554 = vld [vmem:[%s408 + $0x240] sm:$0xff]
                  %555 = vst [vmem:[%s409 + $0x240] sm:$0xff] %v554
                  %v556 = vld [vmem:[%s408 + $0x248] sm:$0xff]
                  %557 = vst [vmem:[%s409 + $0x248] sm:$0xff] %v556
                  %v558 = vld [vmem:[%s408 + $0x250] sm:$0xff]
                  %559 = vst [vmem:[%s409 + $0x250] sm:$0xff] %v558
                  %v560 = vld [vmem:[%s408 + $0x258] sm:$0xff]
                  %561 = vst [vmem:[%s409 + $0x258] sm:$0xff] %v560
                  %v562 = vld [vmem:[%s408 + $0x260] sm:$0xff]
                  %563 = vst [vmem:[%s409 + $0x260] sm:$0xff] %v562
                  %v564 = vld [vmem:[%s408 + $0x268] sm:$0xff]
                  %565 = vst [vmem:[%s409 + $0x268] sm:$0xff] %v564
                  %v566 = vld [vmem:[%s408 + $0x270] sm:$0xff]
                  %567 = vst [vmem:[%s409 + $0x270] sm:$0xff] %v566
                  %v568 = vld [vmem:[%s408 + $0x278] sm:$0xff]
                  %569 = vst [vmem:[%s409 + $0x278] sm:$0xff] %v568
                  %v570 = vld [vmem:[%s408 + $0x280] sm:$0xff]
                  %571 = vst [vmem:[%s409 + $0x280] sm:$0xff] %v570
                  %v572 = vld [vmem:[%s408 + $0x288] sm:$0xff]
                  %573 = vst [vmem:[%s409 + $0x288] sm:$0xff] %v572
                  %v574 = vld [vmem:[%s408 + $0x290] sm:$0xff]
                  %575 = vst [vmem:[%s409 + $0x290] sm:$0xff] %v574
                  %v576 = vld [vmem:[%s408 + $0x298] sm:$0xff]
                  %577 = vst [vmem:[%s409 + $0x298] sm:$0xff] %v576
                  %v578 = vld [vmem:[%s408 + $0x2a0] sm:$0xff]
                  %579 = vst [vmem:[%s409 + $0x2a0] sm:$0xff] %v578
                  %v580 = vld [vmem:[%s408 + $0x2a8] sm:$0xff]
                  %581 = vst [vmem:[%s409 + $0x2a8] sm:$0xff] %v580
                  %v582 = vld [vmem:[%s408 + $0x2b0] sm:$0xff]
                  %583 = vst [vmem:[%s409 + $0x2b0] sm:$0xff] %v582
                  %v584 = vld [vmem:[%s408 + $0x2b8] sm:$0xff]
                  %585 = vst [vmem:[%s409 + $0x2b8] sm:$0xff] %v584
                  %v586 = vld [vmem:[%s408 + $0x2c0] sm:$0xff]
                  %587 = vst [vmem:[%s409 + $0x2c0] sm:$0xff] %v586
                  %v588 = vld [vmem:[%s408 + $0x2c8] sm:$0xff]
                  %589 = vst [vmem:[%s409 + $0x2c8] sm:$0xff] %v588
                  %v590 = vld [vmem:[%s408 + $0x2d0] sm:$0xff]
                  %591 = vst [vmem:[%s409 + $0x2d0] sm:$0xff] %v590
                  %v592 = vld [vmem:[%s408 + $0x2d8] sm:$0xff]
                  %593 = vst [vmem:[%s409 + $0x2d8] sm:$0xff] %v592
                  %v594 = vld [vmem:[%s408 + $0x2e0] sm:$0xff]
                  %595 = vst [vmem:[%s409 + $0x2e0] sm:$0xff] %v594
                  %v596 = vld [vmem:[%s408 + $0x2e8] sm:$0xff]
                  %597 = vst [vmem:[%s409 + $0x2e8] sm:$0xff] %v596
                  %v598 = vld [vmem:[%s408 + $0x2f0] sm:$0xff]
                  %599 = vst [vmem:[%s409 + $0x2f0] sm:$0xff] %v598
                  %v600 = vld [vmem:[%s408 + $0x2f8] sm:$0xff]
                  %601 = vst [vmem:[%s409 + $0x2f8] sm:$0xff] %v600
                  %v602 = vld [vmem:[%s408 + $0x300] sm:$0xff]
                  %603 = vst [vmem:[%s409 + $0x300] sm:$0xff] %v602
                  %v604 = vld [vmem:[%s408 + $0x308] sm:$0xff]
                  %605 = vst [vmem:[%s409 + $0x308] sm:$0xff] %v604
                  %v606 = vld [vmem:[%s408 + $0x310] sm:$0xff]
                  %607 = vst [vmem:[%s409 + $0x310] sm:$0xff] %v606
                  %v608 = vld [vmem:[%s408 + $0x318] sm:$0xff]
                  %609 = vst [vmem:[%s409 + $0x318] sm:$0xff] %v608
                  %v610 = vld [vmem:[%s408 + $0x320] sm:$0xff]
                  %611 = vst [vmem:[%s409 + $0x320] sm:$0xff] %v610
                  %v612 = vld [vmem:[%s408 + $0x328] sm:$0xff]
                  %613 = vst [vmem:[%s409 + $0x328] sm:$0xff] %v612
                  %v614 = vld [vmem:[%s408 + $0x330] sm:$0xff]
                  %615 = vst [vmem:[%s409 + $0x330] sm:$0xff] %v614
                  %v616 = vld [vmem:[%s408 + $0x338] sm:$0xff]
                  %617 = vst [vmem:[%s409 + $0x338] sm:$0xff] %v616
                  %v618 = vld [vmem:[%s408 + $0x340] sm:$0xff]
                  %619 = vst [vmem:[%s409 + $0x340] sm:$0xff] %v618
                  %v620 = vld [vmem:[%s408 + $0x348] sm:$0xff]
                  %621 = vst [vmem:[%s409 + $0x348] sm:$0xff] %v620
                  %v622 = vld [vmem:[%s408 + $0x350] sm:$0xff]
                  %623 = vst [vmem:[%s409 + $0x350] sm:$0xff] %v622
                  %v624 = vld [vmem:[%s408 + $0x358] sm:$0xff]
                  %625 = vst [vmem:[%s409 + $0x358] sm:$0xff] %v624
                  %v626 = vld [vmem:[%s408 + $0x360] sm:$0xff]
                  %627 = vst [vmem:[%s409 + $0x360] sm:$0xff] %v626
                  %v628 = vld [vmem:[%s408 + $0x368] sm:$0xff]
                  %629 = vst [vmem:[%s409 + $0x368] sm:$0xff] %v628
                  %v630 = vld [vmem:[%s408 + $0x370] sm:$0xff]
                  %631 = vst [vmem:[%s409 + $0x370] sm:$0xff] %v630
                  %v632 = vld [vmem:[%s408 + $0x378] sm:$0xff]
                  %633 = vst [vmem:[%s409 + $0x378] sm:$0xff] %v632
                  %v634 = vld [vmem:[%s408 + $0x380] sm:$0xff]
                  %635 = vst [vmem:[%s409 + $0x380] sm:$0xff] %v634
                  %v636 = vld [vmem:[%s408 + $0x388] sm:$0xff]
                  %637 = vst [vmem:[%s409 + $0x388] sm:$0xff] %v636
                  %v638 = vld [vmem:[%s408 + $0x390] sm:$0xff]
                  %639 = vst [vmem:[%s409 + $0x390] sm:$0xff] %v638
                  %v640 = vld [vmem:[%s408 + $0x398] sm:$0xff]
                  %641 = vst [vmem:[%s409 + $0x398] sm:$0xff] %v640
                  %v642 = vld [vmem:[%s408 + $0x3a0] sm:$0xff]
                  %643 = vst [vmem:[%s409 + $0x3a0] sm:$0xff] %v642
                  %v644 = vld [vmem:[%s408 + $0x3a8] sm:$0xff]
                  %645 = vst [vmem:[%s409 + $0x3a8] sm:$0xff] %v644
                  %v646 = vld [vmem:[%s408 + $0x3b0] sm:$0xff]
                  %647 = vst [vmem:[%s409 + $0x3b0] sm:$0xff] %v646
                  %v648 = vld [vmem:[%s408 + $0x3b8] sm:$0xff]
                  %649 = vst [vmem:[%s409 + $0x3b8] sm:$0xff] %v648
                  %v650 = vld [vmem:[%s408 + $0x3c0] sm:$0xff]
                  %651 = vst [vmem:[%s409 + $0x3c0] sm:$0xff] %v650
                  %v652 = vld [vmem:[%s408 + $0x3c8] sm:$0xff]
                  %653 = vst [vmem:[%s409 + $0x3c8] sm:$0xff] %v652
                  %v654 = vld [vmem:[%s408 + $0x3d0] sm:$0xff]
                  %655 = vst [vmem:[%s409 + $0x3d0] sm:$0xff] %v654
                  %v656 = vld [vmem:[%s408 + $0x3d8] sm:$0xff]
                  %657 = vst [vmem:[%s409 + $0x3d8] sm:$0xff] %v656
                  %v658 = vld [vmem:[%s408 + $0x3e0] sm:$0xff]
                  %659 = vst [vmem:[%s409 + $0x3e0] sm:$0xff] %v658
                  %v660 = vld [vmem:[%s408 + $0x3e8] sm:$0xff]
                  %661 = vst [vmem:[%s409 + $0x3e8] sm:$0xff] %v660
                  %v662 = vld [vmem:[%s408 + $0x3f0] sm:$0xff]
                  %663 = vst [vmem:[%s409 + $0x3f0] sm:$0xff] %v662
                  %v664 = vld [vmem:[%s408 + $0x3f8] sm:$0xff]
                  %665 = vst [vmem:[%s409 + $0x3f8] sm:$0xff] %v664
                  %s666 = sadd.s32 1, %s407
                  %p667 = scmp.ge.s32.totalorder %s666, %s108
                  %s668 = scalar_select %p667, 0, %s666
                  %s669 = smul.u32 %s668, 1088
                  %s670 = smul.u32 %s668, 1024
                  %s671 = scalar_lea.vmem %s118, %s669
                  %s672 = scalar_lea.vmem %s103, %s670 [#allocation2]
                $region48: #{tpu_custom_call.1} parent=42 // loop_footer
                  %s404 = sadd.s32 %s402, 1
                $region49: #{tpu_custom_call.1} parent=42 // loop_footer_branch
                  %401 = sbr.rel target = $region45
                $region50: #{tpu_custom_call.1} parent=42 // loop_exit
                  _
              $region43: #{tpu_custom_call.1} parent=27 // pred_fallthru
                _
              // Predicated region
              $region51: #{tpu_custom_call.1} parent=27 // pred_check
                _
              $region52: #{tpu_custom_call.1} parent=27 // pred_check_branch
                %674 = sbr.rel target = $region54
              $region53: #{tpu_custom_call.1} parent=27 // pred_region
                _
              $region54: #{tpu_custom_call.1} parent=27 // pred_fallthru
                _
            $region28: #{tpu_custom_call.1} parent=23 // pred_fallthru
              _
            // Predicated region
            $region29: #{tpu_custom_call.1} parent=23 // pred_check
              _
            $region30: #{tpu_custom_call.1} parent=23 // pred_check_branch
              %125 = sbr.rel target = $region32
            $region31: #{tpu_custom_call.1} parent=23 // pred_region
              // While loop
              $region33: #{tpu_custom_call.1} parent=31 // loop_pre_header
                _
              $region34: #{tpu_custom_call.1} parent=31 // loop_header
                %s128 = sphi 0, %s130
                %p129 = scmp.ge.s32.totalorder %s128, %s108
                %s133 = sphi 0, %s394
                %s134 = sphi %s118, %s397
                %s135 = sphi %s103, %s398
              $region35: #{tpu_custom_call.1} parent=31 // loop_header_branch
                %132 = sbr.rel (%p129) target = $region39
              $region36: #{tpu_custom_call.1} parent=31 // loop_body
                %v136 = vld [vmem:[%s134] sm:$0xff]
                %137 = vst [vmem:[%s135] sm:$0xff] %v136
                %v138 = vld [vmem:[%s134 + $0x8] sm:$0xff]
                %139 = vst [vmem:[%s135 + $0x8] sm:$0xff] %v138
                %v140 = vld [vmem:[%s134 + $0x10] sm:$0xff]
                %141 = vst [vmem:[%s135 + $0x10] sm:$0xff] %v140
                %v142 = vld [vmem:[%s134 + $0x18] sm:$0xff]
                %143 = vst [vmem:[%s135 + $0x18] sm:$0xff] %v142
                %v144 = vld [vmem:[%s134 + $0x20] sm:$0xff]
                %145 = vst [vmem:[%s135 + $0x20] sm:$0xff] %v144
                %v146 = vld [vmem:[%s134 + $0x28] sm:$0xff]
                %147 = vst [vmem:[%s135 + $0x28] sm:$0xff] %v146
                %v148 = vld [vmem:[%s134 + $0x30] sm:$0xff]
                %149 = vst [vmem:[%s135 + $0x30] sm:$0xff] %v148
                %v150 = vld [vmem:[%s134 + $0x38] sm:$0xff]
                %151 = vst [vmem:[%s135 + $0x38] sm:$0xff] %v150
                %v152 = vld [vmem:[%s134 + $0x40] sm:$0xff]
                %153 = vst [vmem:[%s135 + $0x40] sm:$0xff] %v152
                %v154 = vld [vmem:[%s134 + $0x48] sm:$0xff]
                %155 = vst [vmem:[%s135 + $0x48] sm:$0xff] %v154
                %v156 = vld [vmem:[%s134 + $0x50] sm:$0xff]
                %157 = vst [vmem:[%s135 + $0x50] sm:$0xff] %v156
                %v158 = vld [vmem:[%s134 + $0x58] sm:$0xff]
                %159 = vst [vmem:[%s135 + $0x58] sm:$0xff] %v158
                %v160 = vld [vmem:[%s134 + $0x60] sm:$0xff]
                %161 = vst [vmem:[%s135 + $0x60] sm:$0xff] %v160
                %v162 = vld [vmem:[%s134 + $0x68] sm:$0xff]
                %163 = vst [vmem:[%s135 + $0x68] sm:$0xff] %v162
                %v164 = vld [vmem:[%s134 + $0x70] sm:$0xff]
                %165 = vst [vmem:[%s135 + $0x70] sm:$0xff] %v164
                %v166 = vld [vmem:[%s134 + $0x78] sm:$0xff]
                %167 = vst [vmem:[%s135 + $0x78] sm:$0xff] %v166
                %v168 = vld [vmem:[%s134 + $0x80] sm:$0xff]
                %169 = vst [vmem:[%s135 + $0x80] sm:$0xff] %v168
                %v170 = vld [vmem:[%s134 + $0x88] sm:$0xff]
                %171 = vst [vmem:[%s135 + $0x88] sm:$0xff] %v170
                %v172 = vld [vmem:[%s134 + $0x90] sm:$0xff]
                %173 = vst [vmem:[%s135 + $0x90] sm:$0xff] %v172
                %v174 = vld [vmem:[%s134 + $0x98] sm:$0xff]
                %175 = vst [vmem:[%s135 + $0x98] sm:$0xff] %v174
                %v176 = vld [vmem:[%s134 + $0xa0] sm:$0xff]
                %177 = vst [vmem:[%s135 + $0xa0] sm:$0xff] %v176
                %v178 = vld [vmem:[%s134 + $0xa8] sm:$0xff]
                %179 = vst [vmem:[%s135 + $0xa8] sm:$0xff] %v178
                %v180 = vld [vmem:[%s134 + $0xb0] sm:$0xff]
                %181 = vst [vmem:[%s135 + $0xb0] sm:$0xff] %v180
                %v182 = vld [vmem:[%s134 + $0xb8] sm:$0xff]
                %183 = vst [vmem:[%s135 + $0xb8] sm:$0xff] %v182
                %v184 = vld [vmem:[%s134 + $0xc0] sm:$0xff]
                %185 = vst [vmem:[%s135 + $0xc0] sm:$0xff] %v184
                %v186 = vld [vmem:[%s134 + $0xc8] sm:$0xff]
                %187 = vst [vmem:[%s135 + $0xc8] sm:$0xff] %v186
                %v188 = vld [vmem:[%s134 + $0xd0] sm:$0xff]
                %189 = vst [vmem:[%s135 + $0xd0] sm:$0xff] %v188
                %v190 = vld [vmem:[%s134 + $0xd8] sm:$0xff]
                %191 = vst [vmem:[%s135 + $0xd8] sm:$0xff] %v190
                %v192 = vld [vmem:[%s134 + $0xe0] sm:$0xff]
                %193 = vst [vmem:[%s135 + $0xe0] sm:$0xff] %v192
                %v194 = vld [vmem:[%s134 + $0xe8] sm:$0xff]
                %195 = vst [vmem:[%s135 + $0xe8] sm:$0xff] %v194
                %v196 = vld [vmem:[%s134 + $0xf0] sm:$0xff]
                %197 = vst [vmem:[%s135 + $0xf0] sm:$0xff] %v196
                %v198 = vld [vmem:[%s134 + $0xf8] sm:$0xff]
                %199 = vst [vmem:[%s135 + $0xf8] sm:$0xff] %v198
                %v200 = vld [vmem:[%s134 + $0x100] sm:$0xff]
                %201 = vst [vmem:[%s135 + $0x100] sm:$0xff] %v200
                %v202 = vld [vmem:[%s134 + $0x108] sm:$0xff]
                %203 = vst [vmem:[%s135 + $0x108] sm:$0xff] %v202
                %v204 = vld [vmem:[%s134 + $0x110] sm:$0xff]
                %205 = vst [vmem:[%s135 + $0x110] sm:$0xff] %v204
                %v206 = vld [vmem:[%s134 + $0x118] sm:$0xff]
                %207 = vst [vmem:[%s135 + $0x118] sm:$0xff] %v206
                %v208 = vld [vmem:[%s134 + $0x120] sm:$0xff]
                %209 = vst [vmem:[%s135 + $0x120] sm:$0xff] %v208
                %v210 = vld [vmem:[%s134 + $0x128] sm:$0xff]
                %211 = vst [vmem:[%s135 + $0x128] sm:$0xff] %v210
                %v212 = vld [vmem:[%s134 + $0x130] sm:$0xff]
                %213 = vst [vmem:[%s135 + $0x130] sm:$0xff] %v212
                %v214 = vld [vmem:[%s134 + $0x138] sm:$0xff]
                %215 = vst [vmem:[%s135 + $0x138] sm:$0xff] %v214
                %v216 = vld [vmem:[%s134 + $0x140] sm:$0xff]
                %217 = vst [vmem:[%s135 + $0x140] sm:$0xff] %v216
                %v218 = vld [vmem:[%s134 + $0x148] sm:$0xff]
                %219 = vst [vmem:[%s135 + $0x148] sm:$0xff] %v218
                %v220 = vld [vmem:[%s134 + $0x150] sm:$0xff]
                %221 = vst [vmem:[%s135 + $0x150] sm:$0xff] %v220
                %v222 = vld [vmem:[%s134 + $0x158] sm:$0xff]
                %223 = vst [vmem:[%s135 + $0x158] sm:$0xff] %v222
                %v224 = vld [vmem:[%s134 + $0x160] sm:$0xff]
                %225 = vst [vmem:[%s135 + $0x160] sm:$0xff] %v224
                %v226 = vld [vmem:[%s134 + $0x168] sm:$0xff]
                %227 = vst [vmem:[%s135 + $0x168] sm:$0xff] %v226
                %v228 = vld [vmem:[%s134 + $0x170] sm:$0xff]
                %229 = vst [vmem:[%s135 + $0x170] sm:$0xff] %v228
                %v230 = vld [vmem:[%s134 + $0x178] sm:$0xff]
                %231 = vst [vmem:[%s135 + $0x178] sm:$0xff] %v230
                %v232 = vld [vmem:[%s134 + $0x180] sm:$0xff]
                %233 = vst [vmem:[%s135 + $0x180] sm:$0xff] %v232
                %v234 = vld [vmem:[%s134 + $0x188] sm:$0xff]
                %235 = vst [vmem:[%s135 + $0x188] sm:$0xff] %v234
                %v236 = vld [vmem:[%s134 + $0x190] sm:$0xff]
                %237 = vst [vmem:[%s135 + $0x190] sm:$0xff] %v236
                %v238 = vld [vmem:[%s134 + $0x198] sm:$0xff]
                %239 = vst [vmem:[%s135 + $0x198] sm:$0xff] %v238
                %v240 = vld [vmem:[%s134 + $0x1a0] sm:$0xff]
                %241 = vst [vmem:[%s135 + $0x1a0] sm:$0xff] %v240
                %v242 = vld [vmem:[%s134 + $0x1a8] sm:$0xff]
                %243 = vst [vmem:[%s135 + $0x1a8] sm:$0xff] %v242
                %v244 = vld [vmem:[%s134 + $0x1b0] sm:$0xff]
                %245 = vst [vmem:[%s135 + $0x1b0] sm:$0xff] %v244
                %v246 = vld [vmem:[%s134 + $0x1b8] sm:$0xff]
                %247 = vst [vmem:[%s135 + $0x1b8] sm:$0xff] %v246
                %v248 = vld [vmem:[%s134 + $0x1c0] sm:$0xff]
                %249 = vst [vmem:[%s135 + $0x1c0] sm:$0xff] %v248
                %v250 = vld [vmem:[%s134 + $0x1c8] sm:$0xff]
                %251 = vst [vmem:[%s135 + $0x1c8] sm:$0xff] %v250
                %v252 = vld [vmem:[%s134 + $0x1d0] sm:$0xff]
                %253 = vst [vmem:[%s135 + $0x1d0] sm:$0xff] %v252
                %v254 = vld [vmem:[%s134 + $0x1d8] sm:$0xff]
                %255 = vst [vmem:[%s135 + $0x1d8] sm:$0xff] %v254
                %v256 = vld [vmem:[%s134 + $0x1e0] sm:$0xff]
                %257 = vst [vmem:[%s135 + $0x1e0] sm:$0xff] %v256
                %v258 = vld [vmem:[%s134 + $0x1e8] sm:$0xff]
                %259 = vst [vmem:[%s135 + $0x1e8] sm:$0xff] %v258
                %v260 = vld [vmem:[%s134 + $0x1f0] sm:$0xff]
                %261 = vst [vmem:[%s135 + $0x1f0] sm:$0xff] %v260
                %v262 = vld [vmem:[%s134 + $0x1f8] sm:$0xff]
                %263 = vst [vmem:[%s135 + $0x1f8] sm:$0xff] %v262
                %v264 = vld [vmem:[%s134 + $0x200] sm:$0xff]
                %265 = vst [vmem:[%s135 + $0x200] sm:$0xff] %v264
                %v266 = vld [vmem:[%s134 + $0x208] sm:$0xff]
                %267 = vst [vmem:[%s135 + $0x208] sm:$0xff] %v266
                %v268 = vld [vmem:[%s134 + $0x210] sm:$0xff]
                %269 = vst [vmem:[%s135 + $0x210] sm:$0xff] %v268
                %v270 = vld [vmem:[%s134 + $0x218] sm:$0xff]
                %271 = vst [vmem:[%s135 + $0x218] sm:$0xff] %v270
                %v272 = vld [vmem:[%s134 + $0x220] sm:$0xff]
                %273 = vst [vmem:[%s135 + $0x220] sm:$0xff] %v272
                %v274 = vld [vmem:[%s134 + $0x228] sm:$0xff]
                %275 = vst [vmem:[%s135 + $0x228] sm:$0xff] %v274
                %v276 = vld [vmem:[%s134 + $0x230] sm:$0xff]
                %277 = vst [vmem:[%s135 + $0x230] sm:$0xff] %v276
                %v278 = vld [vmem:[%s134 + $0x238] sm:$0xff]
                %279 = vst [vmem:[%s135 + $0x238] sm:$0xff] %v278
                %v280 = vld [vmem:[%s134 + $0x240] sm:$0xff]
                %281 = vst [vmem:[%s135 + $0x240] sm:$0xff] %v280
                %v282 = vld [vmem:[%s134 + $0x248] sm:$0xff]
                %283 = vst [vmem:[%s135 + $0x248] sm:$0xff] %v282
                %v284 = vld [vmem:[%s134 + $0x250] sm:$0xff]
                %285 = vst [vmem:[%s135 + $0x250] sm:$0xff] %v284
                %v286 = vld [vmem:[%s134 + $0x258] sm:$0xff]
                %287 = vst [vmem:[%s135 + $0x258] sm:$0xff] %v286
                %v288 = vld [vmem:[%s134 + $0x260] sm:$0xff]
                %289 = vst [vmem:[%s135 + $0x260] sm:$0xff] %v288
                %v290 = vld [vmem:[%s134 + $0x268] sm:$0xff]
                %291 = vst [vmem:[%s135 + $0x268] sm:$0xff] %v290
                %v292 = vld [vmem:[%s134 + $0x270] sm:$0xff]
                %293 = vst [vmem:[%s135 + $0x270] sm:$0xff] %v292
                %v294 = vld [vmem:[%s134 + $0x278] sm:$0xff]
                %295 = vst [vmem:[%s135 + $0x278] sm:$0xff] %v294
                %v296 = vld [vmem:[%s134 + $0x280] sm:$0xff]
                %297 = vst [vmem:[%s135 + $0x280] sm:$0xff] %v296
                %v298 = vld [vmem:[%s134 + $0x288] sm:$0xff]
                %299 = vst [vmem:[%s135 + $0x288] sm:$0xff] %v298
                %v300 = vld [vmem:[%s134 + $0x290] sm:$0xff]
                %301 = vst [vmem:[%s135 + $0x290] sm:$0xff] %v300
                %v302 = vld [vmem:[%s134 + $0x298] sm:$0xff]
                %303 = vst [vmem:[%s135 + $0x298] sm:$0xff] %v302
                %v304 = vld [vmem:[%s134 + $0x2a0] sm:$0xff]
                %305 = vst [vmem:[%s135 + $0x2a0] sm:$0xff] %v304
                %v306 = vld [vmem:[%s134 + $0x2a8] sm:$0xff]
                %307 = vst [vmem:[%s135 + $0x2a8] sm:$0xff] %v306
                %v308 = vld [vmem:[%s134 + $0x2b0] sm:$0xff]
                %309 = vst [vmem:[%s135 + $0x2b0] sm:$0xff] %v308
                %v310 = vld [vmem:[%s134 + $0x2b8] sm:$0xff]
                %311 = vst [vmem:[%s135 + $0x2b8] sm:$0xff] %v310
                %v312 = vld [vmem:[%s134 + $0x2c0] sm:$0xff]
                %313 = vst [vmem:[%s135 + $0x2c0] sm:$0xff] %v312
                %v314 = vld [vmem:[%s134 + $0x2c8] sm:$0xff]
                %315 = vst [vmem:[%s135 + $0x2c8] sm:$0xff] %v314
                %v316 = vld [vmem:[%s134 + $0x2d0] sm:$0xff]
                %317 = vst [vmem:[%s135 + $0x2d0] sm:$0xff] %v316
                %v318 = vld [vmem:[%s134 + $0x2d8] sm:$0xff]
                %319 = vst [vmem:[%s135 + $0x2d8] sm:$0xff] %v318
                %v320 = vld [vmem:[%s134 + $0x2e0] sm:$0xff]
                %321 = vst [vmem:[%s135 + $0x2e0] sm:$0xff] %v320
                %v322 = vld [vmem:[%s134 + $0x2e8] sm:$0xff]
                %323 = vst [vmem:[%s135 + $0x2e8] sm:$0xff] %v322
                %v324 = vld [vmem:[%s134 + $0x2f0] sm:$0xff]
                %325 = vst [vmem:[%s135 + $0x2f0] sm:$0xff] %v324
                %v326 = vld [vmem:[%s134 + $0x2f8] sm:$0xff]
                %327 = vst [vmem:[%s135 + $0x2f8] sm:$0xff] %v326
                %v328 = vld [vmem:[%s134 + $0x300] sm:$0xff]
                %329 = vst [vmem:[%s135 + $0x300] sm:$0xff] %v328
                %v330 = vld [vmem:[%s134 + $0x308] sm:$0xff]
                %331 = vst [vmem:[%s135 + $0x308] sm:$0xff] %v330
                %v332 = vld [vmem:[%s134 + $0x310] sm:$0xff]
                %333 = vst [vmem:[%s135 + $0x310] sm:$0xff] %v332
                %v334 = vld [vmem:[%s134 + $0x318] sm:$0xff]
                %335 = vst [vmem:[%s135 + $0x318] sm:$0xff] %v334
                %v336 = vld [vmem:[%s134 + $0x320] sm:$0xff]
                %337 = vst [vmem:[%s135 + $0x320] sm:$0xff] %v336
                %v338 = vld [vmem:[%s134 + $0x328] sm:$0xff]
                %339 = vst [vmem:[%s135 + $0x328] sm:$0xff] %v338
                %v340 = vld [vmem:[%s134 + $0x330] sm:$0xff]
                %341 = vst [vmem:[%s135 + $0x330] sm:$0xff] %v340
                %v342 = vld [vmem:[%s134 + $0x338] sm:$0xff]
                %343 = vst [vmem:[%s135 + $0x338] sm:$0xff] %v342
                %v344 = vld [vmem:[%s134 + $0x340] sm:$0xff]
                %345 = vst [vmem:[%s135 + $0x340] sm:$0xff] %v344
                %v346 = vld [vmem:[%s134 + $0x348] sm:$0xff]
                %347 = vst [vmem:[%s135 + $0x348] sm:$0xff] %v346
                %v348 = vld [vmem:[%s134 + $0x350] sm:$0xff]
                %349 = vst [vmem:[%s135 + $0x350] sm:$0xff] %v348
                %v350 = vld [vmem:[%s134 + $0x358] sm:$0xff]
                %351 = vst [vmem:[%s135 + $0x358] sm:$0xff] %v350
                %v352 = vld [vmem:[%s134 + $0x360] sm:$0xff]
                %353 = vst [vmem:[%s135 + $0x360] sm:$0xff] %v352
                %v354 = vld [vmem:[%s134 + $0x368] sm:$0xff]
                %355 = vst [vmem:[%s135 + $0x368] sm:$0xff] %v354
                %v356 = vld [vmem:[%s134 + $0x370] sm:$0xff]
                %357 = vst [vmem:[%s135 + $0x370] sm:$0xff] %v356
                %v358 = vld [vmem:[%s134 + $0x378] sm:$0xff]
                %359 = vst [vmem:[%s135 + $0x378] sm:$0xff] %v358
                %v360 = vld [vmem:[%s134 + $0x380] sm:$0xff]
                %361 = vst [vmem:[%s135 + $0x380] sm:$0xff] %v360
                %v362 = vld [vmem:[%s134 + $0x388] sm:$0xff]
                %363 = vst [vmem:[%s135 + $0x388] sm:$0xff] %v362
                %v364 = vld [vmem:[%s134 + $0x390] sm:$0xff]
                %365 = vst [vmem:[%s135 + $0x390] sm:$0xff] %v364
                %v366 = vld [vmem:[%s134 + $0x398] sm:$0xff]
                %367 = vst [vmem:[%s135 + $0x398] sm:$0xff] %v366
                %v368 = vld [vmem:[%s134 + $0x3a0] sm:$0xff]
                %369 = vst [vmem:[%s135 + $0x3a0] sm:$0xff] %v368
                %v370 = vld [vmem:[%s134 + $0x3a8] sm:$0xff]
                %371 = vst [vmem:[%s135 + $0x3a8] sm:$0xff] %v370
                %v372 = vld [vmem:[%s134 + $0x3b0] sm:$0xff]
                %373 = vst [vmem:[%s135 + $0x3b0] sm:$0xff] %v372
                %v374 = vld [vmem:[%s134 + $0x3b8] sm:$0xff]
                %375 = vst [vmem:[%s135 + $0x3b8] sm:$0xff] %v374
                %v376 = vld [vmem:[%s134 + $0x3c0] sm:$0xff]
                %377 = vst [vmem:[%s135 + $0x3c0] sm:$0xff] %v376
                %v378 = vld [vmem:[%s134 + $0x3c8] sm:$0xff]
                %379 = vst [vmem:[%s135 + $0x3c8] sm:$0xff] %v378
                %v380 = vld [vmem:[%s134 + $0x3d0] sm:$0xff]
                %381 = vst [vmem:[%s135 + $0x3d0] sm:$0xff] %v380
                %v382 = vld [vmem:[%s134 + $0x3d8] sm:$0xff]
                %383 = vst [vmem:[%s135 + $0x3d8] sm:$0xff] %v382
                %v384 = vld [vmem:[%s134 + $0x3e0] sm:$0xff]
                %385 = vst [vmem:[%s135 + $0x3e0] sm:$0xff] %v384
                %v386 = vld [vmem:[%s134 + $0x3e8] sm:$0xff]
                %387 = vst [vmem:[%s135 + $0x3e8] sm:$0xff] %v386
                %v388 = vld [vmem:[%s134 + $0x3f0] sm:$0xff]
                %389 = vst [vmem:[%s135 + $0x3f0] sm:$0xff] %v388
                %v390 = vld [vmem:[%s134 + $0x3f8] sm:$0xff]
                %391 = vst [vmem:[%s135 + $0x3f8] sm:$0xff] %v390
                %s392 = sadd.s32 1, %s133
                %p393 = scmp.ge.s32.totalorder %s392, %s108
                %s394 = scalar_select %p393, 0, %s392
                %s395 = smul.u32 %s394, 1088
                %s396 = smul.u32 %s394, 1024
                %s397 = scalar_lea.vmem %s118, %s395
                %s398 = scalar_lea.vmem %s103, %s396 [#allocation2]
              $region37: #{tpu_custom_call.1} parent=31 // loop_footer
                %s130 = sadd.s32 %s128, 1
              $region38: #{tpu_custom_call.1} parent=31 // loop_footer_branch
                %127 = sbr.rel target = $region34
              $region39: #{tpu_custom_call.1} parent=31 // loop_exit
                _
            $region32: #{tpu_custom_call.1} parent=23 // pred_fallthru
              _
          $region24: #{tpu_custom_call.1} parent=19 // pred_fallthru
            _
          %675 = vnop
        $region20: #{tpu_custom_call.1} parent=15 // pred_fallthru
          _
      $region16: #{tpu_custom_call.1} parent=5 // pred_fallthru
        _
      %p676 = scmp.le.s32.totalorder 1, %s10
      %p677 = scmp.lt.s32.totalorder %s10, 5
      %p678 = pnand %p676, %p677
      %p679 = pneg %p678
      // Predicated region
      $region55: #{tpu_custom_call.1} parent=5 // pred_check
        _
      $region56: #{tpu_custom_call.1} parent=5 // pred_check_branch
        %681 = sbr.rel (%p678) target = $region58
      $region57: #{tpu_custom_call.1} parent=5 // pred_region
        %s682 = ssub.s32 %s10, 1
        %s683 = sand.u32 %s37, 1
        %s684 = sand.u32 %s37, 1
        %s685 = smul.addr %s684, 4096
        %s686 = scalar_lea.vmem [#allocation2], %s685
        // Predicated region
        $region59: #{tpu_custom_call.1} parent=57 // pred_check
          %p687 = pneg %p50
        $region60: #{tpu_custom_call.1} parent=57 // pred_check_branch
          %689 = sbr.rel (%p687) target = $region62
        $region61: #{tpu_custom_call.1} parent=57 // pred_region
          _
        $region62: #{tpu_custom_call.1} parent=57 // pred_fallthru
          _
        %s690 = sand.u32 %s37, 1
        %s691 = sand.u32 %s37, 1
        %s692 = smul.addr %s691, 4096
        %s693 = scalar_lea.vmem [#allocation2], %s692
        %p694 = pneg %p50
        %p695 = pneg %p47
        %p696 = pneg %p78
        %p697 = pneg %p75
        %s698 = sand.u32 %s65, 1
        %s699 = scalar_lea.sflag [#allocation4], %s698
        %s700 = sand.u32 %s65, 1
        %s701 = smul.addr %s700, 448
        %s702 = scalar_lea.vmem [#allocation3], %s701
        %s703 = smul.u32 4, %s20
        %s704 = smul.u32 4, %s19
        %s705 = ssub.s32 17, %s703
        %p706 = scmp.lt.s32.totalorder %s705, 4
        %s707 = scalar_select %p706, %s705, 4
        %s708 = smul.u32 128, %s707
        %s709 = smul.u32 %s708, 16
        %s710 = smul.u32 %s709, 4
        %s711 = smul.u32 %s710, 2
        %s712 = smul.u32 4, %s19
        %s713 = smul.u32 7, %s20
        %v714 = vld [vmem:[%s686] sm:$0xff]
        %v715 = vld [vmem:[%s686 + $0x8] sm:$0x3f]
        %v716 = vld [vmem:[%s686 + $0x10] sm:$0xff]
        %v717 = vld [vmem:[%s686 + $0x18] sm:$0x3f]
        %v718 = vld [vmem:[%s686 + $0x20] sm:$0xff]
        %v719 = vld [vmem:[%s686 + $0x28] sm:$0x3f]
        %v720 = vld [vmem:[%s686 + $0x30] sm:$0xff]
        %v721 = vld [vmem:[%s686 + $0x38] sm:$0x3f]
        %vm722 = vcmask 113664
        %723 = vst.msk [vmem:[%s702] sm:$0xff] %vm722, %v714
        %vm724 = vcmask 111616
        %725 = vst.msk [vmem:[%s702 + $0x10] sm:$0x3f] %vm724, %v715
        %726 = vst.msk [vmem:[%s702 + $0x70] sm:$0xff] %vm722, %v716
        %727 = vst.msk [vmem:[%s702 + $0x80] sm:$0x3f] %vm724, %v717
        %728 = vst.msk [vmem:[%s702 + $0xe0] sm:$0xff] %vm722, %v718
        %729 = vst.msk [vmem:[%s702 + $0xf0] sm:$0x3f] %vm724, %v719
        %730 = vst.msk [vmem:[%s702 + $0x150] sm:$0xff] %vm722, %v720
        %731 = vst.msk [vmem:[%s702 + $0x160] sm:$0x3f] %vm724, %v721
        %s732 = scalar_lea.vmem %s686, 64 [#allocation2]
        %v733 = vld [vmem:[%s732] sm:$0xff]
        %v734 = vld [vmem:[%s732 + $0x8] sm:$0x3f]
        %v735 = vld [vmem:[%s732 + $0x10] sm:$0xff]
        %v736 = vld [vmem:[%s732 + $0x18] sm:$0x3f]
        %v737 = vld [vmem:[%s732 + $0x20] sm:$0xff]
        %v738 = vld [vmem:[%s732 + $0x28] sm:$0x3f]
        %v739 = vld [vmem:[%s732 + $0x30] sm:$0xff]
        %v740 = vld [vmem:[%s732 + $0x38] sm:$0x3f]
        %749 = vrot.lane.b32.xlu0 %v733, 14
        %v750 = vpop.permute.xlu0 %749
        %751 = vrot.lane.b32.xlu0 %v734, 14
        %v752 = vpop.permute.xlu0 %751
        %753 = vrot.lane.b32.xlu0 %v735, 14
        %v754 = vpop.permute.xlu0 %753
        %755 = vrot.lane.b32.xlu0 %v736, 14
        %v756 = vpop.permute.xlu0 %755
        %757 = vrot.lane.b32.xlu0 %v737, 14
        %v758 = vpop.permute.xlu0 %757
        %759 = vrot.lane.b32.xlu0 %v738, 14
        %v760 = vpop.permute.xlu0 %759
        %761 = vrot.lane.b32.xlu0 %v739, 14
        %v762 = vpop.permute.xlu0 %761
        %763 = vrot.lane.b32.xlu0 %v740, 14
        %v764 = vpop.permute.xlu0 %763
        %vm773 = vcmask 228464
        %774 = vst.msk [vmem:[%s702] sm:$0xff] %vm773, %v750
        %vm775 = vcmask 226416
        %776 = vst.msk [vmem:[%s702 + $0x10] sm:$0x3f] %vm775, %v752
        %777 = vst.msk [vmem:[%s702 + $0x70] sm:$0xff] %vm773, %v754
        %778 = vst.msk [vmem:[%s702 + $0x80] sm:$0x3f] %vm775, %v756
        %779 = vst.msk [vmem:[%s702 + $0xe0] sm:$0xff] %vm773, %v758
        %780 = vst.msk [vmem:[%s702 + $0xf0] sm:$0x3f] %vm775, %v760
        %781 = vst.msk [vmem:[%s702 + $0x150] sm:$0xff] %vm773, %v762
        %782 = vst.msk [vmem:[%s702 + $0x160] sm:$0x3f] %vm775, %v764
        %s783 = scalar_lea.vmem %s686, 128 [#allocation2]
        %v784 = vld [vmem:[%s783] sm:$0xff]
        %v785 = vld [vmem:[%s783 + $0x8] sm:$0x3f]
        %v786 = vld [vmem:[%s783 + $0x10] sm:$0xff]
        %v787 = vld [vmem:[%s783 + $0x18] sm:$0x3f]
        %v788 = vld [vmem:[%s783 + $0x20] sm:$0xff]
        %v789 = vld [vmem:[%s783 + $0x28] sm:$0x3f]
        %v790 = vld [vmem:[%s783 + $0x30] sm:$0xff]
        %v791 = vld [vmem:[%s783 + $0x38] sm:$0x3f]
        %800 = vrot.lane.b32.xlu0 %v784, 28
        %v801 = vpop.permute.xlu0 %800
        %802 = vrot.lane.b32.xlu0 %v785, 28
        %v803 = vpop.permute.xlu0 %802
        %804 = vrot.lane.b32.xlu0 %v786, 28
        %v805 = vpop.permute.xlu0 %804
        %806 = vrot.lane.b32.xlu0 %v787, 28
        %v807 = vpop.permute.xlu0 %806
        %808 = vrot.lane.b32.xlu0 %v788, 28
        %v809 = vpop.permute.xlu0 %808
        %810 = vrot.lane.b32.xlu0 %v789, 28
        %v811 = vpop.permute.xlu0 %810
        %812 = vrot.lane.b32.xlu0 %v790, 28
        %v813 = vpop.permute.xlu0 %812
        %814 = vrot.lane.b32.xlu0 %v791, 28
        %v815 = vpop.permute.xlu0 %814
        %vm824 = vcmask 343264
        %825 = vst.msk [vmem:[%s702] sm:$0xff] %vm824, %v801
        %vm826 = vcmask 341216
        %827 = vst.msk [vmem:[%s702 + $0x10] sm:$0x3f] %vm826, %v803
        %828 = vst.msk [vmem:[%s702 + $0x70] sm:$0xff] %vm824, %v805
        %829 = vst.msk [vmem:[%s702 + $0x80] sm:$0x3f] %vm826, %v807
        %830 = vst.msk [vmem:[%s702 + $0xe0] sm:$0xff] %vm824, %v809
        %831 = vst.msk [vmem:[%s702 + $0xf0] sm:$0x3f] %vm826, %v811
        %832 = vst.msk [vmem:[%s702 + $0x150] sm:$0xff] %vm824, %v813
        %833 = vst.msk [vmem:[%s702 + $0x160] sm:$0x3f] %vm826, %v815
        %s834 = scalar_lea.vmem %s686, 192 [#allocation2]
        %v835 = vld [vmem:[%s834] sm:$0xff]
        %v836 = vld [vmem:[%s834 + $0x8] sm:$0x3f]
        %v837 = vld [vmem:[%s834 + $0x10] sm:$0xff]
        %v838 = vld [vmem:[%s834 + $0x18] sm:$0x3f]
        %v839 = vld [vmem:[%s834 + $0x20] sm:$0xff]
        %v840 = vld [vmem:[%s834 + $0x28] sm:$0x3f]
        %v841 = vld [vmem:[%s834 + $0x30] sm:$0xff]
        %v842 = vld [vmem:[%s834 + $0x38] sm:$0x3f]
        %851 = vrot.lane.b32.xlu0 %v835, 42
        %v852 = vpop.permute.xlu0 %851
        %853 = vrot.lane.b32.xlu0 %v836, 42
        %v854 = vpop.permute.xlu0 %853
        %855 = vrot.lane.b32.xlu0 %v837, 42
        %v856 = vpop.permute.xlu0 %855
        %857 = vrot.lane.b32.xlu0 %v838, 42
        %v858 = vpop.permute.xlu0 %857
        %859 = vrot.lane.b32.xlu0 %v839, 42
        %v860 = vpop.permute.xlu0 %859
        %861 = vrot.lane.b32.xlu0 %v840, 42
        %v862 = vpop.permute.xlu0 %861
        %863 = vrot.lane.b32.xlu0 %v841, 42
        %v864 = vpop.permute.xlu0 %863
        %865 = vrot.lane.b32.xlu0 %v842, 42
        %v866 = vpop.permute.xlu0 %865
        %vm875 = vcmask 458064
        %876 = vst.msk [vmem:[%s702] sm:$0xff] %vm875, %v852
        %vm877 = vcmask 456016
        %878 = vst.msk [vmem:[%s702 + $0x10] sm:$0x3f] %vm877, %v854
        %879 = vst.msk [vmem:[%s702 + $0x70] sm:$0xff] %vm875, %v856
        %880 = vst.msk [vmem:[%s702 + $0x80] sm:$0x3f] %vm877, %v858
        %881 = vst.msk [vmem:[%s702 + $0xe0] sm:$0xff] %vm875, %v860
        %882 = vst.msk [vmem:[%s702 + $0xf0] sm:$0x3f] %vm877, %v862
        %883 = vst.msk [vmem:[%s702 + $0x150] sm:$0xff] %vm875, %v864
        %884 = vst.msk [vmem:[%s702 + $0x160] sm:$0x3f] %vm877, %v866
        %s885 = scalar_lea.vmem %s686, 256 [#allocation2]
        %v886 = vld [vmem:[%s885] sm:$0xff]
        %v887 = vld [vmem:[%s885 + $0x8] sm:$0x3f]
        %v888 = vld [vmem:[%s885 + $0x10] sm:$0xff]
        %v889 = vld [vmem:[%s885 + $0x18] sm:$0x3f]
        %v890 = vld [vmem:[%s885 + $0x20] sm:$0xff]
        %v891 = vld [vmem:[%s885 + $0x28] sm:$0x3f]
        %v892 = vld [vmem:[%s885 + $0x30] sm:$0xff]
        %v893 = vld [vmem:[%s885 + $0x38] sm:$0x3f]
        %902 = vrot.lane.b32.xlu0 %v886, 56
        %v903 = vpop.permute.xlu0 %902
        %904 = vrot.lane.b32.xlu0 %v887, 56
        %v905 = vpop.permute.xlu0 %904
        %906 = vrot.lane.b32.xlu0 %v888, 56
        %v907 = vpop.permute.xlu0 %906
        %908 = vrot.lane.b32.xlu0 %v889, 56
        %v909 = vpop.permute.xlu0 %908
        %910 = vrot.lane.b32.xlu0 %v890, 56
        %v911 = vpop.permute.xlu0 %910
        %912 = vrot.lane.b32.xlu0 %v891, 56
        %v913 = vpop.permute.xlu0 %912
        %914 = vrot.lane.b32.xlu0 %v892, 56
        %v915 = vpop.permute.xlu0 %914
        %916 = vrot.lane.b32.xlu0 %v893, 56
        %v917 = vpop.permute.xlu0 %916
        %vm926 = vcmask 572864
        %927 = vst.msk [vmem:[%s702] sm:$0xff] %vm926, %v903
        %vm928 = vcmask 570816
        %929 = vst.msk [vmem:[%s702 + $0x10] sm:$0x3f] %vm928, %v905
        %930 = vst.msk [vmem:[%s702 + $0x70] sm:$0xff] %vm926, %v907
        %931 = vst.msk [vmem:[%s702 + $0x80] sm:$0x3f] %vm928, %v909
        %932 = vst.msk [vmem:[%s702 + $0xe0] sm:$0xff] %vm926, %v911
        %933 = vst.msk [vmem:[%s702 + $0xf0] sm:$0x3f] %vm928, %v913
        %934 = vst.msk [vmem:[%s702 + $0x150] sm:$0xff] %vm926, %v915
        %935 = vst.msk [vmem:[%s702 + $0x160] sm:$0x3f] %vm928, %v917
        %s936 = scalar_lea.vmem %s686, 320 [#allocation2]
        %v937 = vld [vmem:[%s936] sm:$0xff]
        %v938 = vld [vmem:[%s936 + $0x8] sm:$0x3f]
        %v939 = vld [vmem:[%s936 + $0x10] sm:$0xff]
        %v940 = vld [vmem:[%s936 + $0x18] sm:$0x3f]
        %v941 = vld [vmem:[%s936 + $0x20] sm:$0xff]
        %v942 = vld [vmem:[%s936 + $0x28] sm:$0x3f]
        %v943 = vld [vmem:[%s936 + $0x30] sm:$0xff]
        %v944 = vld [vmem:[%s936 + $0x38] sm:$0x3f]
        %953 = vrot.lane.b32.xlu0 %v937, 70
        %v954 = vpop.permute.xlu0 %953
        %955 = vrot.lane.b32.xlu0 %v938, 70
        %v956 = vpop.permute.xlu0 %955
        %957 = vrot.lane.b32.xlu0 %v939, 70
        %v958 = vpop.permute.xlu0 %957
        %959 = vrot.lane.b32.xlu0 %v940, 70
        %v960 = vpop.permute.xlu0 %959
        %961 = vrot.lane.b32.xlu0 %v941, 70
        %v962 = vpop.permute.xlu0 %961
        %963 = vrot.lane.b32.xlu0 %v942, 70
        %v964 = vpop.permute.xlu0 %963
        %965 = vrot.lane.b32.xlu0 %v943, 70
        %v966 = vpop.permute.xlu0 %965
        %967 = vrot.lane.b32.xlu0 %v944, 70
        %v968 = vpop.permute.xlu0 %967
        %vm977 = vcmask 687664
        %978 = vst.msk [vmem:[%s702] sm:$0xff] %vm977, %v954
        %vm979 = vcmask 685616
        %980 = vst.msk [vmem:[%s702 + $0x10] sm:$0x3f] %vm979, %v956
        %981 = vst.msk [vmem:[%s702 + $0x70] sm:$0xff] %vm977, %v958
        %982 = vst.msk [vmem:[%s702 + $0x80] sm:$0x3f] %vm979, %v960
        %983 = vst.msk [vmem:[%s702 + $0xe0] sm:$0xff] %vm977, %v962
        %984 = vst.msk [vmem:[%s702 + $0xf0] sm:$0x3f] %vm979, %v964
        %985 = vst.msk [vmem:[%s702 + $0x150] sm:$0xff] %vm977, %v966
        %986 = vst.msk [vmem:[%s702 + $0x160] sm:$0x3f] %vm979, %v968
        %s987 = scalar_lea.vmem %s686, 384 [#allocation2]
        %v988 = vld [vmem:[%s987] sm:$0xff]
        %v989 = vld [vmem:[%s987 + $0x8] sm:$0x3f]
        %v990 = vld [vmem:[%s987 + $0x10] sm:$0xff]
        %v991 = vld [vmem:[%s987 + $0x18] sm:$0x3f]
        %v992 = vld [vmem:[%s987 + $0x20] sm:$0xff]
        %v993 = vld [vmem:[%s987 + $0x28] sm:$0x3f]
        %v994 = vld [vmem:[%s987 + $0x30] sm:$0xff]
        %v995 = vld [vmem:[%s987 + $0x38] sm:$0x3f]
        %1004 = vrot.lane.b32.xlu0 %v988, 84
        %v1005 = vpop.permute.xlu0 %1004
        %1006 = vrot.lane.b32.xlu0 %v989, 84
        %v1007 = vpop.permute.xlu0 %1006
        %1008 = vrot.lane.b32.xlu0 %v990, 84
        %v1009 = vpop.permute.xlu0 %1008
        %1010 = vrot.lane.b32.xlu0 %v991, 84
        %v1011 = vpop.permute.xlu0 %1010
        %1012 = vrot.lane.b32.xlu0 %v992, 84
        %v1013 = vpop.permute.xlu0 %1012
        %1014 = vrot.lane.b32.xlu0 %v993, 84
        %v1015 = vpop.permute.xlu0 %1014
        %1016 = vrot.lane.b32.xlu0 %v994, 84
        %v1017 = vpop.permute.xlu0 %1016
        %1018 = vrot.lane.b32.xlu0 %v995, 84
        %v1019 = vpop.permute.xlu0 %1018
        %vm1028 = vcmask 802464
        %1029 = vst.msk [vmem:[%s702] sm:$0xff] %vm1028, %v1005
        %vm1030 = vcmask 800416
        %1031 = vst.msk [vmem:[%s702 + $0x10] sm:$0x3f] %vm1030, %v1007
        %1032 = vst.msk [vmem:[%s702 + $0x70] sm:$0xff] %vm1028, %v1009
        %1033 = vst.msk [vmem:[%s702 + $0x80] sm:$0x3f] %vm1030, %v1011
        %1034 = vst.msk [vmem:[%s702 + $0xe0] sm:$0xff] %vm1028, %v1013
        %1035 = vst.msk [vmem:[%s702 + $0xf0] sm:$0x3f] %vm1030, %v1015
        %1036 = vst.msk [vmem:[%s702 + $0x150] sm:$0xff] %vm1028, %v1017
        %1037 = vst.msk [vmem:[%s702 + $0x160] sm:$0x3f] %vm1030, %v1019
        %s1038 = scalar_lea.vmem %s686, 448 [#allocation2]
        %v1039 = vld [vmem:[%s1038] sm:$0xff]
        %v1040 = vld [vmem:[%s1038 + $0x8] sm:$0x3f]
        %v1041 = vld [vmem:[%s1038 + $0x10] sm:$0xff]
        %v1042 = vld [vmem:[%s1038 + $0x18] sm:$0x3f]
        %v1043 = vld [vmem:[%s1038 + $0x20] sm:$0xff]
        %v1044 = vld [vmem:[%s1038 + $0x28] sm:$0x3f]
        %v1045 = vld [vmem:[%s1038 + $0x30] sm:$0xff]
        %v1046 = vld [vmem:[%s1038 + $0x38] sm:$0x3f]
        %1055 = vrot.lane.b32.xlu0 %v1039, 98
        %v1056 = vpop.permute.xlu0 %1055
        %1057 = vrot.lane.b32.xlu0 %v1040, 98
        %v1058 = vpop.permute.xlu0 %1057
        %1059 = vrot.lane.b32.xlu0 %v1041, 98
        %v1060 = vpop.permute.xlu0 %1059
        %1061 = vrot.lane.b32.xlu0 %v1042, 98
        %v1062 = vpop.permute.xlu0 %1061
        %1063 = vrot.lane.b32.xlu0 %v1043, 98
        %v1064 = vpop.permute.xlu0 %1063
        %1065 = vrot.lane.b32.xlu0 %v1044, 98
        %v1066 = vpop.permute.xlu0 %1065
        %1067 = vrot.lane.b32.xlu0 %v1045, 98
        %v1068 = vpop.permute.xlu0 %1067
        %1069 = vrot.lane.b32.xlu0 %v1046, 98
        %v1070 = vpop.permute.xlu0 %1069
        %vm1079 = vcmask 917264
        %1080 = vst.msk [vmem:[%s702] sm:$0xff] %vm1079, %v1056
        %vm1081 = vcmask 915216
        %1082 = vst.msk [vmem:[%s702 + $0x10] sm:$0x3f] %vm1081, %v1058
        %1083 = vst.msk [vmem:[%s702 + $0x70] sm:$0xff] %vm1079, %v1060
        %1084 = vst.msk [vmem:[%s702 + $0x80] sm:$0x3f] %vm1081, %v1062
        %1085 = vst.msk [vmem:[%s702 + $0xe0] sm:$0xff] %vm1079, %v1064
        %1086 = vst.msk [vmem:[%s702 + $0xf0] sm:$0x3f] %vm1081, %v1066
        %1087 = vst.msk [vmem:[%s702 + $0x150] sm:$0xff] %vm1079, %v1068
        %1088 = vst.msk [vmem:[%s702 + $0x160] sm:$0x3f] %vm1081, %v1070
        %s1089 = scalar_lea.vmem %s686, 512 [#allocation2]
        %v1090 = vld [vmem:[%s1089] sm:$0xff]
        %v1091 = vld [vmem:[%s1089 + $0x8] sm:$0x3f]
        %v1092 = vld [vmem:[%s1089 + $0x10] sm:$0xff]
        %v1093 = vld [vmem:[%s1089 + $0x18] sm:$0x3f]
        %v1094 = vld [vmem:[%s1089 + $0x20] sm:$0xff]
        %v1095 = vld [vmem:[%s1089 + $0x28] sm:$0x3f]
        %v1096 = vld [vmem:[%s1089 + $0x30] sm:$0xff]
        %v1097 = vld [vmem:[%s1089 + $0x38] sm:$0x3f]
        %1106 = vrot.lane.b32.xlu0 %v1090, 112
        %v1107 = vpop.permute.xlu0 %1106
        %1108 = vrot.lane.b32.xlu0 %v1091, 112
        %v1109 = vpop.permute.xlu0 %1108
        %1110 = vrot.lane.b32.xlu0 %v1092, 112
        %v1111 = vpop.permute.xlu0 %1110
        %1112 = vrot.lane.b32.xlu0 %v1093, 112
        %v1113 = vpop.permute.xlu0 %1112
        %1114 = vrot.lane.b32.xlu0 %v1094, 112
        %v1115 = vpop.permute.xlu0 %1114
        %1116 = vrot.lane.b32.xlu0 %v1095, 112
        %v1117 = vpop.permute.xlu0 %1116
        %1118 = vrot.lane.b32.xlu0 %v1096, 112
        %v1119 = vpop.permute.xlu0 %1118
        %1120 = vrot.lane.b32.xlu0 %v1097, 112
        %v1121 = vpop.permute.xlu0 %1120
        %vm1130 = vcmask 1032064
        %1131 = vst.msk [vmem:[%s702] sm:$0xff] %vm1130, %v1107
        %vm1132 = vcmask 1030016
        %1133 = vst.msk [vmem:[%s702 + $0x10] sm:$0x3f] %vm1132, %v1109
        %1134 = vst.msk [vmem:[%s702 + $0x70] sm:$0xff] %vm1130, %v1111
        %1135 = vst.msk [vmem:[%s702 + $0x80] sm:$0x3f] %vm1132, %v1113
        %1136 = vst.msk [vmem:[%s702 + $0xe0] sm:$0xff] %vm1130, %v1115
        %1137 = vst.msk [vmem:[%s702 + $0xf0] sm:$0x3f] %vm1132, %v1117
        %1138 = vst.msk [vmem:[%s702 + $0x150] sm:$0xff] %vm1130, %v1119
        %1139 = vst.msk [vmem:[%s702 + $0x160] sm:$0x3f] %vm1132, %v1121
        %s1140 = scalar_lea.vmem %s686, 576 [#allocation2]
        %v1141 = vld [vmem:[%s1140] sm:$0xff]
        %v1142 = vld [vmem:[%s1140 + $0x8] sm:$0x3f]
        %v1143 = vld [vmem:[%s1140 + $0x10] sm:$0xff]
        %v1144 = vld [vmem:[%s1140 + $0x18] sm:$0x3f]
        %v1145 = vld [vmem:[%s1140 + $0x20] sm:$0xff]
        %v1146 = vld [vmem:[%s1140 + $0x28] sm:$0x3f]
        %v1147 = vld [vmem:[%s1140 + $0x30] sm:$0xff]
        %v1148 = vld [vmem:[%s1140 + $0x38] sm:$0x3f]
        %1157 = vrot.lane.b32.xlu0 %v1141, 126
        %v1158 = vpop.permute.xlu0 %1157
        %1159 = vrot.lane.b32.xlu0 %v1142, 126
        %v1160 = vpop.permute.xlu0 %1159
        %1161 = vrot.lane.b32.xlu0 %v1143, 126
        %v1162 = vpop.permute.xlu0 %1161
        %1163 = vrot.lane.b32.xlu0 %v1144, 126
        %v1164 = vpop.permute.xlu0 %1163
        %1165 = vrot.lane.b32.xlu0 %v1145, 126
        %v1166 = vpop.permute.xlu0 %1165
        %1167 = vrot.lane.b32.xlu0 %v1146, 126
        %v1168 = vpop.permute.xlu0 %1167
        %1169 = vrot.lane.b32.xlu0 %v1147, 126
        %v1170 = vpop.permute.xlu0 %1169
        %1171 = vrot.lane.b32.xlu0 %v1148, 126
        %v1172 = vpop.permute.xlu0 %1171
        %vm1181 = vcmask 1048560
        %1182 = vst.msk [vmem:[%s702] sm:$0xff] %vm1181, %v1158
        %vm1183 = vcmask 97280
        %1184 = vst.msk [vmem:[%s702 + $0x8] sm:$0xff] %vm1183, %v1158
        %vm1185 = vcmask 1046512
        %1186 = vst.msk [vmem:[%s702 + $0x10] sm:$0x3f] %vm1185, %v1160
        %vm1187 = vcmask 95232
        %1188 = vst.msk [vmem:[%s702 + $0x18] sm:$0x3f] %vm1187, %v1160
        %1189 = vst.msk [vmem:[%s702 + $0x70] sm:$0xff] %vm1181, %v1162
        %1190 = vst.msk [vmem:[%s702 + $0x78] sm:$0xff] %vm1183, %v1162
        %1191 = vst.msk [vmem:[%s702 + $0x80] sm:$0x3f] %vm1185, %v1164
        %1192 = vst.msk [vmem:[%s702 + $0x88] sm:$0x3f] %vm1187, %v1164
        %1193 = vst.msk [vmem:[%s702 + $0xe0] sm:$0xff] %vm1181, %v1166
        %1194 = vst.msk [vmem:[%s702 + $0xe8] sm:$0xff] %vm1183, %v1166
        %1195 = vst.msk [vmem:[%s702 + $0xf0] sm:$0x3f] %vm1185, %v1168
        %1196 = vst.msk [vmem:[%s702 + $0xf8] sm:$0x3f] %vm1187, %v1168
        %1197 = vst.msk [vmem:[%s702 + $0x150] sm:$0xff] %vm1181, %v1170
        %1198 = vst.msk [vmem:[%s702 + $0x158] sm:$0xff] %vm1183, %v1170
        %1199 = vst.msk [vmem:[%s702 + $0x160] sm:$0x3f] %vm1185, %v1172
        %1200 = vst.msk [vmem:[%s702 + $0x168] sm:$0x3f] %vm1187, %v1172
        %s1201 = scalar_lea.vmem %s686, 640 [#allocation2]
        %v1202 = vld [vmem:[%s1201] sm:$0xff]
        %v1203 = vld [vmem:[%s1201 + $0x8] sm:$0x3f]
        %v1204 = vld [vmem:[%s1201 + $0x10] sm:$0xff]
        %v1205 = vld [vmem:[%s1201 + $0x18] sm:$0x3f]
        %v1206 = vld [vmem:[%s1201 + $0x20] sm:$0xff]
        %v1207 = vld [vmem:[%s1201 + $0x28] sm:$0x3f]
        %v1208 = vld [vmem:[%s1201 + $0x30] sm:$0xff]
        %v1209 = vld [vmem:[%s1201 + $0x38] sm:$0x3f]
        %1218 = vrot.lane.b32.xlu0 %v1202, 12
        %v1219 = vpop.permute.xlu0 %1218
        %1220 = vrot.lane.b32.xlu0 %v1203, 12
        %v1221 = vpop.permute.xlu0 %1220
        %1222 = vrot.lane.b32.xlu0 %v1204, 12
        %v1223 = vpop.permute.xlu0 %1222
        %1224 = vrot.lane.b32.xlu0 %v1205, 12
        %v1225 = vpop.permute.xlu0 %1224
        %1226 = vrot.lane.b32.xlu0 %v1206, 12
        %v1227 = vpop.permute.xlu0 %1226
        %1228 = vrot.lane.b32.xlu0 %v1207, 12
        %v1229 = vpop.permute.xlu0 %1228
        %1230 = vrot.lane.b32.xlu0 %v1208, 12
        %v1231 = vpop.permute.xlu0 %1230
        %1232 = vrot.lane.b32.xlu0 %v1209, 12
        %v1233 = vpop.permute.xlu0 %1232
        %vm1242 = vcmask 212064
        %1243 = vst.msk [vmem:[%s702 + $0x8] sm:$0xff] %vm1242, %v1219
        %vm1244 = vcmask 210016
        %1245 = vst.msk [vmem:[%s702 + $0x18] sm:$0x3f] %vm1244, %v1221
        %1246 = vst.msk [vmem:[%s702 + $0x78] sm:$0xff] %vm1242, %v1223
        %1247 = vst.msk [vmem:[%s702 + $0x88] sm:$0x3f] %vm1244, %v1225
        %1248 = vst.msk [vmem:[%s702 + $0xe8] sm:$0xff] %vm1242, %v1227
        %1249 = vst.msk [vmem:[%s702 + $0xf8] sm:$0x3f] %vm1244, %v1229
        %1250 = vst.msk [vmem:[%s702 + $0x158] sm:$0xff] %vm1242, %v1231
        %1251 = vst.msk [vmem:[%s702 + $0x168] sm:$0x3f] %vm1244, %v1233
        %s1252 = scalar_lea.vmem %s686, 704 [#allocation2]
        %v1253 = vld [vmem:[%s1252] sm:$0xff]
        %v1254 = vld [vmem:[%s1252 + $0x8] sm:$0x3f]
        %v1255 = vld [vmem:[%s1252 + $0x10] sm:$0xff]
        %v1256 = vld [vmem:[%s1252 + $0x18] sm:$0x3f]
        %v1257 = vld [vmem:[%s1252 + $0x20] sm:$0xff]
        %v1258 = vld [vmem:[%s1252 + $0x28] sm:$0x3f]
        %v1259 = vld [vmem:[%s1252 + $0x30] sm:$0xff]
        %v1260 = vld [vmem:[%s1252 + $0x38] sm:$0x3f]
        %1269 = vrot.lane.b32.xlu0 %v1253, 26
        %v1270 = vpop.permute.xlu0 %1269
        %1271 = vrot.lane.b32.xlu0 %v1254, 26
        %v1272 = vpop.permute.xlu0 %1271
        %1273 = vrot.lane.b32.xlu0 %v1255, 26
        %v1274 = vpop.permute.xlu0 %1273
        %1275 = vrot.lane.b32.xlu0 %v1256, 26
        %v1276 = vpop.permute.xlu0 %1275
        %1277 = vrot.lane.b32.xlu0 %v1257, 26
        %v1278 = vpop.permute.xlu0 %1277
        %1279 = vrot.lane.b32.xlu0 %v1258, 26
        %v1280 = vpop.permute.xlu0 %1279
        %1281 = vrot.lane.b32.xlu0 %v1259, 26
        %v1282 = vpop.permute.xlu0 %1281
        %1283 = vrot.lane.b32.xlu0 %v1260, 26
        %v1284 = vpop.permute.xlu0 %1283
        %vm1293 = vcmask 326864
        %1294 = vst.msk [vmem:[%s702 + $0x8] sm:$0xff] %vm1293, %v1270
        %vm1295 = vcmask 324816
        %1296 = vst.msk [vmem:[%s702 + $0x18] sm:$0x3f] %vm1295, %v1272
        %1297 = vst.msk [vmem:[%s702 + $0x78] sm:$0xff] %vm1293, %v1274
        %1298 = vst.msk [vmem:[%s702 + $0x88] sm:$0x3f] %vm1295, %v1276
        %1299 = vst.msk [vmem:[%s702 + $0xe8] sm:$0xff] %vm1293, %v1278
        %1300 = vst.msk [vmem:[%s702 + $0xf8] sm:$0x3f] %vm1295, %v1280
        %1301 = vst.msk [vmem:[%s702 + $0x158] sm:$0xff] %vm1293, %v1282
        %1302 = vst.msk [vmem:[%s702 + $0x168] sm:$0x3f] %vm1295, %v1284
        %s1303 = scalar_lea.vmem %s686, 768 [#allocation2]
        %v1304 = vld [vmem:[%s1303] sm:$0xff]
        %v1305 = vld [vmem:[%s1303 + $0x8] sm:$0x3f]
        %v1306 = vld [vmem:[%s1303 + $0x10] sm:$0xff]
        %v1307 = vld [vmem:[%s1303 + $0x18] sm:$0x3f]
        %v1308 = vld [vmem:[%s1303 + $0x20] sm:$0xff]
        %v1309 = vld [vmem:[%s1303 + $0x28] sm:$0x3f]
        %v1310 = vld [vmem:[%s1303 + $0x30] sm:$0xff]
        %v1311 = vld [vmem:[%s1303 + $0x38] sm:$0x3f]
        %1320 = vrot.lane.b32.xlu0 %v1304, 40
        %v1321 = vpop.permute.xlu0 %1320
        %1322 = vrot.lane.b32.xlu0 %v1305, 40
        %v1323 = vpop.permute.xlu0 %1322
        %1324 = vrot.lane.b32.xlu0 %v1306, 40
        %v1325 = vpop.permute.xlu0 %1324
        %1326 = vrot.lane.b32.xlu0 %v1307, 40
        %v1327 = vpop.permute.xlu0 %1326
        %1328 = vrot.lane.b32.xlu0 %v1308, 40
        %v1329 = vpop.permute.xlu0 %1328
        %1330 = vrot.lane.b32.xlu0 %v1309, 40
        %v1331 = vpop.permute.xlu0 %1330
        %1332 = vrot.lane.b32.xlu0 %v1310, 40
        %v1333 = vpop.permute.xlu0 %1332
        %1334 = vrot.lane.b32.xlu0 %v1311, 40
        %v1335 = vpop.permute.xlu0 %1334
        %vm1344 = vcmask 441664
        %1345 = vst.msk [vmem:[%s702 + $0x8] sm:$0xff] %vm1344, %v1321
        %vm1346 = vcmask 439616
        %1347 = vst.msk [vmem:[%s702 + $0x18] sm:$0x3f] %vm1346, %v1323
        %1348 = vst.msk [vmem:[%s702 + $0x78] sm:$0xff] %vm1344, %v1325
        %1349 = vst.msk [vmem:[%s702 + $0x88] sm:$0x3f] %vm1346, %v1327
        %1350 = vst.msk [vmem:[%s702 + $0xe8] sm:$0xff] %vm1344, %v1329
        %1351 = vst.msk [vmem:[%s702 + $0xf8] sm:$0x3f] %vm1346, %v1331
        %1352 = vst.msk [vmem:[%s702 + $0x158] sm:$0xff] %vm1344, %v1333
        %1353 = vst.msk [vmem:[%s702 + $0x168] sm:$0x3f] %vm1346, %v1335
        %s1354 = scalar_lea.vmem %s686, 832 [#allocation2]
        %v1355 = vld [vmem:[%s1354] sm:$0xff]
        %v1356 = vld [vmem:[%s1354 + $0x8] sm:$0x3f]
        %v1357 = vld [vmem:[%s1354 + $0x10] sm:$0xff]
        %v1358 = vld [vmem:[%s1354 + $0x18] sm:$0x3f]
        %v1359 = vld [vmem:[%s1354 + $0x20] sm:$0xff]
        %v1360 = vld [vmem:[%s1354 + $0x28] sm:$0x3f]
        %v1361 = vld [vmem:[%s1354 + $0x30] sm:$0xff]
        %v1362 = vld [vmem:[%s1354 + $0x38] sm:$0x3f]
        %1371 = vrot.lane.b32.xlu0 %v1355, 54
        %v1372 = vpop.permute.xlu0 %1371
        %1373 = vrot.lane.b32.xlu0 %v1356, 54
        %v1374 = vpop.permute.xlu0 %1373
        %1375 = vrot.lane.b32.xlu0 %v1357, 54
        %v1376 = vpop.permute.xlu0 %1375
        %1377 = vrot.lane.b32.xlu0 %v1358, 54
        %v1378 = vpop.permute.xlu0 %1377
        %1379 = vrot.lane.b32.xlu0 %v1359, 54
        %v1380 = vpop.permute.xlu0 %1379
        %1381 = vrot.lane.b32.xlu0 %v1360, 54
        %v1382 = vpop.permute.xlu0 %1381
        %1383 = vrot.lane.b32.xlu0 %v1361, 54
        %v1384 = vpop.permute.xlu0 %1383
        %1385 = vrot.lane.b32.xlu0 %v1362, 54
        %v1386 = vpop.permute.xlu0 %1385
        %vm1395 = vcmask 556464
        %1396 = vst.msk [vmem:[%s702 + $0x8] sm:$0xff] %vm1395, %v1372
        %vm1397 = vcmask 554416
        %1398 = vst.msk [vmem:[%s702 + $0x18] sm:$0x3f] %vm1397, %v1374
        %1399 = vst.msk [vmem:[%s702 + $0x78] sm:$0xff] %vm1395, %v1376
        %1400 = vst.msk [vmem:[%s702 + $0x88] sm:$0x3f] %vm1397, %v1378
        %1401 = vst.msk [vmem:[%s702 + $0xe8] sm:$0xff] %vm1395, %v1380
        %1402 = vst.msk [vmem:[%s702 + $0xf8] sm:$0x3f] %vm1397, %v1382
        %1403 = vst.msk [vmem:[%s702 + $0x158] sm:$0xff] %vm1395, %v1384
        %1404 = vst.msk [vmem:[%s702 + $0x168] sm:$0x3f] %vm1397, %v1386
        %s1405 = scalar_lea.vmem %s686, 896 [#allocation2]
        %v1406 = vld [vmem:[%s1405] sm:$0xff]
        %v1407 = vld [vmem:[%s1405 + $0x8] sm:$0x3f]
        %v1408 = vld [vmem:[%s1405 + $0x10] sm:$0xff]
        %v1409 = vld [vmem:[%s1405 + $0x18] sm:$0x3f]
        %v1410 = vld [vmem:[%s1405 + $0x20] sm:$0xff]
        %v1411 = vld [vmem:[%s1405 + $0x28] sm:$0x3f]
        %v1412 = vld [vmem:[%s1405 + $0x30] sm:$0xff]
        %v1413 = vld [vmem:[%s1405 + $0x38] sm:$0x3f]
        %1422 = vrot.lane.b32.xlu0 %v1406, 68
        %v1423 = vpop.permute.xlu0 %1422
        %1424 = vrot.lane.b32.xlu0 %v1407, 68
        %v1425 = vpop.permute.xlu0 %1424
        %1426 = vrot.lane.b32.xlu0 %v1408, 68
        %v1427 = vpop.permute.xlu0 %1426
        %1428 = vrot.lane.b32.xlu0 %v1409, 68
        %v1429 = vpop.permute.xlu0 %1428
        %1430 = vrot.lane.b32.xlu0 %v1410, 68
        %v1431 = vpop.permute.xlu0 %1430
        %1432 = vrot.lane.b32.xlu0 %v1411, 68
        %v1433 = vpop.permute.xlu0 %1432
        %1434 = vrot.lane.b32.xlu0 %v1412, 68
        %v1435 = vpop.permute.xlu0 %1434
        %1436 = vrot.lane.b32.xlu0 %v1413, 68
        %v1437 = vpop.permute.xlu0 %1436
        %vm1446 = vcmask 671264
        %1447 = vst.msk [vmem:[%s702 + $0x8] sm:$0xff] %vm1446, %v1423
        %vm1448 = vcmask 669216
        %1449 = vst.msk [vmem:[%s702 + $0x18] sm:$0x3f] %vm1448, %v1425
        %1450 = vst.msk [vmem:[%s702 + $0x78] sm:$0xff] %vm1446, %v1427
        %1451 = vst.msk [vmem:[%s702 + $0x88] sm:$0x3f] %vm1448, %v1429
        %1452 = vst.msk [vmem:[%s702 + $0xe8] sm:$0xff] %vm1446, %v1431
        %1453 = vst.msk [vmem:[%s702 + $0xf8] sm:$0x3f] %vm1448, %v1433
        %1454 = vst.msk [vmem:[%s702 + $0x158] sm:$0xff] %vm1446, %v1435
        %1455 = vst.msk [vmem:[%s702 + $0x168] sm:$0x3f] %vm1448, %v1437
        %s1456 = scalar_lea.vmem %s686, 960 [#allocation2]
        %v1457 = vld [vmem:[%s1456] sm:$0xff]
        %v1458 = vld [vmem:[%s1456 + $0x8] sm:$0x3f]
        %v1459 = vld [vmem:[%s1456 + $0x10] sm:$0xff]
        %v1460 = vld [vmem:[%s1456 + $0x18] sm:$0x3f]
        %v1461 = vld [vmem:[%s1456 + $0x20] sm:$0xff]
        %v1462 = vld [vmem:[%s1456 + $0x28] sm:$0x3f]
        %v1463 = vld [vmem:[%s1456 + $0x30] sm:$0xff]
        %v1464 = vld [vmem:[%s1456 + $0x38] sm:$0x3f]
        %1473 = vrot.lane.b32.xlu0 %v1457, 82
        %v1474 = vpop.permute.xlu0 %1473
        %1475 = vrot.lane.b32.xlu0 %v1458, 82
        %v1476 = vpop.permute.xlu0 %1475
        %1477 = vrot.lane.b32.xlu0 %v1459, 82
        %v1478 = vpop.permute.xlu0 %1477
        %1479 = vrot.lane.b32.xlu0 %v1460, 82
        %v1480 = vpop.permute.xlu0 %1479
        %1481 = vrot.lane.b32.xlu0 %v1461, 82
        %v1482 = vpop.permute.xlu0 %1481
        %1483 = vrot.lane.b32.xlu0 %v1462, 82
        %v1484 = vpop.permute.xlu0 %1483
        %1485 = vrot.lane.b32.xlu0 %v1463, 82
        %v1486 = vpop.permute.xlu0 %1485
        %1487 = vrot.lane.b32.xlu0 %v1464, 82
        %v1488 = vpop.permute.xlu0 %1487
        %vm1497 = vcmask 786064
        %1498 = vst.msk [vmem:[%s702 + $0x8] sm:$0xff] %vm1497, %v1474
        %vm1499 = vcmask 784016
        %1500 = vst.msk [vmem:[%s702 + $0x18] sm:$0x3f] %vm1499, %v1476
        %1501 = vst.msk [vmem:[%s702 + $0x78] sm:$0xff] %vm1497, %v1478
        %1502 = vst.msk [vmem:[%s702 + $0x88] sm:$0x3f] %vm1499, %v1480
        %1503 = vst.msk [vmem:[%s702 + $0xe8] sm:$0xff] %vm1497, %v1482
        %1504 = vst.msk [vmem:[%s702 + $0xf8] sm:$0x3f] %vm1499, %v1484
        %1505 = vst.msk [vmem:[%s702 + $0x158] sm:$0xff] %vm1497, %v1486
        %1506 = vst.msk [vmem:[%s702 + $0x168] sm:$0x3f] %vm1499, %v1488
        %s1507 = scalar_lea.vmem %s686, 1024 [#allocation2]
        %v1508 = vld [vmem:[%s1507] sm:$0xff]
        %v1509 = vld [vmem:[%s1507 + $0x8] sm:$0x3f]
        %v1510 = vld [vmem:[%s1507 + $0x10] sm:$0xff]
        %v1511 = vld [vmem:[%s1507 + $0x18] sm:$0x3f]
        %v1512 = vld [vmem:[%s1507 + $0x20] sm:$0xff]
        %v1513 = vld [vmem:[%s1507 + $0x28] sm:$0x3f]
        %v1514 = vld [vmem:[%s1507 + $0x30] sm:$0xff]
        %v1515 = vld [vmem:[%s1507 + $0x38] sm:$0x3f]
        %vm1524 = vcmask 1045504
        %v1525 = vrot.slane %v1508, 2
        %v1526 = vrot.slane %v1509, 2
        %v1527 = vsel %vm1524, %v1525, %v1526
        %v1528 = vrot.slane %v1510, 2
        %v1529 = vrot.slane %v1511, 2
        %v1530 = vsel %vm1524, %v1528, %v1529
        %v1531 = vrot.slane %v1512, 2
        %v1532 = vrot.slane %v1513, 2
        %v1533 = vsel %vm1524, %v1531, %v1532
        %v1534 = vrot.slane %v1514, 2
        %v1535 = vrot.slane %v1515, 2
        %v1536 = vsel %vm1524, %v1534, %v1535
        %vm1549 = vcmask 113670
        %1550 = vst.msk [vmem:[%s702 + $0x10] sm:$0xc0] %vm1549, %v1525
        %1551 = vst.msk [vmem:[%s702 + $0x20] sm:$0xff] %vm722, %v1527
        %vm1552 = vcmask 109568
        %1553 = vst.msk [vmem:[%s702 + $0x30] sm:$0xf] %vm1552, %v1526
        %1554 = vst.msk [vmem:[%s702 + $0x80] sm:$0xc0] %vm1549, %v1528
        %1555 = vst.msk [vmem:[%s702 + $0x90] sm:$0xff] %vm722, %v1530
        %1556 = vst.msk [vmem:[%s702 + $0xa0] sm:$0xf] %vm1552, %v1529
        %1557 = vst.msk [vmem:[%s702 + $0xf0] sm:$0xc0] %vm1549, %v1531
        %1558 = vst.msk [vmem:[%s702 + $0x100] sm:$0xff] %vm722, %v1533
        %1559 = vst.msk [vmem:[%s702 + $0x110] sm:$0xf] %vm1552, %v1532
        %1560 = vst.msk [vmem:[%s702 + $0x160] sm:$0xc0] %vm1549, %v1534
        %1561 = vst.msk [vmem:[%s702 + $0x170] sm:$0xff] %vm722, %v1536
        %1562 = vst.msk [vmem:[%s702 + $0x180] sm:$0xf] %vm1552, %v1535
        %s1563 = scalar_lea.vmem %s686, 1088 [#allocation2]
        %v1564 = vld [vmem:[%s1563] sm:$0xff]
        %v1565 = vld [vmem:[%s1563 + $0x8] sm:$0x3f]
        %v1566 = vld [vmem:[%s1563 + $0x10] sm:$0xff]
        %v1567 = vld [vmem:[%s1563 + $0x18] sm:$0x3f]
        %v1568 = vld [vmem:[%s1563 + $0x20] sm:$0xff]
        %v1569 = vld [vmem:[%s1563 + $0x28] sm:$0x3f]
        %v1570 = vld [vmem:[%s1563 + $0x30] sm:$0xff]
        %v1571 = vld [vmem:[%s1563 + $0x38] sm:$0x3f]
        %v1580 = vrot.slane %v1564, 2
        %v1581 = vrot.slane %v1565, 2
        %v1582 = vsel %vm1524, %v1580, %v1581
        %v1583 = vrot.slane %v1566, 2
        %v1584 = vrot.slane %v1567, 2
        %v1585 = vsel %vm1524, %v1583, %v1584
        %v1586 = vrot.slane %v1568, 2
        %v1587 = vrot.slane %v1569, 2
        %v1588 = vsel %vm1524, %v1586, %v1587
        %v1589 = vrot.slane %v1570, 2
        %v1590 = vrot.slane %v1571, 2
        %v1591 = vsel %vm1524, %v1589, %v1590
        %1592 = vrot.lane.b32.xlu0 %v1580, 14
        %v1593 = vpop.permute.xlu0 %1592
        %1594 = vrot.lane.b32.xlu0 %v1582, 14
        %v1595 = vpop.permute.xlu0 %1594
        %1596 = vrot.lane.b32.xlu0 %v1581, 14
        %v1597 = vpop.permute.xlu0 %1596
        %1598 = vrot.lane.b32.xlu0 %v1583, 14
        %v1599 = vpop.permute.xlu0 %1598
        %1600 = vrot.lane.b32.xlu0 %v1585, 14
        %v1601 = vpop.permute.xlu0 %1600
        %1602 = vrot.lane.b32.xlu0 %v1584, 14
        %v1603 = vpop.permute.xlu0 %1602
        %1604 = vrot.lane.b32.xlu0 %v1586, 14
        %v1605 = vpop.permute.xlu0 %1604
        %1606 = vrot.lane.b32.xlu0 %v1588, 14
        %v1607 = vpop.permute.xlu0 %1606
        %1608 = vrot.lane.b32.xlu0 %v1587, 14
        %v1609 = vpop.permute.xlu0 %1608
        %1610 = vrot.lane.b32.xlu0 %v1589, 14
        %v1611 = vpop.permute.xlu0 %1610
        %1612 = vrot.lane.b32.xlu0 %v1591, 14
        %v1613 = vpop.permute.xlu0 %1612
        %1614 = vrot.lane.b32.xlu0 %v1590, 14
        %v1615 = vpop.permute.xlu0 %1614
        %vm1628 = vcmask 228470
        %1629 = vst.msk [vmem:[%s702 + $0x10] sm:$0xc0] %vm1628, %v1593
        %1630 = vst.msk [vmem:[%s702 + $0x20] sm:$0xff] %vm773, %v1595
        %vm1631 = vcmask 224368
        %1632 = vst.msk [vmem:[%s702 + $0x30] sm:$0xf] %vm1631, %v1597
        %1633 = vst.msk [vmem:[%s702 + $0x80] sm:$0xc0] %vm1628, %v1599
        %1634 = vst.msk [vmem:[%s702 + $0x90] sm:$0xff] %vm773, %v1601
        %1635 = vst.msk [vmem:[%s702 + $0xa0] sm:$0xf] %vm1631, %v1603
        %1636 = vst.msk [vmem:[%s702 + $0xf0] sm:$0xc0] %vm1628, %v1605
        %1637 = vst.msk [vmem:[%s702 + $0x100] sm:$0xff] %vm773, %v1607
        %1638 = vst.msk [vmem:[%s702 + $0x110] sm:$0xf] %vm1631, %v1609
        %1639 = vst.msk [vmem:[%s702 + $0x160] sm:$0xc0] %vm1628, %v1611
        %1640 = vst.msk [vmem:[%s702 + $0x170] sm:$0xff] %vm773, %v1613
        %1641 = vst.msk [vmem:[%s702 + $0x180] sm:$0xf] %vm1631, %v1615
        %s1642 = scalar_lea.vmem %s686, 1152 [#allocation2]
        %v1643 = vld [vmem:[%s1642] sm:$0xff]
        %v1644 = vld [vmem:[%s1642 + $0x8] sm:$0x3f]
        %v1645 = vld [vmem:[%s1642 + $0x10] sm:$0xff]
        %v1646 = vld [vmem:[%s1642 + $0x18] sm:$0x3f]
        %v1647 = vld [vmem:[%s1642 + $0x20] sm:$0xff]
        %v1648 = vld [vmem:[%s1642 + $0x28] sm:$0x3f]
        %v1649 = vld [vmem:[%s1642 + $0x30] sm:$0xff]
        %v1650 = vld [vmem:[%s1642 + $0x38] sm:$0x3f]
        %v1659 = vrot.slane %v1643, 2
        %v1660 = vrot.slane %v1644, 2
        %v1661 = vsel %vm1524, %v1659, %v1660
        %v1662 = vrot.slane %v1645, 2
        %v1663 = vrot.slane %v1646, 2
        %v1664 = vsel %vm1524, %v1662, %v1663
        %v1665 = vrot.slane %v1647, 2
        %v1666 = vrot.slane %v1648, 2
        %v1667 = vsel %vm1524, %v1665, %v1666
        %v1668 = vrot.slane %v1649, 2
        %v1669 = vrot.slane %v1650, 2
        %v1670 = vsel %vm1524, %v1668, %v1669
        %1671 = vrot.lane.b32.xlu0 %v1659, 28
        %v1672 = vpop.permute.xlu0 %1671
        %1673 = vrot.lane.b32.xlu0 %v1661, 28
        %v1674 = vpop.permute.xlu0 %1673
        %1675 = vrot.lane.b32.xlu0 %v1660, 28
        %v1676 = vpop.permute.xlu0 %1675
        %1677 = vrot.lane.b32.xlu0 %v1662, 28
        %v1678 = vpop.permute.xlu0 %1677
        %1679 = vrot.lane.b32.xlu0 %v1664, 28
        %v1680 = vpop.permute.xlu0 %1679
        %1681 = vrot.lane.b32.xlu0 %v1663, 28
        %v1682 = vpop.permute.xlu0 %1681
        %1683 = vrot.lane.b32.xlu0 %v1665, 28
        %v1684 = vpop.permute.xlu0 %1683
        %1685 = vrot.lane.b32.xlu0 %v1667, 28
        %v1686 = vpop.permute.xlu0 %1685
        %1687 = vrot.lane.b32.xlu0 %v1666, 28
        %v1688 = vpop.permute.xlu0 %1687
        %1689 = vrot.lane.b32.xlu0 %v1668, 28
        %v1690 = vpop.permute.xlu0 %1689
        %1691 = vrot.lane.b32.xlu0 %v1670, 28
        %v1692 = vpop.permute.xlu0 %1691
        %1693 = vrot.lane.b32.xlu0 %v1669, 28
        %v1694 = vpop.permute.xlu0 %1693
        %vm1707 = vcmask 343270
        %1708 = vst.msk [vmem:[%s702 + $0x10] sm:$0xc0] %vm1707, %v1672
        %1709 = vst.msk [vmem:[%s702 + $0x20] sm:$0xff] %vm824, %v1674
        %vm1710 = vcmask 339168
        %1711 = vst.msk [vmem:[%s702 + $0x30] sm:$0xf] %vm1710, %v1676
        %1712 = vst.msk [vmem:[%s702 + $0x80] sm:$0xc0] %vm1707, %v1678
        %1713 = vst.msk [vmem:[%s702 + $0x90] sm:$0xff] %vm824, %v1680
        %1714 = vst.msk [vmem:[%s702 + $0xa0] sm:$0xf] %vm1710, %v1682
        %1715 = vst.msk [vmem:[%s702 + $0xf0] sm:$0xc0] %vm1707, %v1684
        %1716 = vst.msk [vmem:[%s702 + $0x100] sm:$0xff] %vm824, %v1686
        %1717 = vst.msk [vmem:[%s702 + $0x110] sm:$0xf] %vm1710, %v1688
        %1718 = vst.msk [vmem:[%s702 + $0x160] sm:$0xc0] %vm1707, %v1690
        %1719 = vst.msk [vmem:[%s702 + $0x170] sm:$0xff] %vm824, %v1692
        %1720 = vst.msk [vmem:[%s702 + $0x180] sm:$0xf] %vm1710, %v1694
        %s1721 = scalar_lea.vmem %s686, 1216 [#allocation2]
        %v1722 = vld [vmem:[%s1721] sm:$0xff]
        %v1723 = vld [vmem:[%s1721 + $0x8] sm:$0x3f]
        %v1724 = vld [vmem:[%s1721 + $0x10] sm:$0xff]
        %v1725 = vld [vmem:[%s1721 + $0x18] sm:$0x3f]
        %v1726 = vld [vmem:[%s1721 + $0x20] sm:$0xff]
        %v1727 = vld [vmem:[%s1721 + $0x28] sm:$0x3f]
        %v1728 = vld [vmem:[%s1721 + $0x30] sm:$0xff]
        %v1729 = vld [vmem:[%s1721 + $0x38] sm:$0x3f]
        %v1738 = vrot.slane %v1722, 2
        %v1739 = vrot.slane %v1723, 2
        %v1740 = vsel %vm1524, %v1738, %v1739
        %v1741 = vrot.slane %v1724, 2
        %v1742 = vrot.slane %v1725, 2
        %v1743 = vsel %vm1524, %v1741, %v1742
        %v1744 = vrot.slane %v1726, 2
        %v1745 = vrot.slane %v1727, 2
        %v1746 = vsel %vm1524, %v1744, %v1745
        %v1747 = vrot.slane %v1728, 2
        %v1748 = vrot.slane %v1729, 2
        %v1749 = vsel %vm1524, %v1747, %v1748
        %1750 = vrot.lane.b32.xlu0 %v1738, 42
        %v1751 = vpop.permute.xlu0 %1750
        %1752 = vrot.lane.b32.xlu0 %v1740, 42
        %v1753 = vpop.permute.xlu0 %1752
        %1754 = vrot.lane.b32.xlu0 %v1739, 42
        %v1755 = vpop.permute.xlu0 %1754
        %1756 = vrot.lane.b32.xlu0 %v1741, 42
        %v1757 = vpop.permute.xlu0 %1756
        %1758 = vrot.lane.b32.xlu0 %v1743, 42
        %v1759 = vpop.permute.xlu0 %1758
        %1760 = vrot.lane.b32.xlu0 %v1742, 42
        %v1761 = vpop.permute.xlu0 %1760
        %1762 = vrot.lane.b32.xlu0 %v1744, 42
        %v1763 = vpop.permute.xlu0 %1762
        %1764 = vrot.lane.b32.xlu0 %v1746, 42
        %v1765 = vpop.permute.xlu0 %1764
        %1766 = vrot.lane.b32.xlu0 %v1745, 42
        %v1767 = vpop.permute.xlu0 %1766
        %1768 = vrot.lane.b32.xlu0 %v1747, 42
        %v1769 = vpop.permute.xlu0 %1768
        %1770 = vrot.lane.b32.xlu0 %v1749, 42
        %v1771 = vpop.permute.xlu0 %1770
        %1772 = vrot.lane.b32.xlu0 %v1748, 42
        %v1773 = vpop.permute.xlu0 %1772
        %vm1786 = vcmask 458070
        %1787 = vst.msk [vmem:[%s702 + $0x10] sm:$0xc0] %vm1786, %v1751
        %1788 = vst.msk [vmem:[%s702 + $0x20] sm:$0xff] %vm875, %v1753
        %vm1789 = vcmask 453968
        %1790 = vst.msk [vmem:[%s702 + $0x30] sm:$0xf] %vm1789, %v1755
        %1791 = vst.msk [vmem:[%s702 + $0x80] sm:$0xc0] %vm1786, %v1757
        %1792 = vst.msk [vmem:[%s702 + $0x90] sm:$0xff] %vm875, %v1759
        %1793 = vst.msk [vmem:[%s702 + $0xa0] sm:$0xf] %vm1789, %v1761
        %1794 = vst.msk [vmem:[%s702 + $0xf0] sm:$0xc0] %vm1786, %v1763
        %1795 = vst.msk [vmem:[%s702 + $0x100] sm:$0xff] %vm875, %v1765
        %1796 = vst.msk [vmem:[%s702 + $0x110] sm:$0xf] %vm1789, %v1767
        %1797 = vst.msk [vmem:[%s702 + $0x160] sm:$0xc0] %vm1786, %v1769
        %1798 = vst.msk [vmem:[%s702 + $0x170] sm:$0xff] %vm875, %v1771
        %1799 = vst.msk [vmem:[%s702 + $0x180] sm:$0xf] %vm1789, %v1773
        %s1800 = scalar_lea.vmem %s686, 1280 [#allocation2]
        %v1801 = vld [vmem:[%s1800] sm:$0xff]
        %v1802 = vld [vmem:[%s1800 + $0x8] sm:$0x3f]
        %v1803 = vld [vmem:[%s1800 + $0x10] sm:$0xff]
        %v1804 = vld [vmem:[%s1800 + $0x18] sm:$0x3f]
        %v1805 = vld [vmem:[%s1800 + $0x20] sm:$0xff]
        %v1806 = vld [vmem:[%s1800 + $0x28] sm:$0x3f]
        %v1807 = vld [vmem:[%s1800 + $0x30] sm:$0xff]
        %v1808 = vld [vmem:[%s1800 + $0x38] sm:$0x3f]
        %v1817 = vrot.slane %v1801, 2
        %v1818 = vrot.slane %v1802, 2
        %v1819 = vsel %vm1524, %v1817, %v1818
        %v1820 = vrot.slane %v1803, 2
        %v1821 = vrot.slane %v1804, 2
        %v1822 = vsel %vm1524, %v1820, %v1821
        %v1823 = vrot.slane %v1805, 2
        %v1824 = vrot.slane %v1806, 2
        %v1825 = vsel %vm1524, %v1823, %v1824
        %v1826 = vrot.slane %v1807, 2
        %v1827 = vrot.slane %v1808, 2
        %v1828 = vsel %vm1524, %v1826, %v1827
        %1829 = vrot.lane.b32.xlu0 %v1817, 56
        %v1830 = vpop.permute.xlu0 %1829
        %1831 = vrot.lane.b32.xlu0 %v1819, 56
        %v1832 = vpop.permute.xlu0 %1831
        %1833 = vrot.lane.b32.xlu0 %v1818, 56
        %v1834 = vpop.permute.xlu0 %1833
        %1835 = vrot.lane.b32.xlu0 %v1820, 56
        %v1836 = vpop.permute.xlu0 %1835
        %1837 = vrot.lane.b32.xlu0 %v1822, 56
        %v1838 = vpop.permute.xlu0 %1837
        %1839 = vrot.lane.b32.xlu0 %v1821, 56
        %v1840 = vpop.permute.xlu0 %1839
        %1841 = vrot.lane.b32.xlu0 %v1823, 56
        %v1842 = vpop.permute.xlu0 %1841
        %1843 = vrot.lane.b32.xlu0 %v1825, 56
        %v1844 = vpop.permute.xlu0 %1843
        %1845 = vrot.lane.b32.xlu0 %v1824, 56
        %v1846 = vpop.permute.xlu0 %1845
        %1847 = vrot.lane.b32.xlu0 %v1826, 56
        %v1848 = vpop.permute.xlu0 %1847
        %1849 = vrot.lane.b32.xlu0 %v1828, 56
        %v1850 = vpop.permute.xlu0 %1849
        %1851 = vrot.lane.b32.xlu0 %v1827, 56
        %v1852 = vpop.permute.xlu0 %1851
        %vm1865 = vcmask 572870
        %1866 = vst.msk [vmem:[%s702 + $0x10] sm:$0xc0] %vm1865, %v1830
        %1867 = vst.msk [vmem:[%s702 + $0x20] sm:$0xff] %vm926, %v1832
        %vm1868 = vcmask 568768
        %1869 = vst.msk [vmem:[%s702 + $0x30] sm:$0xf] %vm1868, %v1834
        %1870 = vst.msk [vmem:[%s702 + $0x80] sm:$0xc0] %vm1865, %v1836
        %1871 = vst.msk [vmem:[%s702 + $0x90] sm:$0xff] %vm926, %v1838
        %1872 = vst.msk [vmem:[%s702 + $0xa0] sm:$0xf] %vm1868, %v1840
        %1873 = vst.msk [vmem:[%s702 + $0xf0] sm:$0xc0] %vm1865, %v1842
        %1874 = vst.msk [vmem:[%s702 + $0x100] sm:$0xff] %vm926, %v1844
        %1875 = vst.msk [vmem:[%s702 + $0x110] sm:$0xf] %vm1868, %v1846
        %1876 = vst.msk [vmem:[%s702 + $0x160] sm:$0xc0] %vm1865, %v1848
        %1877 = vst.msk [vmem:[%s702 + $0x170] sm:$0xff] %vm926, %v1850
        %1878 = vst.msk [vmem:[%s702 + $0x180] sm:$0xf] %vm1868, %v1852
        %s1879 = scalar_lea.vmem %s686, 1344 [#allocation2]
        %v1880 = vld [vmem:[%s1879] sm:$0xff]
        %v1881 = vld [vmem:[%s1879 + $0x8] sm:$0x3f]
        %v1882 = vld [vmem:[%s1879 + $0x10] sm:$0xff]
        %v1883 = vld [vmem:[%s1879 + $0x18] sm:$0x3f]
        %v1884 = vld [vmem:[%s1879 + $0x20] sm:$0xff]
        %v1885 = vld [vmem:[%s1879 + $0x28] sm:$0x3f]
        %v1886 = vld [vmem:[%s1879 + $0x30] sm:$0xff]
        %v1887 = vld [vmem:[%s1879 + $0x38] sm:$0x3f]
        %v1896 = vrot.slane %v1880, 2
        %v1897 = vrot.slane %v1881, 2
        %v1898 = vsel %vm1524, %v1896, %v1897
        %v1899 = vrot.slane %v1882, 2
        %v1900 = vrot.slane %v1883, 2
        %v1901 = vsel %vm1524, %v1899, %v1900
        %v1902 = vrot.slane %v1884, 2
        %v1903 = vrot.slane %v1885, 2
        %v1904 = vsel %vm1524, %v1902, %v1903
        %v1905 = vrot.slane %v1886, 2
        %v1906 = vrot.slane %v1887, 2
        %v1907 = vsel %vm1524, %v1905, %v1906
        %1908 = vrot.lane.b32.xlu0 %v1896, 70
        %v1909 = vpop.permute.xlu0 %1908
        %1910 = vrot.lane.b32.xlu0 %v1898, 70
        %v1911 = vpop.permute.xlu0 %1910
        %1912 = vrot.lane.b32.xlu0 %v1897, 70
        %v1913 = vpop.permute.xlu0 %1912
        %1914 = vrot.lane.b32.xlu0 %v1899, 70
        %v1915 = vpop.permute.xlu0 %1914
        %1916 = vrot.lane.b32.xlu0 %v1901, 70
        %v1917 = vpop.permute.xlu0 %1916
        %1918 = vrot.lane.b32.xlu0 %v1900, 70
        %v1919 = vpop.permute.xlu0 %1918
        %1920 = vrot.lane.b32.xlu0 %v1902, 70
        %v1921 = vpop.permute.xlu0 %1920
        %1922 = vrot.lane.b32.xlu0 %v1904, 70
        %v1923 = vpop.permute.xlu0 %1922
        %1924 = vrot.lane.b32.xlu0 %v1903, 70
        %v1925 = vpop.permute.xlu0 %1924
        %1926 = vrot.lane.b32.xlu0 %v1905, 70
        %v1927 = vpop.permute.xlu0 %1926
        %1928 = vrot.lane.b32.xlu0 %v1907, 70
        %v1929 = vpop.permute.xlu0 %1928
        %1930 = vrot.lane.b32.xlu0 %v1906, 70
        %v1931 = vpop.permute.xlu0 %1930
        %vm1944 = vcmask 687670
        %1945 = vst.msk [vmem:[%s702 + $0x10] sm:$0xc0] %vm1944, %v1909
        %1946 = vst.msk [vmem:[%s702 + $0x20] sm:$0xff] %vm977, %v1911
        %vm1947 = vcmask 683568
        %1948 = vst.msk [vmem:[%s702 + $0x30] sm:$0xf] %vm1947, %v1913
        %1949 = vst.msk [vmem:[%s702 + $0x80] sm:$0xc0] %vm1944, %v1915
        %1950 = vst.msk [vmem:[%s702 + $0x90] sm:$0xff] %vm977, %v1917
        %1951 = vst.msk [vmem:[%s702 + $0xa0] sm:$0xf] %vm1947, %v1919
        %1952 = vst.msk [vmem:[%s702 + $0xf0] sm:$0xc0] %vm1944, %v1921
        %1953 = vst.msk [vmem:[%s702 + $0x100] sm:$0xff] %vm977, %v1923
        %1954 = vst.msk [vmem:[%s702 + $0x110] sm:$0xf] %vm1947, %v1925
        %1955 = vst.msk [vmem:[%s702 + $0x160] sm:$0xc0] %vm1944, %v1927
        %1956 = vst.msk [vmem:[%s702 + $0x170] sm:$0xff] %vm977, %v1929
        %1957 = vst.msk [vmem:[%s702 + $0x180] sm:$0xf] %vm1947, %v1931
        %s1958 = scalar_lea.vmem %s686, 1408 [#allocation2]
        %v1959 = vld [vmem:[%s1958] sm:$0xff]
        %v1960 = vld [vmem:[%s1958 + $0x8] sm:$0x3f]
        %v1961 = vld [vmem:[%s1958 + $0x10] sm:$0xff]
        %v1962 = vld [vmem:[%s1958 + $0x18] sm:$0x3f]
        %v1963 = vld [vmem:[%s1958 + $0x20] sm:$0xff]
        %v1964 = vld [vmem:[%s1958 + $0x28] sm:$0x3f]
        %v1965 = vld [vmem:[%s1958 + $0x30] sm:$0xff]
        %v1966 = vld [vmem:[%s1958 + $0x38] sm:$0x3f]
        %v1975 = vrot.slane %v1959, 2
        %v1976 = vrot.slane %v1960, 2
        %v1977 = vsel %vm1524, %v1975, %v1976
        %v1978 = vrot.slane %v1961, 2
        %v1979 = vrot.slane %v1962, 2
        %v1980 = vsel %vm1524, %v1978, %v1979
        %v1981 = vrot.slane %v1963, 2
        %v1982 = vrot.slane %v1964, 2
        %v1983 = vsel %vm1524, %v1981, %v1982
        %v1984 = vrot.slane %v1965, 2
        %v1985 = vrot.slane %v1966, 2
        %v1986 = vsel %vm1524, %v1984, %v1985
        %1987 = vrot.lane.b32.xlu0 %v1975, 84
        %v1988 = vpop.permute.xlu0 %1987
        %1989 = vrot.lane.b32.xlu0 %v1977, 84
        %v1990 = vpop.permute.xlu0 %1989
        %1991 = vrot.lane.b32.xlu0 %v1976, 84
        %v1992 = vpop.permute.xlu0 %1991
        %1993 = vrot.lane.b32.xlu0 %v1978, 84
        %v1994 = vpop.permute.xlu0 %1993
        %1995 = vrot.lane.b32.xlu0 %v1980, 84
        %v1996 = vpop.permute.xlu0 %1995
        %1997 = vrot.lane.b32.xlu0 %v1979, 84
        %v1998 = vpop.permute.xlu0 %1997
        %1999 = vrot.lane.b32.xlu0 %v1981, 84
        %v2000 = vpop.permute.xlu0 %1999
        %2001 = vrot.lane.b32.xlu0 %v1983, 84
        %v2002 = vpop.permute.xlu0 %2001
        %2003 = vrot.lane.b32.xlu0 %v1982, 84
        %v2004 = vpop.permute.xlu0 %2003
        %2005 = vrot.lane.b32.xlu0 %v1984, 84
        %v2006 = vpop.permute.xlu0 %2005
        %2007 = vrot.lane.b32.xlu0 %v1986, 84
        %v2008 = vpop.permute.xlu0 %2007
        %2009 = vrot.lane.b32.xlu0 %v1985, 84
        %v2010 = vpop.permute.xlu0 %2009
        %vm2023 = vcmask 802470
        %2024 = vst.msk [vmem:[%s702 + $0x10] sm:$0xc0] %vm2023, %v1988
        %2025 = vst.msk [vmem:[%s702 + $0x20] sm:$0xff] %vm1028, %v1990
        %vm2026 = vcmask 798368
        %2027 = vst.msk [vmem:[%s702 + $0x30] sm:$0xf] %vm2026, %v1992
        %2028 = vst.msk [vmem:[%s702 + $0x80] sm:$0xc0] %vm2023, %v1994
        %2029 = vst.msk [vmem:[%s702 + $0x90] sm:$0xff] %vm1028, %v1996
        %2030 = vst.msk [vmem:[%s702 + $0xa0] sm:$0xf] %vm2026, %v1998
        %2031 = vst.msk [vmem:[%s702 + $0xf0] sm:$0xc0] %vm2023, %v2000
        %2032 = vst.msk [vmem:[%s702 + $0x100] sm:$0xff] %vm1028, %v2002
        %2033 = vst.msk [vmem:[%s702 + $0x110] sm:$0xf] %vm2026, %v2004
        %2034 = vst.msk [vmem:[%s702 + $0x160] sm:$0xc0] %vm2023, %v2006
        %2035 = vst.msk [vmem:[%s702 + $0x170] sm:$0xff] %vm1028, %v2008
        %2036 = vst.msk [vmem:[%s702 + $0x180] sm:$0xf] %vm2026, %v2010
        %s2037 = scalar_lea.vmem %s686, 1472 [#allocation2]
        %v2038 = vld [vmem:[%s2037] sm:$0xff]
        %v2039 = vld [vmem:[%s2037 + $0x8] sm:$0x3f]
        %v2040 = vld [vmem:[%s2037 + $0x10] sm:$0xff]
        %v2041 = vld [vmem:[%s2037 + $0x18] sm:$0x3f]
        %v2042 = vld [vmem:[%s2037 + $0x20] sm:$0xff]
        %v2043 = vld [vmem:[%s2037 + $0x28] sm:$0x3f]
        %v2044 = vld [vmem:[%s2037 + $0x30] sm:$0xff]
        %v2045 = vld [vmem:[%s2037 + $0x38] sm:$0x3f]
        %v2054 = vrot.slane %v2038, 2
        %v2055 = vrot.slane %v2039, 2
        %v2056 = vsel %vm1524, %v2054, %v2055
        %v2057 = vrot.slane %v2040, 2
        %v2058 = vrot.slane %v2041, 2
        %v2059 = vsel %vm1524, %v2057, %v2058
        %v2060 = vrot.slane %v2042, 2
        %v2061 = vrot.slane %v2043, 2
        %v2062 = vsel %vm1524, %v2060, %v2061
        %v2063 = vrot.slane %v2044, 2
        %v2064 = vrot.slane %v2045, 2
        %v2065 = vsel %vm1524, %v2063, %v2064
        %2066 = vrot.lane.b32.xlu0 %v2054, 98
        %v2067 = vpop.permute.xlu0 %2066
        %2068 = vrot.lane.b32.xlu0 %v2056, 98
        %v2069 = vpop.permute.xlu0 %2068
        %2070 = vrot.lane.b32.xlu0 %v2055, 98
        %v2071 = vpop.permute.xlu0 %2070
        %2072 = vrot.lane.b32.xlu0 %v2057, 98
        %v2073 = vpop.permute.xlu0 %2072
        %2074 = vrot.lane.b32.xlu0 %v2059, 98
        %v2075 = vpop.permute.xlu0 %2074
        %2076 = vrot.lane.b32.xlu0 %v2058, 98
        %v2077 = vpop.permute.xlu0 %2076
        %2078 = vrot.lane.b32.xlu0 %v2060, 98
        %v2079 = vpop.permute.xlu0 %2078
        %2080 = vrot.lane.b32.xlu0 %v2062, 98
        %v2081 = vpop.permute.xlu0 %2080
        %2082 = vrot.lane.b32.xlu0 %v2061, 98
        %v2083 = vpop.permute.xlu0 %2082
        %2084 = vrot.lane.b32.xlu0 %v2063, 98
        %v2085 = vpop.permute.xlu0 %2084
        %2086 = vrot.lane.b32.xlu0 %v2065, 98
        %v2087 = vpop.permute.xlu0 %2086
        %2088 = vrot.lane.b32.xlu0 %v2064, 98
        %v2089 = vpop.permute.xlu0 %2088
        %vm2102 = vcmask 917270
        %2103 = vst.msk [vmem:[%s702 + $0x10] sm:$0xc0] %vm2102, %v2067
        %2104 = vst.msk [vmem:[%s702 + $0x20] sm:$0xff] %vm1079, %v2069
        %vm2105 = vcmask 913168
        %2106 = vst.msk [vmem:[%s702 + $0x30] sm:$0xf] %vm2105, %v2071
        %2107 = vst.msk [vmem:[%s702 + $0x80] sm:$0xc0] %vm2102, %v2073
        %2108 = vst.msk [vmem:[%s702 + $0x90] sm:$0xff] %vm1079, %v2075
        %2109 = vst.msk [vmem:[%s702 + $0xa0] sm:$0xf] %vm2105, %v2077
        %2110 = vst.msk [vmem:[%s702 + $0xf0] sm:$0xc0] %vm2102, %v2079
        %2111 = vst.msk [vmem:[%s702 + $0x100] sm:$0xff] %vm1079, %v2081
        %2112 = vst.msk [vmem:[%s702 + $0x110] sm:$0xf] %vm2105, %v2083
        %2113 = vst.msk [vmem:[%s702 + $0x160] sm:$0xc0] %vm2102, %v2085
        %2114 = vst.msk [vmem:[%s702 + $0x170] sm:$0xff] %vm1079, %v2087
        %2115 = vst.msk [vmem:[%s702 + $0x180] sm:$0xf] %vm2105, %v2089
        %s2116 = scalar_lea.vmem %s686, 1536 [#allocation2]
        %v2117 = vld [vmem:[%s2116] sm:$0xff]
        %v2118 = vld [vmem:[%s2116 + $0x8] sm:$0x3f]
        %v2119 = vld [vmem:[%s2116 + $0x10] sm:$0xff]
        %v2120 = vld [vmem:[%s2116 + $0x18] sm:$0x3f]
        %v2121 = vld [vmem:[%s2116 + $0x20] sm:$0xff]
        %v2122 = vld [vmem:[%s2116 + $0x28] sm:$0x3f]
        %v2123 = vld [vmem:[%s2116 + $0x30] sm:$0xff]
        %v2124 = vld [vmem:[%s2116 + $0x38] sm:$0x3f]
        %v2133 = vrot.slane %v2117, 2
        %v2134 = vrot.slane %v2118, 2
        %v2135 = vsel %vm1524, %v2133, %v2134
        %v2136 = vrot.slane %v2119, 2
        %v2137 = vrot.slane %v2120, 2
        %v2138 = vsel %vm1524, %v2136, %v2137
        %v2139 = vrot.slane %v2121, 2
        %v2140 = vrot.slane %v2122, 2
        %v2141 = vsel %vm1524, %v2139, %v2140
        %v2142 = vrot.slane %v2123, 2
        %v2143 = vrot.slane %v2124, 2
        %v2144 = vsel %vm1524, %v2142, %v2143
        %2145 = vrot.lane.b32.xlu0 %v2133, 112
        %v2146 = vpop.permute.xlu0 %2145
        %2147 = vrot.lane.b32.xlu0 %v2135, 112
        %v2148 = vpop.permute.xlu0 %2147
        %2149 = vrot.lane.b32.xlu0 %v2134, 112
        %v2150 = vpop.permute.xlu0 %2149
        %2151 = vrot.lane.b32.xlu0 %v2136, 112
        %v2152 = vpop.permute.xlu0 %2151
        %2153 = vrot.lane.b32.xlu0 %v2138, 112
        %v2154 = vpop.permute.xlu0 %2153
        %2155 = vrot.lane.b32.xlu0 %v2137, 112
        %v2156 = vpop.permute.xlu0 %2155
        %2157 = vrot.lane.b32.xlu0 %v2139, 112
        %v2158 = vpop.permute.xlu0 %2157
        %2159 = vrot.lane.b32.xlu0 %v2141, 112
        %v2160 = vpop.permute.xlu0 %2159
        %2161 = vrot.lane.b32.xlu0 %v2140, 112
        %v2162 = vpop.permute.xlu0 %2161
        %2163 = vrot.lane.b32.xlu0 %v2142, 112
        %v2164 = vpop.permute.xlu0 %2163
        %2165 = vrot.lane.b32.xlu0 %v2144, 112
        %v2166 = vpop.permute.xlu0 %2165
        %2167 = vrot.lane.b32.xlu0 %v2143, 112
        %v2168 = vpop.permute.xlu0 %2167
        %vm2181 = vcmask 1032070
        %2182 = vst.msk [vmem:[%s702 + $0x10] sm:$0xc0] %vm2181, %v2146
        %2183 = vst.msk [vmem:[%s702 + $0x20] sm:$0xff] %vm1130, %v2148
        %vm2184 = vcmask 1027968
        %2185 = vst.msk [vmem:[%s702 + $0x30] sm:$0xf] %vm2184, %v2150
        %2186 = vst.msk [vmem:[%s702 + $0x80] sm:$0xc0] %vm2181, %v2152
        %2187 = vst.msk [vmem:[%s702 + $0x90] sm:$0xff] %vm1130, %v2154
        %2188 = vst.msk [vmem:[%s702 + $0xa0] sm:$0xf] %vm2184, %v2156
        %2189 = vst.msk [vmem:[%s702 + $0xf0] sm:$0xc0] %vm2181, %v2158
        %2190 = vst.msk [vmem:[%s702 + $0x100] sm:$0xff] %vm1130, %v2160
        %2191 = vst.msk [vmem:[%s702 + $0x110] sm:$0xf] %vm2184, %v2162
        %2192 = vst.msk [vmem:[%s702 + $0x160] sm:$0xc0] %vm2181, %v2164
        %2193 = vst.msk [vmem:[%s702 + $0x170] sm:$0xff] %vm1130, %v2166
        %2194 = vst.msk [vmem:[%s702 + $0x180] sm:$0xf] %vm2184, %v2168
        %s2195 = scalar_lea.vmem %s686, 1600 [#allocation2]
        %v2196 = vld [vmem:[%s2195] sm:$0xff]
        %v2197 = vld [vmem:[%s2195 + $0x8] sm:$0x3f]
        %v2198 = vld [vmem:[%s2195 + $0x10] sm:$0xff]
        %v2199 = vld [vmem:[%s2195 + $0x18] sm:$0x3f]
        %v2200 = vld [vmem:[%s2195 + $0x20] sm:$0xff]
        %v2201 = vld [vmem:[%s2195 + $0x28] sm:$0x3f]
        %v2202 = vld [vmem:[%s2195 + $0x30] sm:$0xff]
        %v2203 = vld [vmem:[%s2195 + $0x38] sm:$0x3f]
        %v2212 = vrot.slane %v2196, 2
        %v2213 = vrot.slane %v2197, 2
        %v2214 = vsel %vm1524, %v2212, %v2213
        %v2215 = vrot.slane %v2198, 2
        %v2216 = vrot.slane %v2199, 2
        %v2217 = vsel %vm1524, %v2215, %v2216
        %v2218 = vrot.slane %v2200, 2
        %v2219 = vrot.slane %v2201, 2
        %v2220 = vsel %vm1524, %v2218, %v2219
        %v2221 = vrot.slane %v2202, 2
        %v2222 = vrot.slane %v2203, 2
        %v2223 = vsel %vm1524, %v2221, %v2222
        %2224 = vrot.lane.b32.xlu0 %v2212, 126
        %v2225 = vpop.permute.xlu0 %2224
        %2226 = vrot.lane.b32.xlu0 %v2214, 126
        %v2227 = vpop.permute.xlu0 %2226
        %2228 = vrot.lane.b32.xlu0 %v2213, 126
        %v2229 = vpop.permute.xlu0 %2228
        %2230 = vrot.lane.b32.xlu0 %v2215, 126
        %v2231 = vpop.permute.xlu0 %2230
        %2232 = vrot.lane.b32.xlu0 %v2217, 126
        %v2233 = vpop.permute.xlu0 %2232
        %2234 = vrot.lane.b32.xlu0 %v2216, 126
        %v2235 = vpop.permute.xlu0 %2234
        %2236 = vrot.lane.b32.xlu0 %v2218, 126
        %v2237 = vpop.permute.xlu0 %2236
        %2238 = vrot.lane.b32.xlu0 %v2220, 126
        %v2239 = vpop.permute.xlu0 %2238
        %2240 = vrot.lane.b32.xlu0 %v2219, 126
        %v2241 = vpop.permute.xlu0 %2240
        %2242 = vrot.lane.b32.xlu0 %v2221, 126
        %v2243 = vpop.permute.xlu0 %2242
        %2244 = vrot.lane.b32.xlu0 %v2223, 126
        %v2245 = vpop.permute.xlu0 %2244
        %2246 = vrot.lane.b32.xlu0 %v2222, 126
        %v2247 = vpop.permute.xlu0 %2246
        %vm2260 = vcmask 1048566
        %2261 = vst.msk [vmem:[%s702 + $0x10] sm:$0xc0] %vm2260, %v2225
        %vm2262 = vcmask 97286
        %2263 = vst.msk [vmem:[%s702 + $0x18] sm:$0xc0] %vm2262, %v2225
        %2264 = vst.msk [vmem:[%s702 + $0x20] sm:$0xff] %vm1181, %v2227
        %2265 = vst.msk [vmem:[%s702 + $0x28] sm:$0xff] %vm1183, %v2227
        %vm2266 = vcmask 1044464
        %2267 = vst.msk [vmem:[%s702 + $0x30] sm:$0xf] %vm2266, %v2229
        %vm2268 = vcmask 93184
        %2269 = vst.msk [vmem:[%s702 + $0x38] sm:$0xf] %vm2268, %v2229
        %2270 = vst.msk [vmem:[%s702 + $0x80] sm:$0xc0] %vm2260, %v2231
        %2271 = vst.msk [vmem:[%s702 + $0x88] sm:$0xc0] %vm2262, %v2231
        %2272 = vst.msk [vmem:[%s702 + $0x90] sm:$0xff] %vm1181, %v2233
        %2273 = vst.msk [vmem:[%s702 + $0x98] sm:$0xff] %vm1183, %v2233
        %2274 = vst.msk [vmem:[%s702 + $0xa0] sm:$0xf] %vm2266, %v2235
        %2275 = vst.msk [vmem:[%s702 + $0xa8] sm:$0xf] %vm2268, %v2235
        %2276 = vst.msk [vmem:[%s702 + $0xf0] sm:$0xc0] %vm2260, %v2237
        %2277 = vst.msk [vmem:[%s702 + $0xf8] sm:$0xc0] %vm2262, %v2237
        %2278 = vst.msk [vmem:[%s702 + $0x100] sm:$0xff] %vm1181, %v2239
        %2279 = vst.msk [vmem:[%s702 + $0x108] sm:$0xff] %vm1183, %v2239
        %2280 = vst.msk [vmem:[%s702 + $0x110] sm:$0xf] %vm2266, %v2241
        %2281 = vst.msk [vmem:[%s702 + $0x118] sm:$0xf] %vm2268, %v2241
        %2282 = vst.msk [vmem:[%s702 + $0x160] sm:$0xc0] %vm2260, %v2243
        %2283 = vst.msk [vmem:[%s702 + $0x168] sm:$0xc0] %vm2262, %v2243
        %2284 = vst.msk [vmem:[%s702 + $0x170] sm:$0xff] %vm1181, %v2245
        %2285 = vst.msk [vmem:[%s702 + $0x178] sm:$0xff] %vm1183, %v2245
        %2286 = vst.msk [vmem:[%s702 + $0x180] sm:$0xf] %vm2266, %v2247
        %2287 = vst.msk [vmem:[%s702 + $0x188] sm:$0xf] %vm2268, %v2247
        %s2288 = scalar_lea.vmem %s686, 1664 [#allocation2]
        %v2289 = vld [vmem:[%s2288] sm:$0xff]
        %v2290 = vld [vmem:[%s2288 + $0x8] sm:$0x3f]
        %v2291 = vld [vmem:[%s2288 + $0x10] sm:$0xff]
        %v2292 = vld [vmem:[%s2288 + $0x18] sm:$0x3f]
        %v2293 = vld [vmem:[%s2288 + $0x20] sm:$0xff]
        %v2294 = vld [vmem:[%s2288 + $0x28] sm:$0x3f]
        %v2295 = vld [vmem:[%s2288 + $0x30] sm:$0xff]
        %v2296 = vld [vmem:[%s2288 + $0x38] sm:$0x3f]
        %v2305 = vrot.slane %v2289, 2
        %v2306 = vrot.slane %v2290, 2
        %v2307 = vsel %vm1524, %v2305, %v2306
        %v2308 = vrot.slane %v2291, 2
        %v2309 = vrot.slane %v2292, 2
        %v2310 = vsel %vm1524, %v2308, %v2309
        %v2311 = vrot.slane %v2293, 2
        %v2312 = vrot.slane %v2294, 2
        %v2313 = vsel %vm1524, %v2311, %v2312
        %v2314 = vrot.slane %v2295, 2
        %v2315 = vrot.slane %v2296, 2
        %v2316 = vsel %vm1524, %v2314, %v2315
        %2317 = vrot.lane.b32.xlu0 %v2305, 12
        %v2318 = vpop.permute.xlu0 %2317
        %2319 = vrot.lane.b32.xlu0 %v2307, 12
        %v2320 = vpop.permute.xlu0 %2319
        %2321 = vrot.lane.b32.xlu0 %v2306, 12
        %v2322 = vpop.permute.xlu0 %2321
        %2323 = vrot.lane.b32.xlu0 %v2308, 12
        %v2324 = vpop.permute.xlu0 %2323
        %2325 = vrot.lane.b32.xlu0 %v2310, 12
        %v2326 = vpop.permute.xlu0 %2325
        %2327 = vrot.lane.b32.xlu0 %v2309, 12
        %v2328 = vpop.permute.xlu0 %2327
        %2329 = vrot.lane.b32.xlu0 %v2311, 12
        %v2330 = vpop.permute.xlu0 %2329
        %2331 = vrot.lane.b32.xlu0 %v2313, 12
        %v2332 = vpop.permute.xlu0 %2331
        %2333 = vrot.lane.b32.xlu0 %v2312, 12
        %v2334 = vpop.permute.xlu0 %2333
        %2335 = vrot.lane.b32.xlu0 %v2314, 12
        %v2336 = vpop.permute.xlu0 %2335
        %2337 = vrot.lane.b32.xlu0 %v2316, 12
        %v2338 = vpop.permute.xlu0 %2337
        %2339 = vrot.lane.b32.xlu0 %v2315, 12
        %v2340 = vpop.permute.xlu0 %2339
        %vm2353 = vcmask 212070
        %2354 = vst.msk [vmem:[%s702 + $0x18] sm:$0xc0] %vm2353, %v2318
        %2355 = vst.msk [vmem:[%s702 + $0x28] sm:$0xff] %vm1242, %v2320
        %vm2356 = vcmask 207968
        %2357 = vst.msk [vmem:[%s702 + $0x38] sm:$0xf] %vm2356, %v2322
        %2358 = vst.msk [vmem:[%s702 + $0x88] sm:$0xc0] %vm2353, %v2324
        %2359 = vst.msk [vmem:[%s702 + $0x98] sm:$0xff] %vm1242, %v2326
        %2360 = vst.msk [vmem:[%s702 + $0xa8] sm:$0xf] %vm2356, %v2328
        %2361 = vst.msk [vmem:[%s702 + $0xf8] sm:$0xc0] %vm2353, %v2330
        %2362 = vst.msk [vmem:[%s702 + $0x108] sm:$0xff] %vm1242, %v2332
        %2363 = vst.msk [vmem:[%s702 + $0x118] sm:$0xf] %vm2356, %v2334
        %2364 = vst.msk [vmem:[%s702 + $0x168] sm:$0xc0] %vm2353, %v2336
        %2365 = vst.msk [vmem:[%s702 + $0x178] sm:$0xff] %vm1242, %v2338
        %2366 = vst.msk [vmem:[%s702 + $0x188] sm:$0xf] %vm2356, %v2340
        %s2367 = scalar_lea.vmem %s686, 1728 [#allocation2]
        %v2368 = vld [vmem:[%s2367] sm:$0xff]
        %v2369 = vld [vmem:[%s2367 + $0x8] sm:$0x3f]
        %v2370 = vld [vmem:[%s2367 + $0x10] sm:$0xff]
        %v2371 = vld [vmem:[%s2367 + $0x18] sm:$0x3f]
        %v2372 = vld [vmem:[%s2367 + $0x20] sm:$0xff]
        %v2373 = vld [vmem:[%s2367 + $0x28] sm:$0x3f]
        %v2374 = vld [vmem:[%s2367 + $0x30] sm:$0xff]
        %v2375 = vld [vmem:[%s2367 + $0x38] sm:$0x3f]
        %v2384 = vrot.slane %v2368, 2
        %v2385 = vrot.slane %v2369, 2
        %v2386 = vsel %vm1524, %v2384, %v2385
        %v2387 = vrot.slane %v2370, 2
        %v2388 = vrot.slane %v2371, 2
        %v2389 = vsel %vm1524, %v2387, %v2388
        %v2390 = vrot.slane %v2372, 2
        %v2391 = vrot.slane %v2373, 2
        %v2392 = vsel %vm1524, %v2390, %v2391
        %v2393 = vrot.slane %v2374, 2
        %v2394 = vrot.slane %v2375, 2
        %v2395 = vsel %vm1524, %v2393, %v2394
        %2396 = vrot.lane.b32.xlu0 %v2384, 26
        %v2397 = vpop.permute.xlu0 %2396
        %2398 = vrot.lane.b32.xlu0 %v2386, 26
        %v2399 = vpop.permute.xlu0 %2398
        %2400 = vrot.lane.b32.xlu0 %v2385, 26
        %v2401 = vpop.permute.xlu0 %2400
        %2402 = vrot.lane.b32.xlu0 %v2387, 26
        %v2403 = vpop.permute.xlu0 %2402
        %2404 = vrot.lane.b32.xlu0 %v2389, 26
        %v2405 = vpop.permute.xlu0 %2404
        %2406 = vrot.lane.b32.xlu0 %v2388, 26
        %v2407 = vpop.permute.xlu0 %2406
        %2408 = vrot.lane.b32.xlu0 %v2390, 26
        %v2409 = vpop.permute.xlu0 %2408
        %2410 = vrot.lane.b32.xlu0 %v2392, 26
        %v2411 = vpop.permute.xlu0 %2410
        %2412 = vrot.lane.b32.xlu0 %v2391, 26
        %v2413 = vpop.permute.xlu0 %2412
        %2414 = vrot.lane.b32.xlu0 %v2393, 26
        %v2415 = vpop.permute.xlu0 %2414
        %2416 = vrot.lane.b32.xlu0 %v2395, 26
        %v2417 = vpop.permute.xlu0 %2416
        %2418 = vrot.lane.b32.xlu0 %v2394, 26
        %v2419 = vpop.permute.xlu0 %2418
        %vm2432 = vcmask 326870
        %2433 = vst.msk [vmem:[%s702 + $0x18] sm:$0xc0] %vm2432, %v2397
        %2434 = vst.msk [vmem:[%s702 + $0x28] sm:$0xff] %vm1293, %v2399
        %vm2435 = vcmask 322768
        %2436 = vst.msk [vmem:[%s702 + $0x38] sm:$0xf] %vm2435, %v2401
        %2437 = vst.msk [vmem:[%s702 + $0x88] sm:$0xc0] %vm2432, %v2403
        %2438 = vst.msk [vmem:[%s702 + $0x98] sm:$0xff] %vm1293, %v2405
        %2439 = vst.msk [vmem:[%s702 + $0xa8] sm:$0xf] %vm2435, %v2407
        %2440 = vst.msk [vmem:[%s702 + $0xf8] sm:$0xc0] %vm2432, %v2409
        %2441 = vst.msk [vmem:[%s702 + $0x108] sm:$0xff] %vm1293, %v2411
        %2442 = vst.msk [vmem:[%s702 + $0x118] sm:$0xf] %vm2435, %v2413
        %2443 = vst.msk [vmem:[%s702 + $0x168] sm:$0xc0] %vm2432, %v2415
        %2444 = vst.msk [vmem:[%s702 + $0x178] sm:$0xff] %vm1293, %v2417
        %2445 = vst.msk [vmem:[%s702 + $0x188] sm:$0xf] %vm2435, %v2419
        %s2446 = scalar_lea.vmem %s686, 1792 [#allocation2]
        %v2447 = vld [vmem:[%s2446] sm:$0xff]
        %v2448 = vld [vmem:[%s2446 + $0x8] sm:$0x3f]
        %v2449 = vld [vmem:[%s2446 + $0x10] sm:$0xff]
        %v2450 = vld [vmem:[%s2446 + $0x18] sm:$0x3f]
        %v2451 = vld [vmem:[%s2446 + $0x20] sm:$0xff]
        %v2452 = vld [vmem:[%s2446 + $0x28] sm:$0x3f]
        %v2453 = vld [vmem:[%s2446 + $0x30] sm:$0xff]
        %v2454 = vld [vmem:[%s2446 + $0x38] sm:$0x3f]
        %v2463 = vrot.slane %v2447, 2
        %v2464 = vrot.slane %v2448, 2
        %v2465 = vsel %vm1524, %v2463, %v2464
        %v2466 = vrot.slane %v2449, 2
        %v2467 = vrot.slane %v2450, 2
        %v2468 = vsel %vm1524, %v2466, %v2467
        %v2469 = vrot.slane %v2451, 2
        %v2470 = vrot.slane %v2452, 2
        %v2471 = vsel %vm1524, %v2469, %v2470
        %v2472 = vrot.slane %v2453, 2
        %v2473 = vrot.slane %v2454, 2
        %v2474 = vsel %vm1524, %v2472, %v2473
        %2475 = vrot.lane.b32.xlu0 %v2463, 40
        %v2476 = vpop.permute.xlu0 %2475
        %2477 = vrot.lane.b32.xlu0 %v2465, 40
        %v2478 = vpop.permute.xlu0 %2477
        %2479 = vrot.lane.b32.xlu0 %v2464, 40
        %v2480 = vpop.permute.xlu0 %2479
        %2481 = vrot.lane.b32.xlu0 %v2466, 40
        %v2482 = vpop.permute.xlu0 %2481
        %2483 = vrot.lane.b32.xlu0 %v2468, 40
        %v2484 = vpop.permute.xlu0 %2483
        %2485 = vrot.lane.b32.xlu0 %v2467, 40
        %v2486 = vpop.permute.xlu0 %2485
        %2487 = vrot.lane.b32.xlu0 %v2469, 40
        %v2488 = vpop.permute.xlu0 %2487
        %2489 = vrot.lane.b32.xlu0 %v2471, 40
        %v2490 = vpop.permute.xlu0 %2489
        %2491 = vrot.lane.b32.xlu0 %v2470, 40
        %v2492 = vpop.permute.xlu0 %2491
        %2493 = vrot.lane.b32.xlu0 %v2472, 40
        %v2494 = vpop.permute.xlu0 %2493
        %2495 = vrot.lane.b32.xlu0 %v2474, 40
        %v2496 = vpop.permute.xlu0 %2495
        %2497 = vrot.lane.b32.xlu0 %v2473, 40
        %v2498 = vpop.permute.xlu0 %2497
        %vm2511 = vcmask 441670
        %2512 = vst.msk [vmem:[%s702 + $0x18] sm:$0xc0] %vm2511, %v2476
        %2513 = vst.msk [vmem:[%s702 + $0x28] sm:$0xff] %vm1344, %v2478
        %vm2514 = vcmask 437568
        %2515 = vst.msk [vmem:[%s702 + $0x38] sm:$0xf] %vm2514, %v2480
        %2516 = vst.msk [vmem:[%s702 + $0x88] sm:$0xc0] %vm2511, %v2482
        %2517 = vst.msk [vmem:[%s702 + $0x98] sm:$0xff] %vm1344, %v2484
        %2518 = vst.msk [vmem:[%s702 + $0xa8] sm:$0xf] %vm2514, %v2486
        %2519 = vst.msk [vmem:[%s702 + $0xf8] sm:$0xc0] %vm2511, %v2488
        %2520 = vst.msk [vmem:[%s702 + $0x108] sm:$0xff] %vm1344, %v2490
        %2521 = vst.msk [vmem:[%s702 + $0x118] sm:$0xf] %vm2514, %v2492
        %2522 = vst.msk [vmem:[%s702 + $0x168] sm:$0xc0] %vm2511, %v2494
        %2523 = vst.msk [vmem:[%s702 + $0x178] sm:$0xff] %vm1344, %v2496
        %2524 = vst.msk [vmem:[%s702 + $0x188] sm:$0xf] %vm2514, %v2498
        %s2525 = scalar_lea.vmem %s686, 1856 [#allocation2]
        %v2526 = vld [vmem:[%s2525] sm:$0xff]
        %v2527 = vld [vmem:[%s2525 + $0x8] sm:$0x3f]
        %v2528 = vld [vmem:[%s2525 + $0x10] sm:$0xff]
        %v2529 = vld [vmem:[%s2525 + $0x18] sm:$0x3f]
        %v2530 = vld [vmem:[%s2525 + $0x20] sm:$0xff]
        %v2531 = vld [vmem:[%s2525 + $0x28] sm:$0x3f]
        %v2532 = vld [vmem:[%s2525 + $0x30] sm:$0xff]
        %v2533 = vld [vmem:[%s2525 + $0x38] sm:$0x3f]
        %v2542 = vrot.slane %v2526, 2
        %v2543 = vrot.slane %v2527, 2
        %v2544 = vsel %vm1524, %v2542, %v2543
        %v2545 = vrot.slane %v2528, 2
        %v2546 = vrot.slane %v2529, 2
        %v2547 = vsel %vm1524, %v2545, %v2546
        %v2548 = vrot.slane %v2530, 2
        %v2549 = vrot.slane %v2531, 2
        %v2550 = vsel %vm1524, %v2548, %v2549
        %v2551 = vrot.slane %v2532, 2
        %v2552 = vrot.slane %v2533, 2
        %v2553 = vsel %vm1524, %v2551, %v2552
        %2554 = vrot.lane.b32.xlu0 %v2542, 54
        %v2555 = vpop.permute.xlu0 %2554
        %2556 = vrot.lane.b32.xlu0 %v2544, 54
        %v2557 = vpop.permute.xlu0 %2556
        %2558 = vrot.lane.b32.xlu0 %v2543, 54
        %v2559 = vpop.permute.xlu0 %2558
        %2560 = vrot.lane.b32.xlu0 %v2545, 54
        %v2561 = vpop.permute.xlu0 %2560
        %2562 = vrot.lane.b32.xlu0 %v2547, 54
        %v2563 = vpop.permute.xlu0 %2562
        %2564 = vrot.lane.b32.xlu0 %v2546, 54
        %v2565 = vpop.permute.xlu0 %2564
        %2566 = vrot.lane.b32.xlu0 %v2548, 54
        %v2567 = vpop.permute.xlu0 %2566
        %2568 = vrot.lane.b32.xlu0 %v2550, 54
        %v2569 = vpop.permute.xlu0 %2568
        %2570 = vrot.lane.b32.xlu0 %v2549, 54
        %v2571 = vpop.permute.xlu0 %2570
        %2572 = vrot.lane.b32.xlu0 %v2551, 54
        %v2573 = vpop.permute.xlu0 %2572
        %2574 = vrot.lane.b32.xlu0 %v2553, 54
        %v2575 = vpop.permute.xlu0 %2574
        %2576 = vrot.lane.b32.xlu0 %v2552, 54
        %v2577 = vpop.permute.xlu0 %2576
        %vm2590 = vcmask 556470
        %2591 = vst.msk [vmem:[%s702 + $0x18] sm:$0xc0] %vm2590, %v2555
        %2592 = vst.msk [vmem:[%s702 + $0x28] sm:$0xff] %vm1395, %v2557
        %vm2593 = vcmask 552368
        %2594 = vst.msk [vmem:[%s702 + $0x38] sm:$0xf] %vm2593, %v2559
        %2595 = vst.msk [vmem:[%s702 + $0x88] sm:$0xc0] %vm2590, %v2561
        %2596 = vst.msk [vmem:[%s702 + $0x98] sm:$0xff] %vm1395, %v2563
        %2597 = vst.msk [vmem:[%s702 + $0xa8] sm:$0xf] %vm2593, %v2565
        %2598 = vst.msk [vmem:[%s702 + $0xf8] sm:$0xc0] %vm2590, %v2567
        %2599 = vst.msk [vmem:[%s702 + $0x108] sm:$0xff] %vm1395, %v2569
        %2600 = vst.msk [vmem:[%s702 + $0x118] sm:$0xf] %vm2593, %v2571
        %2601 = vst.msk [vmem:[%s702 + $0x168] sm:$0xc0] %vm2590, %v2573
        %2602 = vst.msk [vmem:[%s702 + $0x178] sm:$0xff] %vm1395, %v2575
        %2603 = vst.msk [vmem:[%s702 + $0x188] sm:$0xf] %vm2593, %v2577
        %s2604 = scalar_lea.vmem %s686, 1920 [#allocation2]
        %v2605 = vld [vmem:[%s2604] sm:$0xff]
        %v2606 = vld [vmem:[%s2604 + $0x8] sm:$0x3f]
        %v2607 = vld [vmem:[%s2604 + $0x10] sm:$0xff]
        %v2608 = vld [vmem:[%s2604 + $0x18] sm:$0x3f]
        %v2609 = vld [vmem:[%s2604 + $0x20] sm:$0xff]
        %v2610 = vld [vmem:[%s2604 + $0x28] sm:$0x3f]
        %v2611 = vld [vmem:[%s2604 + $0x30] sm:$0xff]
        %v2612 = vld [vmem:[%s2604 + $0x38] sm:$0x3f]
        %v2621 = vrot.slane %v2605, 2
        %v2622 = vrot.slane %v2606, 2
        %v2623 = vsel %vm1524, %v2621, %v2622
        %v2624 = vrot.slane %v2607, 2
        %v2625 = vrot.slane %v2608, 2
        %v2626 = vsel %vm1524, %v2624, %v2625
        %v2627 = vrot.slane %v2609, 2
        %v2628 = vrot.slane %v2610, 2
        %v2629 = vsel %vm1524, %v2627, %v2628
        %v2630 = vrot.slane %v2611, 2
        %v2631 = vrot.slane %v2612, 2
        %v2632 = vsel %vm1524, %v2630, %v2631
        %2633 = vrot.lane.b32.xlu0 %v2621, 68
        %v2634 = vpop.permute.xlu0 %2633
        %2635 = vrot.lane.b32.xlu0 %v2623, 68
        %v2636 = vpop.permute.xlu0 %2635
        %2637 = vrot.lane.b32.xlu0 %v2622, 68
        %v2638 = vpop.permute.xlu0 %2637
        %2639 = vrot.lane.b32.xlu0 %v2624, 68
        %v2640 = vpop.permute.xlu0 %2639
        %2641 = vrot.lane.b32.xlu0 %v2626, 68
        %v2642 = vpop.permute.xlu0 %2641
        %2643 = vrot.lane.b32.xlu0 %v2625, 68
        %v2644 = vpop.permute.xlu0 %2643
        %2645 = vrot.lane.b32.xlu0 %v2627, 68
        %v2646 = vpop.permute.xlu0 %2645
        %2647 = vrot.lane.b32.xlu0 %v2629, 68
        %v2648 = vpop.permute.xlu0 %2647
        %2649 = vrot.lane.b32.xlu0 %v2628, 68
        %v2650 = vpop.permute.xlu0 %2649
        %2651 = vrot.lane.b32.xlu0 %v2630, 68
        %v2652 = vpop.permute.xlu0 %2651
        %2653 = vrot.lane.b32.xlu0 %v2632, 68
        %v2654 = vpop.permute.xlu0 %2653
        %2655 = vrot.lane.b32.xlu0 %v2631, 68
        %v2656 = vpop.permute.xlu0 %2655
        %vm2669 = vcmask 671270
        %2670 = vst.msk [vmem:[%s702 + $0x18] sm:$0xc0] %vm2669, %v2634
        %2671 = vst.msk [vmem:[%s702 + $0x28] sm:$0xff] %vm1446, %v2636
        %vm2672 = vcmask 667168
        %2673 = vst.msk [vmem:[%s702 + $0x38] sm:$0xf] %vm2672, %v2638
        %2674 = vst.msk [vmem:[%s702 + $0x88] sm:$0xc0] %vm2669, %v2640
        %2675 = vst.msk [vmem:[%s702 + $0x98] sm:$0xff] %vm1446, %v2642
        %2676 = vst.msk [vmem:[%s702 + $0xa8] sm:$0xf] %vm2672, %v2644
        %2677 = vst.msk [vmem:[%s702 + $0xf8] sm:$0xc0] %vm2669, %v2646
        %2678 = vst.msk [vmem:[%s702 + $0x108] sm:$0xff] %vm1446, %v2648
        %2679 = vst.msk [vmem:[%s702 + $0x118] sm:$0xf] %vm2672, %v2650
        %2680 = vst.msk [vmem:[%s702 + $0x168] sm:$0xc0] %vm2669, %v2652
        %2681 = vst.msk [vmem:[%s702 + $0x178] sm:$0xff] %vm1446, %v2654
        %2682 = vst.msk [vmem:[%s702 + $0x188] sm:$0xf] %vm2672, %v2656
        %s2683 = scalar_lea.vmem %s686, 1984 [#allocation2]
        %v2684 = vld [vmem:[%s2683] sm:$0xff]
        %v2685 = vld [vmem:[%s2683 + $0x8] sm:$0x3f]
        %v2686 = vld [vmem:[%s2683 + $0x10] sm:$0xff]
        %v2687 = vld [vmem:[%s2683 + $0x18] sm:$0x3f]
        %v2688 = vld [vmem:[%s2683 + $0x20] sm:$0xff]
        %v2689 = vld [vmem:[%s2683 + $0x28] sm:$0x3f]
        %v2690 = vld [vmem:[%s2683 + $0x30] sm:$0xff]
        %v2691 = vld [vmem:[%s2683 + $0x38] sm:$0x3f]
        %v2700 = vrot.slane %v2684, 2
        %v2701 = vrot.slane %v2685, 2
        %v2702 = vsel %vm1524, %v2700, %v2701
        %v2703 = vrot.slane %v2686, 2
        %v2704 = vrot.slane %v2687, 2
        %v2705 = vsel %vm1524, %v2703, %v2704
        %v2706 = vrot.slane %v2688, 2
        %v2707 = vrot.slane %v2689, 2
        %v2708 = vsel %vm1524, %v2706, %v2707
        %v2709 = vrot.slane %v2690, 2
        %v2710 = vrot.slane %v2691, 2
        %v2711 = vsel %vm1524, %v2709, %v2710
        %2712 = vrot.lane.b32.xlu0 %v2700, 82
        %v2713 = vpop.permute.xlu0 %2712
        %2714 = vrot.lane.b32.xlu0 %v2702, 82
        %v2715 = vpop.permute.xlu0 %2714
        %2716 = vrot.lane.b32.xlu0 %v2701, 82
        %v2717 = vpop.permute.xlu0 %2716
        %2718 = vrot.lane.b32.xlu0 %v2703, 82
        %v2719 = vpop.permute.xlu0 %2718
        %2720 = vrot.lane.b32.xlu0 %v2705, 82
        %v2721 = vpop.permute.xlu0 %2720
        %2722 = vrot.lane.b32.xlu0 %v2704, 82
        %v2723 = vpop.permute.xlu0 %2722
        %2724 = vrot.lane.b32.xlu0 %v2706, 82
        %v2725 = vpop.permute.xlu0 %2724
        %2726 = vrot.lane.b32.xlu0 %v2708, 82
        %v2727 = vpop.permute.xlu0 %2726
        %2728 = vrot.lane.b32.xlu0 %v2707, 82
        %v2729 = vpop.permute.xlu0 %2728
        %2730 = vrot.lane.b32.xlu0 %v2709, 82
        %v2731 = vpop.permute.xlu0 %2730
        %2732 = vrot.lane.b32.xlu0 %v2711, 82
        %v2733 = vpop.permute.xlu0 %2732
        %2734 = vrot.lane.b32.xlu0 %v2710, 82
        %v2735 = vpop.permute.xlu0 %2734
        %vm2748 = vcmask 786070
        %2749 = vst.msk [vmem:[%s702 + $0x18] sm:$0xc0] %vm2748, %v2713
        %2750 = vst.msk [vmem:[%s702 + $0x28] sm:$0xff] %vm1497, %v2715
        %vm2751 = vcmask 781968
        %2752 = vst.msk [vmem:[%s702 + $0x38] sm:$0xf] %vm2751, %v2717
        %2753 = vst.msk [vmem:[%s702 + $0x88] sm:$0xc0] %vm2748, %v2719
        %2754 = vst.msk [vmem:[%s702 + $0x98] sm:$0xff] %vm1497, %v2721
        %2755 = vst.msk [vmem:[%s702 + $0xa8] sm:$0xf] %vm2751, %v2723
        %2756 = vst.msk [vmem:[%s702 + $0xf8] sm:$0xc0] %vm2748, %v2725
        %2757 = vst.msk [vmem:[%s702 + $0x108] sm:$0xff] %vm1497, %v2727
        %2758 = vst.msk [vmem:[%s702 + $0x118] sm:$0xf] %vm2751, %v2729
        %2759 = vst.msk [vmem:[%s702 + $0x168] sm:$0xc0] %vm2748, %v2731
        %2760 = vst.msk [vmem:[%s702 + $0x178] sm:$0xff] %vm1497, %v2733
        %2761 = vst.msk [vmem:[%s702 + $0x188] sm:$0xf] %vm2751, %v2735
        %s2762 = scalar_lea.vmem %s686, 2048 [#allocation2]
        %v2763 = vld [vmem:[%s2762] sm:$0xff]
        %v2764 = vld [vmem:[%s2762 + $0x8] sm:$0x3f]
        %v2765 = vld [vmem:[%s2762 + $0x10] sm:$0xff]
        %v2766 = vld [vmem:[%s2762 + $0x18] sm:$0x3f]
        %v2767 = vld [vmem:[%s2762 + $0x20] sm:$0xff]
        %v2768 = vld [vmem:[%s2762 + $0x28] sm:$0x3f]
        %v2769 = vld [vmem:[%s2762 + $0x30] sm:$0xff]
        %v2770 = vld [vmem:[%s2762 + $0x38] sm:$0x3f]
        %vm2779 = vcmask 1043456
        %v2780 = vrot.slane %v2763, 4
        %v2781 = vrot.slane %v2764, 4
        %v2782 = vsel %vm2779, %v2780, %v2781
        %v2783 = vrot.slane %v2765, 4
        %v2784 = vrot.slane %v2766, 4
        %v2785 = vsel %vm2779, %v2783, %v2784
        %v2786 = vrot.slane %v2767, 4
        %v2787 = vrot.slane %v2768, 4
        %v2788 = vsel %vm2779, %v2786, %v2787
        %v2789 = vrot.slane %v2769, 4
        %v2790 = vrot.slane %v2770, 4
        %v2791 = vsel %vm2779, %v2789, %v2790
        %vm2804 = vcmask 113668
        %2805 = vst.msk [vmem:[%s702 + $0x30] sm:$0xf0] %vm2804, %v2780
        %2806 = vst.msk [vmem:[%s702 + $0x40] sm:$0xff] %vm722, %v2782
        %vm2807 = vcmask 107520
        %2808 = vst.msk [vmem:[%s702 + $0x50] sm:$0x3] %vm2807, %v2781
        %2809 = vst.msk [vmem:[%s702 + $0xa0] sm:$0xf0] %vm2804, %v2783
        %2810 = vst.msk [vmem:[%s702 + $0xb0] sm:$0xff] %vm722, %v2785
        %2811 = vst.msk [vmem:[%s702 + $0xc0] sm:$0x3] %vm2807, %v2784
        %2812 = vst.msk [vmem:[%s702 + $0x110] sm:$0xf0] %vm2804, %v2786
        %2813 = vst.msk [vmem:[%s702 + $0x120] sm:$0xff] %vm722, %v2788
        %2814 = vst.msk [vmem:[%s702 + $0x130] sm:$0x3] %vm2807, %v2787
        %2815 = vst.msk [vmem:[%s702 + $0x180] sm:$0xf0] %vm2804, %v2789
        %2816 = vst.msk [vmem:[%s702 + $0x190] sm:$0xff] %vm722, %v2791
        %2817 = vst.msk [vmem:[%s702 + $0x1a0] sm:$0x3] %vm2807, %v2790
        %s2818 = scalar_lea.vmem %s686, 2112 [#allocation2]
        %v2819 = vld [vmem:[%s2818] sm:$0xff]
        %v2820 = vld [vmem:[%s2818 + $0x8] sm:$0x3f]
        %v2821 = vld [vmem:[%s2818 + $0x10] sm:$0xff]
        %v2822 = vld [vmem:[%s2818 + $0x18] sm:$0x3f]
        %v2823 = vld [vmem:[%s2818 + $0x20] sm:$0xff]
        %v2824 = vld [vmem:[%s2818 + $0x28] sm:$0x3f]
        %v2825 = vld [vmem:[%s2818 + $0x30] sm:$0xff]
        %v2826 = vld [vmem:[%s2818 + $0x38] sm:$0x3f]
        %v2835 = vrot.slane %v2819, 4
        %v2836 = vrot.slane %v2820, 4
        %v2837 = vsel %vm2779, %v2835, %v2836
        %v2838 = vrot.slane %v2821, 4
        %v2839 = vrot.slane %v2822, 4
        %v2840 = vsel %vm2779, %v2838, %v2839
        %v2841 = vrot.slane %v2823, 4
        %v2842 = vrot.slane %v2824, 4
        %v2843 = vsel %vm2779, %v2841, %v2842
        %v2844 = vrot.slane %v2825, 4
        %v2845 = vrot.slane %v2826, 4
        %v2846 = vsel %vm2779, %v2844, %v2845
        %2847 = vrot.lane.b32.xlu0 %v2835, 14
        %v2848 = vpop.permute.xlu0 %2847
        %2849 = vrot.lane.b32.xlu0 %v2837, 14
        %v2850 = vpop.permute.xlu0 %2849
        %2851 = vrot.lane.b32.xlu0 %v2836, 14
        %v2852 = vpop.permute.xlu0 %2851
        %2853 = vrot.lane.b32.xlu0 %v2838, 14
        %v2854 = vpop.permute.xlu0 %2853
        %2855 = vrot.lane.b32.xlu0 %v2840, 14
        %v2856 = vpop.permute.xlu0 %2855
        %2857 = vrot.lane.b32.xlu0 %v2839, 14
        %v2858 = vpop.permute.xlu0 %2857
        %2859 = vrot.lane.b32.xlu0 %v2841, 14
        %v2860 = vpop.permute.xlu0 %2859
        %2861 = vrot.lane.b32.xlu0 %v2843, 14
        %v2862 = vpop.permute.xlu0 %2861
        %2863 = vrot.lane.b32.xlu0 %v2842, 14
        %v2864 = vpop.permute.xlu0 %2863
        %2865 = vrot.lane.b32.xlu0 %v2844, 14
        %v2866 = vpop.permute.xlu0 %2865
        %2867 = vrot.lane.b32.xlu0 %v2846, 14
        %v2868 = vpop.permute.xlu0 %2867
        %2869 = vrot.lane.b32.xlu0 %v2845, 14
        %v2870 = vpop.permute.xlu0 %2869
        %vm2883 = vcmask 228468
        %2884 = vst.msk [vmem:[%s702 + $0x30] sm:$0xf0] %vm2883, %v2848
        %2885 = vst.msk [vmem:[%s702 + $0x40] sm:$0xff] %vm773, %v2850
        %vm2886 = vcmask 222320
        %2887 = vst.msk [vmem:[%s702 + $0x50] sm:$0x3] %vm2886, %v2852
        %2888 = vst.msk [vmem:[%s702 + $0xa0] sm:$0xf0] %vm2883, %v2854
        %2889 = vst.msk [vmem:[%s702 + $0xb0] sm:$0xff] %vm773, %v2856
        %2890 = vst.msk [vmem:[%s702 + $0xc0] sm:$0x3] %vm2886, %v2858
        %2891 = vst.msk [vmem:[%s702 + $0x110] sm:$0xf0] %vm2883, %v2860
        %2892 = vst.msk [vmem:[%s702 + $0x120] sm:$0xff] %vm773, %v2862
        %2893 = vst.msk [vmem:[%s702 + $0x130] sm:$0x3] %vm2886, %v2864
        %2894 = vst.msk [vmem:[%s702 + $0x180] sm:$0xf0] %vm2883, %v2866
        %2895 = vst.msk [vmem:[%s702 + $0x190] sm:$0xff] %vm773, %v2868
        %2896 = vst.msk [vmem:[%s702 + $0x1a0] sm:$0x3] %vm2886, %v2870
        %s2897 = scalar_lea.vmem %s686, 2176 [#allocation2]
        %v2898 = vld [vmem:[%s2897] sm:$0xff]
        %v2899 = vld [vmem:[%s2897 + $0x8] sm:$0x3f]
        %v2900 = vld [vmem:[%s2897 + $0x10] sm:$0xff]
        %v2901 = vld [vmem:[%s2897 + $0x18] sm:$0x3f]
        %v2902 = vld [vmem:[%s2897 + $0x20] sm:$0xff]
        %v2903 = vld [vmem:[%s2897 + $0x28] sm:$0x3f]
        %v2904 = vld [vmem:[%s2897 + $0x30] sm:$0xff]
        %v2905 = vld [vmem:[%s2897 + $0x38] sm:$0x3f]
        %v2914 = vrot.slane %v2898, 4
        %v2915 = vrot.slane %v2899, 4
        %v2916 = vsel %vm2779, %v2914, %v2915
        %v2917 = vrot.slane %v2900, 4
        %v2918 = vrot.slane %v2901, 4
        %v2919 = vsel %vm2779, %v2917, %v2918
        %v2920 = vrot.slane %v2902, 4
        %v2921 = vrot.slane %v2903, 4
        %v2922 = vsel %vm2779, %v2920, %v2921
        %v2923 = vrot.slane %v2904, 4
        %v2924 = vrot.slane %v2905, 4
        %v2925 = vsel %vm2779, %v2923, %v2924
        %2926 = vrot.lane.b32.xlu0 %v2914, 28
        %v2927 = vpop.permute.xlu0 %2926
        %2928 = vrot.lane.b32.xlu0 %v2916, 28
        %v2929 = vpop.permute.xlu0 %2928
        %2930 = vrot.lane.b32.xlu0 %v2915, 28
        %v2931 = vpop.permute.xlu0 %2930
        %2932 = vrot.lane.b32.xlu0 %v2917, 28
        %v2933 = vpop.permute.xlu0 %2932
        %2934 = vrot.lane.b32.xlu0 %v2919, 28
        %v2935 = vpop.permute.xlu0 %2934
        %2936 = vrot.lane.b32.xlu0 %v2918, 28
        %v2937 = vpop.permute.xlu0 %2936
        %2938 = vrot.lane.b32.xlu0 %v2920, 28
        %v2939 = vpop.permute.xlu0 %2938
        %2940 = vrot.lane.b32.xlu0 %v2922, 28
        %v2941 = vpop.permute.xlu0 %2940
        %2942 = vrot.lane.b32.xlu0 %v2921, 28
        %v2943 = vpop.permute.xlu0 %2942
        %2944 = vrot.lane.b32.xlu0 %v2923, 28
        %v2945 = vpop.permute.xlu0 %2944
        %2946 = vrot.lane.b32.xlu0 %v2925, 28
        %v2947 = vpop.permute.xlu0 %2946
        %2948 = vrot.lane.b32.xlu0 %v2924, 28
        %v2949 = vpop.permute.xlu0 %2948
        %vm2962 = vcmask 343268
        %2963 = vst.msk [vmem:[%s702 + $0x30] sm:$0xf0] %vm2962, %v2927
        %2964 = vst.msk [vmem:[%s702 + $0x40] sm:$0xff] %vm824, %v2929
        %vm2965 = vcmask 337120
        %2966 = vst.msk [vmem:[%s702 + $0x50] sm:$0x3] %vm2965, %v2931
        %2967 = vst.msk [vmem:[%s702 + $0xa0] sm:$0xf0] %vm2962, %v2933
        %2968 = vst.msk [vmem:[%s702 + $0xb0] sm:$0xff] %vm824, %v2935
        %2969 = vst.msk [vmem:[%s702 + $0xc0] sm:$0x3] %vm2965, %v2937
        %2970 = vst.msk [vmem:[%s702 + $0x110] sm:$0xf0] %vm2962, %v2939
        %2971 = vst.msk [vmem:[%s702 + $0x120] sm:$0xff] %vm824, %v2941
        %2972 = vst.msk [vmem:[%s702 + $0x130] sm:$0x3] %vm2965, %v2943
        %2973 = vst.msk [vmem:[%s702 + $0x180] sm:$0xf0] %vm2962, %v2945
        %2974 = vst.msk [vmem:[%s702 + $0x190] sm:$0xff] %vm824, %v2947
        %2975 = vst.msk [vmem:[%s702 + $0x1a0] sm:$0x3] %vm2965, %v2949
        %s2976 = scalar_lea.vmem %s686, 2240 [#allocation2]
        %v2977 = vld [vmem:[%s2976] sm:$0xff]
        %v2978 = vld [vmem:[%s2976 + $0x8] sm:$0x3f]
        %v2979 = vld [vmem:[%s2976 + $0x10] sm:$0xff]
        %v2980 = vld [vmem:[%s2976 + $0x18] sm:$0x3f]
        %v2981 = vld [vmem:[%s2976 + $0x20] sm:$0xff]
        %v2982 = vld [vmem:[%s2976 + $0x28] sm:$0x3f]
        %v2983 = vld [vmem:[%s2976 + $0x30] sm:$0xff]
        %v2984 = vld [vmem:[%s2976 + $0x38] sm:$0x3f]
        %v2993 = vrot.slane %v2977, 4
        %v2994 = vrot.slane %v2978, 4
        %v2995 = vsel %vm2779, %v2993, %v2994
        %v2996 = vrot.slane %v2979, 4
        %v2997 = vrot.slane %v2980, 4
        %v2998 = vsel %vm2779, %v2996, %v2997
        %v2999 = vrot.slane %v2981, 4
        %v3000 = vrot.slane %v2982, 4
        %v3001 = vsel %vm2779, %v2999, %v3000
        %v3002 = vrot.slane %v2983, 4
        %v3003 = vrot.slane %v2984, 4
        %v3004 = vsel %vm2779, %v3002, %v3003
        %3005 = vrot.lane.b32.xlu0 %v2993, 42
        %v3006 = vpop.permute.xlu0 %3005
        %3007 = vrot.lane.b32.xlu0 %v2995, 42
        %v3008 = vpop.permute.xlu0 %3007
        %3009 = vrot.lane.b32.xlu0 %v2994, 42
        %v3010 = vpop.permute.xlu0 %3009
        %3011 = vrot.lane.b32.xlu0 %v2996, 42
        %v3012 = vpop.permute.xlu0 %3011
        %3013 = vrot.lane.b32.xlu0 %v2998, 42
        %v3014 = vpop.permute.xlu0 %3013
        %3015 = vrot.lane.b32.xlu0 %v2997, 42
        %v3016 = vpop.permute.xlu0 %3015
        %3017 = vrot.lane.b32.xlu0 %v2999, 42
        %v3018 = vpop.permute.xlu0 %3017
        %3019 = vrot.lane.b32.xlu0 %v3001, 42
        %v3020 = vpop.permute.xlu0 %3019
        %3021 = vrot.lane.b32.xlu0 %v3000, 42
        %v3022 = vpop.permute.xlu0 %3021
        %3023 = vrot.lane.b32.xlu0 %v3002, 42
        %v3024 = vpop.permute.xlu0 %3023
        %3025 = vrot.lane.b32.xlu0 %v3004, 42
        %v3026 = vpop.permute.xlu0 %3025
        %3027 = vrot.lane.b32.xlu0 %v3003, 42
        %v3028 = vpop.permute.xlu0 %3027
        %vm3041 = vcmask 458068
        %3042 = vst.msk [vmem:[%s702 + $0x30] sm:$0xf0] %vm3041, %v3006
        %3043 = vst.msk [vmem:[%s702 + $0x40] sm:$0xff] %vm875, %v3008
        %vm3044 = vcmask 451920
        %3045 = vst.msk [vmem:[%s702 + $0x50] sm:$0x3] %vm3044, %v3010
        %3046 = vst.msk [vmem:[%s702 + $0xa0] sm:$0xf0] %vm3041, %v3012
        %3047 = vst.msk [vmem:[%s702 + $0xb0] sm:$0xff] %vm875, %v3014
        %3048 = vst.msk [vmem:[%s702 + $0xc0] sm:$0x3] %vm3044, %v3016
        %3049 = vst.msk [vmem:[%s702 + $0x110] sm:$0xf0] %vm3041, %v3018
        %3050 = vst.msk [vmem:[%s702 + $0x120] sm:$0xff] %vm875, %v3020
        %3051 = vst.msk [vmem:[%s702 + $0x130] sm:$0x3] %vm3044, %v3022
        %3052 = vst.msk [vmem:[%s702 + $0x180] sm:$0xf0] %vm3041, %v3024
        %3053 = vst.msk [vmem:[%s702 + $0x190] sm:$0xff] %vm875, %v3026
        %3054 = vst.msk [vmem:[%s702 + $0x1a0] sm:$0x3] %vm3044, %v3028
        %s3055 = scalar_lea.vmem %s686, 2304 [#allocation2]
        %v3056 = vld [vmem:[%s3055] sm:$0xff]
        %v3057 = vld [vmem:[%s3055 + $0x8] sm:$0x3f]
        %v3058 = vld [vmem:[%s3055 + $0x10] sm:$0xff]
        %v3059 = vld [vmem:[%s3055 + $0x18] sm:$0x3f]
        %v3060 = vld [vmem:[%s3055 + $0x20] sm:$0xff]
        %v3061 = vld [vmem:[%s3055 + $0x28] sm:$0x3f]
        %v3062 = vld [vmem:[%s3055 + $0x30] sm:$0xff]
        %v3063 = vld [vmem:[%s3055 + $0x38] sm:$0x3f]
        %v3072 = vrot.slane %v3056, 4
        %v3073 = vrot.slane %v3057, 4
        %v3074 = vsel %vm2779, %v3072, %v3073
        %v3075 = vrot.slane %v3058, 4
        %v3076 = vrot.slane %v3059, 4
        %v3077 = vsel %vm2779, %v3075, %v3076
        %v3078 = vrot.slane %v3060, 4
        %v3079 = vrot.slane %v3061, 4
        %v3080 = vsel %vm2779, %v3078, %v3079
        %v3081 = vrot.slane %v3062, 4
        %v3082 = vrot.slane %v3063, 4
        %v3083 = vsel %vm2779, %v3081, %v3082
        %3084 = vrot.lane.b32.xlu0 %v3072, 56
        %v3085 = vpop.permute.xlu0 %3084
        %3086 = vrot.lane.b32.xlu0 %v3074, 56
        %v3087 = vpop.permute.xlu0 %3086
        %3088 = vrot.lane.b32.xlu0 %v3073, 56
        %v3089 = vpop.permute.xlu0 %3088
        %3090 = vrot.lane.b32.xlu0 %v3075, 56
        %v3091 = vpop.permute.xlu0 %3090
        %3092 = vrot.lane.b32.xlu0 %v3077, 56
        %v3093 = vpop.permute.xlu0 %3092
        %3094 = vrot.lane.b32.xlu0 %v3076, 56
        %v3095 = vpop.permute.xlu0 %3094
        %3096 = vrot.lane.b32.xlu0 %v3078, 56
        %v3097 = vpop.permute.xlu0 %3096
        %3098 = vrot.lane.b32.xlu0 %v3080, 56
        %v3099 = vpop.permute.xlu0 %3098
        %3100 = vrot.lane.b32.xlu0 %v3079, 56
        %v3101 = vpop.permute.xlu0 %3100
        %3102 = vrot.lane.b32.xlu0 %v3081, 56
        %v3103 = vpop.permute.xlu0 %3102
        %3104 = vrot.lane.b32.xlu0 %v3083, 56
        %v3105 = vpop.permute.xlu0 %3104
        %3106 = vrot.lane.b32.xlu0 %v3082, 56
        %v3107 = vpop.permute.xlu0 %3106
        %vm3120 = vcmask 572868
        %3121 = vst.msk [vmem:[%s702 + $0x30] sm:$0xf0] %vm3120, %v3085
        %3122 = vst.msk [vmem:[%s702 + $0x40] sm:$0xff] %vm926, %v3087
        %vm3123 = vcmask 566720
        %3124 = vst.msk [vmem:[%s702 + $0x50] sm:$0x3] %vm3123, %v3089
        %3125 = vst.msk [vmem:[%s702 + $0xa0] sm:$0xf0] %vm3120, %v3091
        %3126 = vst.msk [vmem:[%s702 + $0xb0] sm:$0xff] %vm926, %v3093
        %3127 = vst.msk [vmem:[%s702 + $0xc0] sm:$0x3] %vm3123, %v3095
        %3128 = vst.msk [vmem:[%s702 + $0x110] sm:$0xf0] %vm3120, %v3097
        %3129 = vst.msk [vmem:[%s702 + $0x120] sm:$0xff] %vm926, %v3099
        %3130 = vst.msk [vmem:[%s702 + $0x130] sm:$0x3] %vm3123, %v3101
        %3131 = vst.msk [vmem:[%s702 + $0x180] sm:$0xf0] %vm3120, %v3103
        %3132 = vst.msk [vmem:[%s702 + $0x190] sm:$0xff] %vm926, %v3105
        %3133 = vst.msk [vmem:[%s702 + $0x1a0] sm:$0x3] %vm3123, %v3107
        %s3134 = scalar_lea.vmem %s686, 2368 [#allocation2]
        %v3135 = vld [vmem:[%s3134] sm:$0xff]
        %v3136 = vld [vmem:[%s3134 + $0x8] sm:$0x3f]
        %v3137 = vld [vmem:[%s3134 + $0x10] sm:$0xff]
        %v3138 = vld [vmem:[%s3134 + $0x18] sm:$0x3f]
        %v3139 = vld [vmem:[%s3134 + $0x20] sm:$0xff]
        %v3140 = vld [vmem:[%s3134 + $0x28] sm:$0x3f]
        %v3141 = vld [vmem:[%s3134 + $0x30] sm:$0xff]
        %v3142 = vld [vmem:[%s3134 + $0x38] sm:$0x3f]
        %v3151 = vrot.slane %v3135, 4
        %v3152 = vrot.slane %v3136, 4
        %v3153 = vsel %vm2779, %v3151, %v3152
        %v3154 = vrot.slane %v3137, 4
        %v3155 = vrot.slane %v3138, 4
        %v3156 = vsel %vm2779, %v3154, %v3155
        %v3157 = vrot.slane %v3139, 4
        %v3158 = vrot.slane %v3140, 4
        %v3159 = vsel %vm2779, %v3157, %v3158
        %v3160 = vrot.slane %v3141, 4
        %v3161 = vrot.slane %v3142, 4
        %v3162 = vsel %vm2779, %v3160, %v3161
        %3163 = vrot.lane.b32.xlu0 %v3151, 70
        %v3164 = vpop.permute.xlu0 %3163
        %3165 = vrot.lane.b32.xlu0 %v3153, 70
        %v3166 = vpop.permute.xlu0 %3165
        %3167 = vrot.lane.b32.xlu0 %v3152, 70
        %v3168 = vpop.permute.xlu0 %3167
        %3169 = vrot.lane.b32.xlu0 %v3154, 70
        %v3170 = vpop.permute.xlu0 %3169
        %3171 = vrot.lane.b32.xlu0 %v3156, 70
        %v3172 = vpop.permute.xlu0 %3171
        %3173 = vrot.lane.b32.xlu0 %v3155, 70
        %v3174 = vpop.permute.xlu0 %3173
        %3175 = vrot.lane.b32.xlu0 %v3157, 70
        %v3176 = vpop.permute.xlu0 %3175
        %3177 = vrot.lane.b32.xlu0 %v3159, 70
        %v3178 = vpop.permute.xlu0 %3177
        %3179 = vrot.lane.b32.xlu0 %v3158, 70
        %v3180 = vpop.permute.xlu0 %3179
        %3181 = vrot.lane.b32.xlu0 %v3160, 70
        %v3182 = vpop.permute.xlu0 %3181
        %3183 = vrot.lane.b32.xlu0 %v3162, 70
        %v3184 = vpop.permute.xlu0 %3183
        %3185 = vrot.lane.b32.xlu0 %v3161, 70
        %v3186 = vpop.permute.xlu0 %3185
        %vm3199 = vcmask 687668
        %3200 = vst.msk [vmem:[%s702 + $0x30] sm:$0xf0] %vm3199, %v3164
        %3201 = vst.msk [vmem:[%s702 + $0x40] sm:$0xff] %vm977, %v3166
        %vm3202 = vcmask 681520
        %3203 = vst.msk [vmem:[%s702 + $0x50] sm:$0x3] %vm3202, %v3168
        %3204 = vst.msk [vmem:[%s702 + $0xa0] sm:$0xf0] %vm3199, %v3170
        %3205 = vst.msk [vmem:[%s702 + $0xb0] sm:$0xff] %vm977, %v3172
        %3206 = vst.msk [vmem:[%s702 + $0xc0] sm:$0x3] %vm3202, %v3174
        %3207 = vst.msk [vmem:[%s702 + $0x110] sm:$0xf0] %vm3199, %v3176
        %3208 = vst.msk [vmem:[%s702 + $0x120] sm:$0xff] %vm977, %v3178
        %3209 = vst.msk [vmem:[%s702 + $0x130] sm:$0x3] %vm3202, %v3180
        %3210 = vst.msk [vmem:[%s702 + $0x180] sm:$0xf0] %vm3199, %v3182
        %3211 = vst.msk [vmem:[%s702 + $0x190] sm:$0xff] %vm977, %v3184
        %3212 = vst.msk [vmem:[%s702 + $0x1a0] sm:$0x3] %vm3202, %v3186
        %s3213 = scalar_lea.vmem %s686, 2432 [#allocation2]
        %v3214 = vld [vmem:[%s3213] sm:$0xff]
        %v3215 = vld [vmem:[%s3213 + $0x8] sm:$0x3f]
        %v3216 = vld [vmem:[%s3213 + $0x10] sm:$0xff]
        %v3217 = vld [vmem:[%s3213 + $0x18] sm:$0x3f]
        %v3218 = vld [vmem:[%s3213 + $0x20] sm:$0xff]
        %v3219 = vld [vmem:[%s3213 + $0x28] sm:$0x3f]
        %v3220 = vld [vmem:[%s3213 + $0x30] sm:$0xff]
        %v3221 = vld [vmem:[%s3213 + $0x38] sm:$0x3f]
        %v3230 = vrot.slane %v3214, 4
        %v3231 = vrot.slane %v3215, 4
        %v3232 = vsel %vm2779, %v3230, %v3231
        %v3233 = vrot.slane %v3216, 4
        %v3234 = vrot.slane %v3217, 4
        %v3235 = vsel %vm2779, %v3233, %v3234
        %v3236 = vrot.slane %v3218, 4
        %v3237 = vrot.slane %v3219, 4
        %v3238 = vsel %vm2779, %v3236, %v3237
        %v3239 = vrot.slane %v3220, 4
        %v3240 = vrot.slane %v3221, 4
        %v3241 = vsel %vm2779, %v3239, %v3240
        %3242 = vrot.lane.b32.xlu0 %v3230, 84
        %v3243 = vpop.permute.xlu0 %3242
        %3244 = vrot.lane.b32.xlu0 %v3232, 84
        %v3245 = vpop.permute.xlu0 %3244
        %3246 = vrot.lane.b32.xlu0 %v3231, 84
        %v3247 = vpop.permute.xlu0 %3246
        %3248 = vrot.lane.b32.xlu0 %v3233, 84
        %v3249 = vpop.permute.xlu0 %3248
        %3250 = vrot.lane.b32.xlu0 %v3235, 84
        %v3251 = vpop.permute.xlu0 %3250
        %3252 = vrot.lane.b32.xlu0 %v3234, 84
        %v3253 = vpop.permute.xlu0 %3252
        %3254 = vrot.lane.b32.xlu0 %v3236, 84
        %v3255 = vpop.permute.xlu0 %3254
        %3256 = vrot.lane.b32.xlu0 %v3238, 84
        %v3257 = vpop.permute.xlu0 %3256
        %3258 = vrot.lane.b32.xlu0 %v3237, 84
        %v3259 = vpop.permute.xlu0 %3258
        %3260 = vrot.lane.b32.xlu0 %v3239, 84
        %v3261 = vpop.permute.xlu0 %3260
        %3262 = vrot.lane.b32.xlu0 %v3241, 84
        %v3263 = vpop.permute.xlu0 %3262
        %3264 = vrot.lane.b32.xlu0 %v3240, 84
        %v3265 = vpop.permute.xlu0 %3264
        %vm3278 = vcmask 802468
        %3279 = vst.msk [vmem:[%s702 + $0x30] sm:$0xf0] %vm3278, %v3243
        %3280 = vst.msk [vmem:[%s702 + $0x40] sm:$0xff] %vm1028, %v3245
        %vm3281 = vcmask 796320
        %3282 = vst.msk [vmem:[%s702 + $0x50] sm:$0x3] %vm3281, %v3247
        %3283 = vst.msk [vmem:[%s702 + $0xa0] sm:$0xf0] %vm3278, %v3249
        %3284 = vst.msk [vmem:[%s702 + $0xb0] sm:$0xff] %vm1028, %v3251
        %3285 = vst.msk [vmem:[%s702 + $0xc0] sm:$0x3] %vm3281, %v3253
        %3286 = vst.msk [vmem:[%s702 + $0x110] sm:$0xf0] %vm3278, %v3255
        %3287 = vst.msk [vmem:[%s702 + $0x120] sm:$0xff] %vm1028, %v3257
        %3288 = vst.msk [vmem:[%s702 + $0x130] sm:$0x3] %vm3281, %v3259
        %3289 = vst.msk [vmem:[%s702 + $0x180] sm:$0xf0] %vm3278, %v3261
        %3290 = vst.msk [vmem:[%s702 + $0x190] sm:$0xff] %vm1028, %v3263
        %3291 = vst.msk [vmem:[%s702 + $0x1a0] sm:$0x3] %vm3281, %v3265
        %s3292 = scalar_lea.vmem %s686, 2496 [#allocation2]
        %v3293 = vld [vmem:[%s3292] sm:$0xff]
        %v3294 = vld [vmem:[%s3292 + $0x8] sm:$0x3f]
        %v3295 = vld [vmem:[%s3292 + $0x10] sm:$0xff]
        %v3296 = vld [vmem:[%s3292 + $0x18] sm:$0x3f]
        %v3297 = vld [vmem:[%s3292 + $0x20] sm:$0xff]
        %v3298 = vld [vmem:[%s3292 + $0x28] sm:$0x3f]
        %v3299 = vld [vmem:[%s3292 + $0x30] sm:$0xff]
        %v3300 = vld [vmem:[%s3292 + $0x38] sm:$0x3f]
        %v3309 = vrot.slane %v3293, 4
        %v3310 = vrot.slane %v3294, 4
        %v3311 = vsel %vm2779, %v3309, %v3310
        %v3312 = vrot.slane %v3295, 4
        %v3313 = vrot.slane %v3296, 4
        %v3314 = vsel %vm2779, %v3312, %v3313
        %v3315 = vrot.slane %v3297, 4
        %v3316 = vrot.slane %v3298, 4
        %v3317 = vsel %vm2779, %v3315, %v3316
        %v3318 = vrot.slane %v3299, 4
        %v3319 = vrot.slane %v3300, 4
        %v3320 = vsel %vm2779, %v3318, %v3319
        %3321 = vrot.lane.b32.xlu0 %v3309, 98
        %v3322 = vpop.permute.xlu0 %3321
        %3323 = vrot.lane.b32.xlu0 %v3311, 98
        %v3324 = vpop.permute.xlu0 %3323
        %3325 = vrot.lane.b32.xlu0 %v3310, 98
        %v3326 = vpop.permute.xlu0 %3325
        %3327 = vrot.lane.b32.xlu0 %v3312, 98
        %v3328 = vpop.permute.xlu0 %3327
        %3329 = vrot.lane.b32.xlu0 %v3314, 98
        %v3330 = vpop.permute.xlu0 %3329
        %3331 = vrot.lane.b32.xlu0 %v3313, 98
        %v3332 = vpop.permute.xlu0 %3331
        %3333 = vrot.lane.b32.xlu0 %v3315, 98
        %v3334 = vpop.permute.xlu0 %3333
        %3335 = vrot.lane.b32.xlu0 %v3317, 98
        %v3336 = vpop.permute.xlu0 %3335
        %3337 = vrot.lane.b32.xlu0 %v3316, 98
        %v3338 = vpop.permute.xlu0 %3337
        %3339 = vrot.lane.b32.xlu0 %v3318, 98
        %v3340 = vpop.permute.xlu0 %3339
        %3341 = vrot.lane.b32.xlu0 %v3320, 98
        %v3342 = vpop.permute.xlu0 %3341
        %3343 = vrot.lane.b32.xlu0 %v3319, 98
        %v3344 = vpop.permute.xlu0 %3343
        %vm3357 = vcmask 917268
        %3358 = vst.msk [vmem:[%s702 + $0x30] sm:$0xf0] %vm3357, %v3322
        %3359 = vst.msk [vmem:[%s702 + $0x40] sm:$0xff] %vm1079, %v3324
        %vm3360 = vcmask 911120
        %3361 = vst.msk [vmem:[%s702 + $0x50] sm:$0x3] %vm3360, %v3326
        %3362 = vst.msk [vmem:[%s702 + $0xa0] sm:$0xf0] %vm3357, %v3328
        %3363 = vst.msk [vmem:[%s702 + $0xb0] sm:$0xff] %vm1079, %v3330
        %3364 = vst.msk [vmem:[%s702 + $0xc0] sm:$0x3] %vm3360, %v3332
        %3365 = vst.msk [vmem:[%s702 + $0x110] sm:$0xf0] %vm3357, %v3334
        %3366 = vst.msk [vmem:[%s702 + $0x120] sm:$0xff] %vm1079, %v3336
        %3367 = vst.msk [vmem:[%s702 + $0x130] sm:$0x3] %vm3360, %v3338
        %3368 = vst.msk [vmem:[%s702 + $0x180] sm:$0xf0] %vm3357, %v3340
        %3369 = vst.msk [vmem:[%s702 + $0x190] sm:$0xff] %vm1079, %v3342
        %3370 = vst.msk [vmem:[%s702 + $0x1a0] sm:$0x3] %vm3360, %v3344
        %s3371 = scalar_lea.vmem %s686, 2560 [#allocation2]
        %v3372 = vld [vmem:[%s3371] sm:$0xff]
        %v3373 = vld [vmem:[%s3371 + $0x8] sm:$0x3f]
        %v3374 = vld [vmem:[%s3371 + $0x10] sm:$0xff]
        %v3375 = vld [vmem:[%s3371 + $0x18] sm:$0x3f]
        %v3376 = vld [vmem:[%s3371 + $0x20] sm:$0xff]
        %v3377 = vld [vmem:[%s3371 + $0x28] sm:$0x3f]
        %v3378 = vld [vmem:[%s3371 + $0x30] sm:$0xff]
        %v3379 = vld [vmem:[%s3371 + $0x38] sm:$0x3f]
        %v3388 = vrot.slane %v3372, 4
        %v3389 = vrot.slane %v3373, 4
        %v3390 = vsel %vm2779, %v3388, %v3389
        %v3391 = vrot.slane %v3374, 4
        %v3392 = vrot.slane %v3375, 4
        %v3393 = vsel %vm2779, %v3391, %v3392
        %v3394 = vrot.slane %v3376, 4
        %v3395 = vrot.slane %v3377, 4
        %v3396 = vsel %vm2779, %v3394, %v3395
        %v3397 = vrot.slane %v3378, 4
        %v3398 = vrot.slane %v3379, 4
        %v3399 = vsel %vm2779, %v3397, %v3398
        %3400 = vrot.lane.b32.xlu0 %v3388, 112
        %v3401 = vpop.permute.xlu0 %3400
        %3402 = vrot.lane.b32.xlu0 %v3390, 112
        %v3403 = vpop.permute.xlu0 %3402
        %3404 = vrot.lane.b32.xlu0 %v3389, 112
        %v3405 = vpop.permute.xlu0 %3404
        %3406 = vrot.lane.b32.xlu0 %v3391, 112
        %v3407 = vpop.permute.xlu0 %3406
        %3408 = vrot.lane.b32.xlu0 %v3393, 112
        %v3409 = vpop.permute.xlu0 %3408
        %3410 = vrot.lane.b32.xlu0 %v3392, 112
        %v3411 = vpop.permute.xlu0 %3410
        %3412 = vrot.lane.b32.xlu0 %v3394, 112
        %v3413 = vpop.permute.xlu0 %3412
        %3414 = vrot.lane.b32.xlu0 %v3396, 112
        %v3415 = vpop.permute.xlu0 %3414
        %3416 = vrot.lane.b32.xlu0 %v3395, 112
        %v3417 = vpop.permute.xlu0 %3416
        %3418 = vrot.lane.b32.xlu0 %v3397, 112
        %v3419 = vpop.permute.xlu0 %3418
        %3420 = vrot.lane.b32.xlu0 %v3399, 112
        %v3421 = vpop.permute.xlu0 %3420
        %3422 = vrot.lane.b32.xlu0 %v3398, 112
        %v3423 = vpop.permute.xlu0 %3422
        %vm3436 = vcmask 1032068
        %3437 = vst.msk [vmem:[%s702 + $0x30] sm:$0xf0] %vm3436, %v3401
        %3438 = vst.msk [vmem:[%s702 + $0x40] sm:$0xff] %vm1130, %v3403
        %vm3439 = vcmask 1025920
        %3440 = vst.msk [vmem:[%s702 + $0x50] sm:$0x3] %vm3439, %v3405
        %3441 = vst.msk [vmem:[%s702 + $0xa0] sm:$0xf0] %vm3436, %v3407
        %3442 = vst.msk [vmem:[%s702 + $0xb0] sm:$0xff] %vm1130, %v3409
        %3443 = vst.msk [vmem:[%s702 + $0xc0] sm:$0x3] %vm3439, %v3411
        %3444 = vst.msk [vmem:[%s702 + $0x110] sm:$0xf0] %vm3436, %v3413
        %3445 = vst.msk [vmem:[%s702 + $0x120] sm:$0xff] %vm1130, %v3415
        %3446 = vst.msk [vmem:[%s702 + $0x130] sm:$0x3] %vm3439, %v3417
        %3447 = vst.msk [vmem:[%s702 + $0x180] sm:$0xf0] %vm3436, %v3419
        %3448 = vst.msk [vmem:[%s702 + $0x190] sm:$0xff] %vm1130, %v3421
        %3449 = vst.msk [vmem:[%s702 + $0x1a0] sm:$0x3] %vm3439, %v3423
        %s3450 = scalar_lea.vmem %s686, 2624 [#allocation2]
        %v3451 = vld [vmem:[%s3450] sm:$0xff]
        %v3452 = vld [vmem:[%s3450 + $0x8] sm:$0x3f]
        %v3453 = vld [vmem:[%s3450 + $0x10] sm:$0xff]
        %v3454 = vld [vmem:[%s3450 + $0x18] sm:$0x3f]
        %v3455 = vld [vmem:[%s3450 + $0x20] sm:$0xff]
        %v3456 = vld [vmem:[%s3450 + $0x28] sm:$0x3f]
        %v3457 = vld [vmem:[%s3450 + $0x30] sm:$0xff]
        %v3458 = vld [vmem:[%s3450 + $0x38] sm:$0x3f]
        %v3467 = vrot.slane %v3451, 4
        %v3468 = vrot.slane %v3452, 4
        %v3469 = vsel %vm2779, %v3467, %v3468
        %v3470 = vrot.slane %v3453, 4
        %v3471 = vrot.slane %v3454, 4
        %v3472 = vsel %vm2779, %v3470, %v3471
        %v3473 = vrot.slane %v3455, 4
        %v3474 = vrot.slane %v3456, 4
        %v3475 = vsel %vm2779, %v3473, %v3474
        %v3476 = vrot.slane %v3457, 4
        %v3477 = vrot.slane %v3458, 4
        %v3478 = vsel %vm2779, %v3476, %v3477
        %3479 = vrot.lane.b32.xlu0 %v3467, 126
        %v3480 = vpop.permute.xlu0 %3479
        %3481 = vrot.lane.b32.xlu0 %v3469, 126
        %v3482 = vpop.permute.xlu0 %3481
        %3483 = vrot.lane.b32.xlu0 %v3468, 126
        %v3484 = vpop.permute.xlu0 %3483
        %3485 = vrot.lane.b32.xlu0 %v3470, 126
        %v3486 = vpop.permute.xlu0 %3485
        %3487 = vrot.lane.b32.xlu0 %v3472, 126
        %v3488 = vpop.permute.xlu0 %3487
        %3489 = vrot.lane.b32.xlu0 %v3471, 126
        %v3490 = vpop.permute.xlu0 %3489
        %3491 = vrot.lane.b32.xlu0 %v3473, 126
        %v3492 = vpop.permute.xlu0 %3491
        %3493 = vrot.lane.b32.xlu0 %v3475, 126
        %v3494 = vpop.permute.xlu0 %3493
        %3495 = vrot.lane.b32.xlu0 %v3474, 126
        %v3496 = vpop.permute.xlu0 %3495
        %3497 = vrot.lane.b32.xlu0 %v3476, 126
        %v3498 = vpop.permute.xlu0 %3497
        %3499 = vrot.lane.b32.xlu0 %v3478, 126
        %v3500 = vpop.permute.xlu0 %3499
        %3501 = vrot.lane.b32.xlu0 %v3477, 126
        %v3502 = vpop.permute.xlu0 %3501
        %vm3515 = vcmask 1048564
        %3516 = vst.msk [vmem:[%s702 + $0x30] sm:$0xf0] %vm3515, %v3480
        %vm3517 = vcmask 97284
        %3518 = vst.msk [vmem:[%s702 + $0x38] sm:$0xf0] %vm3517, %v3480
        %3519 = vst.msk [vmem:[%s702 + $0x40] sm:$0xff] %vm1181, %v3482
        %3520 = vst.msk [vmem:[%s702 + $0x48] sm:$0xff] %vm1183, %v3482
        %vm3521 = vcmask 1042416
        %3522 = vst.msk [vmem:[%s702 + $0x50] sm:$0x3] %vm3521, %v3484
        %vm3523 = vcmask 91136
        %3524 = vst.msk [vmem:[%s702 + $0x58] sm:$0x3] %vm3523, %v3484
        %3525 = vst.msk [vmem:[%s702 + $0xa0] sm:$0xf0] %vm3515, %v3486
        %3526 = vst.msk [vmem:[%s702 + $0xa8] sm:$0xf0] %vm3517, %v3486
        %3527 = vst.msk [vmem:[%s702 + $0xb0] sm:$0xff] %vm1181, %v3488
        %3528 = vst.msk [vmem:[%s702 + $0xb8] sm:$0xff] %vm1183, %v3488
        %3529 = vst.msk [vmem:[%s702 + $0xc0] sm:$0x3] %vm3521, %v3490
        %3530 = vst.msk [vmem:[%s702 + $0xc8] sm:$0x3] %vm3523, %v3490
        %3531 = vst.msk [vmem:[%s702 + $0x110] sm:$0xf0] %vm3515, %v3492
        %3532 = vst.msk [vmem:[%s702 + $0x118] sm:$0xf0] %vm3517, %v3492
        %3533 = vst.msk [vmem:[%s702 + $0x120] sm:$0xff] %vm1181, %v3494
        %3534 = vst.msk [vmem:[%s702 + $0x128] sm:$0xff] %vm1183, %v3494
        %3535 = vst.msk [vmem:[%s702 + $0x130] sm:$0x3] %vm3521, %v3496
        %3536 = vst.msk [vmem:[%s702 + $0x138] sm:$0x3] %vm3523, %v3496
        %3537 = vst.msk [vmem:[%s702 + $0x180] sm:$0xf0] %vm3515, %v3498
        %3538 = vst.msk [vmem:[%s702 + $0x188] sm:$0xf0] %vm3517, %v3498
        %3539 = vst.msk [vmem:[%s702 + $0x190] sm:$0xff] %vm1181, %v3500
        %3540 = vst.msk [vmem:[%s702 + $0x198] sm:$0xff] %vm1183, %v3500
        %3541 = vst.msk [vmem:[%s702 + $0x1a0] sm:$0x3] %vm3521, %v3502
        %3542 = vst.msk [vmem:[%s702 + $0x1a8] sm:$0x3] %vm3523, %v3502
        %s3543 = scalar_lea.vmem %s686, 2688 [#allocation2]
        %v3544 = vld [vmem:[%s3543] sm:$0xff]
        %v3545 = vld [vmem:[%s3543 + $0x8] sm:$0x3f]
        %v3546 = vld [vmem:[%s3543 + $0x10] sm:$0xff]
        %v3547 = vld [vmem:[%s3543 + $0x18] sm:$0x3f]
        %v3548 = vld [vmem:[%s3543 + $0x20] sm:$0xff]
        %v3549 = vld [vmem:[%s3543 + $0x28] sm:$0x3f]
        %v3550 = vld [vmem:[%s3543 + $0x30] sm:$0xff]
        %v3551 = vld [vmem:[%s3543 + $0x38] sm:$0x3f]
        %v3560 = vrot.slane %v3544, 4
        %v3561 = vrot.slane %v3545, 4
        %v3562 = vsel %vm2779, %v3560, %v3561
        %v3563 = vrot.slane %v3546, 4
        %v3564 = vrot.slane %v3547, 4
        %v3565 = vsel %vm2779, %v3563, %v3564
        %v3566 = vrot.slane %v3548, 4
        %v3567 = vrot.slane %v3549, 4
        %v3568 = vsel %vm2779, %v3566, %v3567
        %v3569 = vrot.slane %v3550, 4
        %v3570 = vrot.slane %v3551, 4
        %v3571 = vsel %vm2779, %v3569, %v3570
        %3572 = vrot.lane.b32.xlu0 %v3560, 12
        %v3573 = vpop.permute.xlu0 %3572
        %3574 = vrot.lane.b32.xlu0 %v3562, 12
        %v3575 = vpop.permute.xlu0 %3574
        %3576 = vrot.lane.b32.xlu0 %v3561, 12
        %v3577 = vpop.permute.xlu0 %3576
        %3578 = vrot.lane.b32.xlu0 %v3563, 12
        %v3579 = vpop.permute.xlu0 %3578
        %3580 = vrot.lane.b32.xlu0 %v3565, 12
        %v3581 = vpop.permute.xlu0 %3580
        %3582 = vrot.lane.b32.xlu0 %v3564, 12
        %v3583 = vpop.permute.xlu0 %3582
        %3584 = vrot.lane.b32.xlu0 %v3566, 12
        %v3585 = vpop.permute.xlu0 %3584
        %3586 = vrot.lane.b32.xlu0 %v3568, 12
        %v3587 = vpop.permute.xlu0 %3586
        %3588 = vrot.lane.b32.xlu0 %v3567, 12
        %v3589 = vpop.permute.xlu0 %3588
        %3590 = vrot.lane.b32.xlu0 %v3569, 12
        %v3591 = vpop.permute.xlu0 %3590
        %3592 = vrot.lane.b32.xlu0 %v3571, 12
        %v3593 = vpop.permute.xlu0 %3592
        %3594 = vrot.lane.b32.xlu0 %v3570, 12
        %v3595 = vpop.permute.xlu0 %3594
        %vm3608 = vcmask 212068
        %3609 = vst.msk [vmem:[%s702 + $0x38] sm:$0xf0] %vm3608, %v3573
        %3610 = vst.msk [vmem:[%s702 + $0x48] sm:$0xff] %vm1242, %v3575
        %vm3611 = vcmask 205920
        %3612 = vst.msk [vmem:[%s702 + $0x58] sm:$0x3] %vm3611, %v3577
        %3613 = vst.msk [vmem:[%s702 + $0xa8] sm:$0xf0] %vm3608, %v3579
        %3614 = vst.msk [vmem:[%s702 + $0xb8] sm:$0xff] %vm1242, %v3581
        %3615 = vst.msk [vmem:[%s702 + $0xc8] sm:$0x3] %vm3611, %v3583
        %3616 = vst.msk [vmem:[%s702 + $0x118] sm:$0xf0] %vm3608, %v3585
        %3617 = vst.msk [vmem:[%s702 + $0x128] sm:$0xff] %vm1242, %v3587
        %3618 = vst.msk [vmem:[%s702 + $0x138] sm:$0x3] %vm3611, %v3589
        %3619 = vst.msk [vmem:[%s702 + $0x188] sm:$0xf0] %vm3608, %v3591
        %3620 = vst.msk [vmem:[%s702 + $0x198] sm:$0xff] %vm1242, %v3593
        %3621 = vst.msk [vmem:[%s702 + $0x1a8] sm:$0x3] %vm3611, %v3595
        %s3622 = scalar_lea.vmem %s686, 2752 [#allocation2]
        %v3623 = vld [vmem:[%s3622] sm:$0xff]
        %v3624 = vld [vmem:[%s3622 + $0x8] sm:$0x3f]
        %v3625 = vld [vmem:[%s3622 + $0x10] sm:$0xff]
        %v3626 = vld [vmem:[%s3622 + $0x18] sm:$0x3f]
        %v3627 = vld [vmem:[%s3622 + $0x20] sm:$0xff]
        %v3628 = vld [vmem:[%s3622 + $0x28] sm:$0x3f]
        %v3629 = vld [vmem:[%s3622 + $0x30] sm:$0xff]
        %v3630 = vld [vmem:[%s3622 + $0x38] sm:$0x3f]
        %v3639 = vrot.slane %v3623, 4
        %v3640 = vrot.slane %v3624, 4
        %v3641 = vsel %vm2779, %v3639, %v3640
        %v3642 = vrot.slane %v3625, 4
        %v3643 = vrot.slane %v3626, 4
        %v3644 = vsel %vm2779, %v3642, %v3643
        %v3645 = vrot.slane %v3627, 4
        %v3646 = vrot.slane %v3628, 4
        %v3647 = vsel %vm2779, %v3645, %v3646
        %v3648 = vrot.slane %v3629, 4
        %v3649 = vrot.slane %v3630, 4
        %v3650 = vsel %vm2779, %v3648, %v3649
        %3651 = vrot.lane.b32.xlu0 %v3639, 26
        %v3652 = vpop.permute.xlu0 %3651
        %3653 = vrot.lane.b32.xlu0 %v3641, 26
        %v3654 = vpop.permute.xlu0 %3653
        %3655 = vrot.lane.b32.xlu0 %v3640, 26
        %v3656 = vpop.permute.xlu0 %3655
        %3657 = vrot.lane.b32.xlu0 %v3642, 26
        %v3658 = vpop.permute.xlu0 %3657
        %3659 = vrot.lane.b32.xlu0 %v3644, 26
        %v3660 = vpop.permute.xlu0 %3659
        %3661 = vrot.lane.b32.xlu0 %v3643, 26
        %v3662 = vpop.permute.xlu0 %3661
        %3663 = vrot.lane.b32.xlu0 %v3645, 26
        %v3664 = vpop.permute.xlu0 %3663
        %3665 = vrot.lane.b32.xlu0 %v3647, 26
        %v3666 = vpop.permute.xlu0 %3665
        %3667 = vrot.lane.b32.xlu0 %v3646, 26
        %v3668 = vpop.permute.xlu0 %3667
        %3669 = vrot.lane.b32.xlu0 %v3648, 26
        %v3670 = vpop.permute.xlu0 %3669
        %3671 = vrot.lane.b32.xlu0 %v3650, 26
        %v3672 = vpop.permute.xlu0 %3671
        %3673 = vrot.lane.b32.xlu0 %v3649, 26
        %v3674 = vpop.permute.xlu0 %3673
        %vm3687 = vcmask 326868
        %3688 = vst.msk [vmem:[%s702 + $0x38] sm:$0xf0] %vm3687, %v3652
        %3689 = vst.msk [vmem:[%s702 + $0x48] sm:$0xff] %vm1293, %v3654
        %vm3690 = vcmask 320720
        %3691 = vst.msk [vmem:[%s702 + $0x58] sm:$0x3] %vm3690, %v3656
        %3692 = vst.msk [vmem:[%s702 + $0xa8] sm:$0xf0] %vm3687, %v3658
        %3693 = vst.msk [vmem:[%s702 + $0xb8] sm:$0xff] %vm1293, %v3660
        %3694 = vst.msk [vmem:[%s702 + $0xc8] sm:$0x3] %vm3690, %v3662
        %3695 = vst.msk [vmem:[%s702 + $0x118] sm:$0xf0] %vm3687, %v3664
        %3696 = vst.msk [vmem:[%s702 + $0x128] sm:$0xff] %vm1293, %v3666
        %3697 = vst.msk [vmem:[%s702 + $0x138] sm:$0x3] %vm3690, %v3668
        %3698 = vst.msk [vmem:[%s702 + $0x188] sm:$0xf0] %vm3687, %v3670
        %3699 = vst.msk [vmem:[%s702 + $0x198] sm:$0xff] %vm1293, %v3672
        %3700 = vst.msk [vmem:[%s702 + $0x1a8] sm:$0x3] %vm3690, %v3674
        %s3701 = scalar_lea.vmem %s686, 2816 [#allocation2]
        %v3702 = vld [vmem:[%s3701] sm:$0xff]
        %v3703 = vld [vmem:[%s3701 + $0x8] sm:$0x3f]
        %v3704 = vld [vmem:[%s3701 + $0x10] sm:$0xff]
        %v3705 = vld [vmem:[%s3701 + $0x18] sm:$0x3f]
        %v3706 = vld [vmem:[%s3701 + $0x20] sm:$0xff]
        %v3707 = vld [vmem:[%s3701 + $0x28] sm:$0x3f]
        %v3708 = vld [vmem:[%s3701 + $0x30] sm:$0xff]
        %v3709 = vld [vmem:[%s3701 + $0x38] sm:$0x3f]
        %v3718 = vrot.slane %v3702, 4
        %v3719 = vrot.slane %v3703, 4
        %v3720 = vsel %vm2779, %v3718, %v3719
        %v3721 = vrot.slane %v3704, 4
        %v3722 = vrot.slane %v3705, 4
        %v3723 = vsel %vm2779, %v3721, %v3722
        %v3724 = vrot.slane %v3706, 4
        %v3725 = vrot.slane %v3707, 4
        %v3726 = vsel %vm2779, %v3724, %v3725
        %v3727 = vrot.slane %v3708, 4
        %v3728 = vrot.slane %v3709, 4
        %v3729 = vsel %vm2779, %v3727, %v3728
        %3730 = vrot.lane.b32.xlu0 %v3718, 40
        %v3731 = vpop.permute.xlu0 %3730
        %3732 = vrot.lane.b32.xlu0 %v3720, 40
        %v3733 = vpop.permute.xlu0 %3732
        %3734 = vrot.lane.b32.xlu0 %v3719, 40
        %v3735 = vpop.permute.xlu0 %3734
        %3736 = vrot.lane.b32.xlu0 %v3721, 40
        %v3737 = vpop.permute.xlu0 %3736
        %3738 = vrot.lane.b32.xlu0 %v3723, 40
        %v3739 = vpop.permute.xlu0 %3738
        %3740 = vrot.lane.b32.xlu0 %v3722, 40
        %v3741 = vpop.permute.xlu0 %3740
        %3742 = vrot.lane.b32.xlu0 %v3724, 40
        %v3743 = vpop.permute.xlu0 %3742
        %3744 = vrot.lane.b32.xlu0 %v3726, 40
        %v3745 = vpop.permute.xlu0 %3744
        %3746 = vrot.lane.b32.xlu0 %v3725, 40
        %v3747 = vpop.permute.xlu0 %3746
        %3748 = vrot.lane.b32.xlu0 %v3727, 40
        %v3749 = vpop.permute.xlu0 %3748
        %3750 = vrot.lane.b32.xlu0 %v3729, 40
        %v3751 = vpop.permute.xlu0 %3750
        %3752 = vrot.lane.b32.xlu0 %v3728, 40
        %v3753 = vpop.permute.xlu0 %3752
        %vm3766 = vcmask 441668
        %3767 = vst.msk [vmem:[%s702 + $0x38] sm:$0xf0] %vm3766, %v3731
        %3768 = vst.msk [vmem:[%s702 + $0x48] sm:$0xff] %vm1344, %v3733
        %vm3769 = vcmask 435520
        %3770 = vst.msk [vmem:[%s702 + $0x58] sm:$0x3] %vm3769, %v3735
        %3771 = vst.msk [vmem:[%s702 + $0xa8] sm:$0xf0] %vm3766, %v3737
        %3772 = vst.msk [vmem:[%s702 + $0xb8] sm:$0xff] %vm1344, %v3739
        %3773 = vst.msk [vmem:[%s702 + $0xc8] sm:$0x3] %vm3769, %v3741
        %3774 = vst.msk [vmem:[%s702 + $0x118] sm:$0xf0] %vm3766, %v3743
        %3775 = vst.msk [vmem:[%s702 + $0x128] sm:$0xff] %vm1344, %v3745
        %3776 = vst.msk [vmem:[%s702 + $0x138] sm:$0x3] %vm3769, %v3747
        %3777 = vst.msk [vmem:[%s702 + $0x188] sm:$0xf0] %vm3766, %v3749
        %3778 = vst.msk [vmem:[%s702 + $0x198] sm:$0xff] %vm1344, %v3751
        %3779 = vst.msk [vmem:[%s702 + $0x1a8] sm:$0x3] %vm3769, %v3753
        %s3780 = scalar_lea.vmem %s686, 2880 [#allocation2]
        %v3781 = vld [vmem:[%s3780] sm:$0xff]
        %v3782 = vld [vmem:[%s3780 + $0x8] sm:$0x3f]
        %v3783 = vld [vmem:[%s3780 + $0x10] sm:$0xff]
        %v3784 = vld [vmem:[%s3780 + $0x18] sm:$0x3f]
        %v3785 = vld [vmem:[%s3780 + $0x20] sm:$0xff]
        %v3786 = vld [vmem:[%s3780 + $0x28] sm:$0x3f]
        %v3787 = vld [vmem:[%s3780 + $0x30] sm:$0xff]
        %v3788 = vld [vmem:[%s3780 + $0x38] sm:$0x3f]
        %v3797 = vrot.slane %v3781, 4
        %v3798 = vrot.slane %v3782, 4
        %v3799 = vsel %vm2779, %v3797, %v3798
        %v3800 = vrot.slane %v3783, 4
        %v3801 = vrot.slane %v3784, 4
        %v3802 = vsel %vm2779, %v3800, %v3801
        %v3803 = vrot.slane %v3785, 4
        %v3804 = vrot.slane %v3786, 4
        %v3805 = vsel %vm2779, %v3803, %v3804
        %v3806 = vrot.slane %v3787, 4
        %v3807 = vrot.slane %v3788, 4
        %v3808 = vsel %vm2779, %v3806, %v3807
        %3809 = vrot.lane.b32.xlu0 %v3797, 54
        %v3810 = vpop.permute.xlu0 %3809
        %3811 = vrot.lane.b32.xlu0 %v3799, 54
        %v3812 = vpop.permute.xlu0 %3811
        %3813 = vrot.lane.b32.xlu0 %v3798, 54
        %v3814 = vpop.permute.xlu0 %3813
        %3815 = vrot.lane.b32.xlu0 %v3800, 54
        %v3816 = vpop.permute.xlu0 %3815
        %3817 = vrot.lane.b32.xlu0 %v3802, 54
        %v3818 = vpop.permute.xlu0 %3817
        %3819 = vrot.lane.b32.xlu0 %v3801, 54
        %v3820 = vpop.permute.xlu0 %3819
        %3821 = vrot.lane.b32.xlu0 %v3803, 54
        %v3822 = vpop.permute.xlu0 %3821
        %3823 = vrot.lane.b32.xlu0 %v3805, 54
        %v3824 = vpop.permute.xlu0 %3823
        %3825 = vrot.lane.b32.xlu0 %v3804, 54
        %v3826 = vpop.permute.xlu0 %3825
        %3827 = vrot.lane.b32.xlu0 %v3806, 54
        %v3828 = vpop.permute.xlu0 %3827
        %3829 = vrot.lane.b32.xlu0 %v3808, 54
        %v3830 = vpop.permute.xlu0 %3829
        %3831 = vrot.lane.b32.xlu0 %v3807, 54
        %v3832 = vpop.permute.xlu0 %3831
        %vm3845 = vcmask 556468
        %3846 = vst.msk [vmem:[%s702 + $0x38] sm:$0xf0] %vm3845, %v3810
        %3847 = vst.msk [vmem:[%s702 + $0x48] sm:$0xff] %vm1395, %v3812
        %vm3848 = vcmask 550320
        %3849 = vst.msk [vmem:[%s702 + $0x58] sm:$0x3] %vm3848, %v3814
        %3850 = vst.msk [vmem:[%s702 + $0xa8] sm:$0xf0] %vm3845, %v3816
        %3851 = vst.msk [vmem:[%s702 + $0xb8] sm:$0xff] %vm1395, %v3818
        %3852 = vst.msk [vmem:[%s702 + $0xc8] sm:$0x3] %vm3848, %v3820
        %3853 = vst.msk [vmem:[%s702 + $0x118] sm:$0xf0] %vm3845, %v3822
        %3854 = vst.msk [vmem:[%s702 + $0x128] sm:$0xff] %vm1395, %v3824
        %3855 = vst.msk [vmem:[%s702 + $0x138] sm:$0x3] %vm3848, %v3826
        %3856 = vst.msk [vmem:[%s702 + $0x188] sm:$0xf0] %vm3845, %v3828
        %3857 = vst.msk [vmem:[%s702 + $0x198] sm:$0xff] %vm1395, %v3830
        %3858 = vst.msk [vmem:[%s702 + $0x1a8] sm:$0x3] %vm3848, %v3832
        %s3859 = scalar_lea.vmem %s686, 2944 [#allocation2]
        %v3860 = vld [vmem:[%s3859] sm:$0xff]
        %v3861 = vld [vmem:[%s3859 + $0x8] sm:$0x3f]
        %v3862 = vld [vmem:[%s3859 + $0x10] sm:$0xff]
        %v3863 = vld [vmem:[%s3859 + $0x18] sm:$0x3f]
        %v3864 = vld [vmem:[%s3859 + $0x20] sm:$0xff]
        %v3865 = vld [vmem:[%s3859 + $0x28] sm:$0x3f]
        %v3866 = vld [vmem:[%s3859 + $0x30] sm:$0xff]
        %v3867 = vld [vmem:[%s3859 + $0x38] sm:$0x3f]
        %v3876 = vrot.slane %v3860, 4
        %v3877 = vrot.slane %v3861, 4
        %v3878 = vsel %vm2779, %v3876, %v3877
        %v3879 = vrot.slane %v3862, 4
        %v3880 = vrot.slane %v3863, 4
        %v3881 = vsel %vm2779, %v3879, %v3880
        %v3882 = vrot.slane %v3864, 4
        %v3883 = vrot.slane %v3865, 4
        %v3884 = vsel %vm2779, %v3882, %v3883
        %v3885 = vrot.slane %v3866, 4
        %v3886 = vrot.slane %v3867, 4
        %v3887 = vsel %vm2779, %v3885, %v3886
        %3888 = vrot.lane.b32.xlu0 %v3876, 68
        %v3889 = vpop.permute.xlu0 %3888
        %3890 = vrot.lane.b32.xlu0 %v3878, 68
        %v3891 = vpop.permute.xlu0 %3890
        %3892 = vrot.lane.b32.xlu0 %v3877, 68
        %v3893 = vpop.permute.xlu0 %3892
        %3894 = vrot.lane.b32.xlu0 %v3879, 68
        %v3895 = vpop.permute.xlu0 %3894
        %3896 = vrot.lane.b32.xlu0 %v3881, 68
        %v3897 = vpop.permute.xlu0 %3896
        %3898 = vrot.lane.b32.xlu0 %v3880, 68
        %v3899 = vpop.permute.xlu0 %3898
        %3900 = vrot.lane.b32.xlu0 %v3882, 68
        %v3901 = vpop.permute.xlu0 %3900
        %3902 = vrot.lane.b32.xlu0 %v3884, 68
        %v3903 = vpop.permute.xlu0 %3902
        %3904 = vrot.lane.b32.xlu0 %v3883, 68
        %v3905 = vpop.permute.xlu0 %3904
        %3906 = vrot.lane.b32.xlu0 %v3885, 68
        %v3907 = vpop.permute.xlu0 %3906
        %3908 = vrot.lane.b32.xlu0 %v3887, 68
        %v3909 = vpop.permute.xlu0 %3908
        %3910 = vrot.lane.b32.xlu0 %v3886, 68
        %v3911 = vpop.permute.xlu0 %3910
        %vm3924 = vcmask 671268
        %3925 = vst.msk [vmem:[%s702 + $0x38] sm:$0xf0] %vm3924, %v3889
        %3926 = vst.msk [vmem:[%s702 + $0x48] sm:$0xff] %vm1446, %v3891
        %vm3927 = vcmask 665120
        %3928 = vst.msk [vmem:[%s702 + $0x58] sm:$0x3] %vm3927, %v3893
        %3929 = vst.msk [vmem:[%s702 + $0xa8] sm:$0xf0] %vm3924, %v3895
        %3930 = vst.msk [vmem:[%s702 + $0xb8] sm:$0xff] %vm1446, %v3897
        %3931 = vst.msk [vmem:[%s702 + $0xc8] sm:$0x3] %vm3927, %v3899
        %3932 = vst.msk [vmem:[%s702 + $0x118] sm:$0xf0] %vm3924, %v3901
        %3933 = vst.msk [vmem:[%s702 + $0x128] sm:$0xff] %vm1446, %v3903
        %3934 = vst.msk [vmem:[%s702 + $0x138] sm:$0x3] %vm3927, %v3905
        %3935 = vst.msk [vmem:[%s702 + $0x188] sm:$0xf0] %vm3924, %v3907
        %3936 = vst.msk [vmem:[%s702 + $0x198] sm:$0xff] %vm1446, %v3909
        %3937 = vst.msk [vmem:[%s702 + $0x1a8] sm:$0x3] %vm3927, %v3911
        %s3938 = scalar_lea.vmem %s686, 3008 [#allocation2]
        %v3939 = vld [vmem:[%s3938] sm:$0xff]
        %v3940 = vld [vmem:[%s3938 + $0x8] sm:$0x3f]
        %v3941 = vld [vmem:[%s3938 + $0x10] sm:$0xff]
        %v3942 = vld [vmem:[%s3938 + $0x18] sm:$0x3f]
        %v3943 = vld [vmem:[%s3938 + $0x20] sm:$0xff]
        %v3944 = vld [vmem:[%s3938 + $0x28] sm:$0x3f]
        %v3945 = vld [vmem:[%s3938 + $0x30] sm:$0xff]
        %v3946 = vld [vmem:[%s3938 + $0x38] sm:$0x3f]
        %v3955 = vrot.slane %v3939, 4
        %v3956 = vrot.slane %v3940, 4
        %v3957 = vsel %vm2779, %v3955, %v3956
        %v3958 = vrot.slane %v3941, 4
        %v3959 = vrot.slane %v3942, 4
        %v3960 = vsel %vm2779, %v3958, %v3959
        %v3961 = vrot.slane %v3943, 4
        %v3962 = vrot.slane %v3944, 4
        %v3963 = vsel %vm2779, %v3961, %v3962
        %v3964 = vrot.slane %v3945, 4
        %v3965 = vrot.slane %v3946, 4
        %v3966 = vsel %vm2779, %v3964, %v3965
        %3967 = vrot.lane.b32.xlu0 %v3955, 82
        %v3968 = vpop.permute.xlu0 %3967
        %3969 = vrot.lane.b32.xlu0 %v3957, 82
        %v3970 = vpop.permute.xlu0 %3969
        %3971 = vrot.lane.b32.xlu0 %v3956, 82
        %v3972 = vpop.permute.xlu0 %3971
        %3973 = vrot.lane.b32.xlu0 %v3958, 82
        %v3974 = vpop.permute.xlu0 %3973
        %3975 = vrot.lane.b32.xlu0 %v3960, 82
        %v3976 = vpop.permute.xlu0 %3975
        %3977 = vrot.lane.b32.xlu0 %v3959, 82
        %v3978 = vpop.permute.xlu0 %3977
        %3979 = vrot.lane.b32.xlu0 %v3961, 82
        %v3980 = vpop.permute.xlu0 %3979
        %3981 = vrot.lane.b32.xlu0 %v3963, 82
        %v3982 = vpop.permute.xlu0 %3981
        %3983 = vrot.lane.b32.xlu0 %v3962, 82
        %v3984 = vpop.permute.xlu0 %3983
        %3985 = vrot.lane.b32.xlu0 %v3964, 82
        %v3986 = vpop.permute.xlu0 %3985
        %3987 = vrot.lane.b32.xlu0 %v3966, 82
        %v3988 = vpop.permute.xlu0 %3987
        %3989 = vrot.lane.b32.xlu0 %v3965, 82
        %v3990 = vpop.permute.xlu0 %3989
        %vm4003 = vcmask 786068
        %4004 = vst.msk [vmem:[%s702 + $0x38] sm:$0xf0] %vm4003, %v3968
        %4005 = vst.msk [vmem:[%s702 + $0x48] sm:$0xff] %vm1497, %v3970
        %vm4006 = vcmask 779920
        %4007 = vst.msk [vmem:[%s702 + $0x58] sm:$0x3] %vm4006, %v3972
        %4008 = vst.msk [vmem:[%s702 + $0xa8] sm:$0xf0] %vm4003, %v3974
        %4009 = vst.msk [vmem:[%s702 + $0xb8] sm:$0xff] %vm1497, %v3976
        %4010 = vst.msk [vmem:[%s702 + $0xc8] sm:$0x3] %vm4006, %v3978
        %4011 = vst.msk [vmem:[%s702 + $0x118] sm:$0xf0] %vm4003, %v3980
        %4012 = vst.msk [vmem:[%s702 + $0x128] sm:$0xff] %vm1497, %v3982
        %4013 = vst.msk [vmem:[%s702 + $0x138] sm:$0x3] %vm4006, %v3984
        %4014 = vst.msk [vmem:[%s702 + $0x188] sm:$0xf0] %vm4003, %v3986
        %4015 = vst.msk [vmem:[%s702 + $0x198] sm:$0xff] %vm1497, %v3988
        %4016 = vst.msk [vmem:[%s702 + $0x1a8] sm:$0x3] %vm4006, %v3990
        %s4017 = scalar_lea.vmem %s686, 3072 [#allocation2]
        %v4018 = vld [vmem:[%s4017] sm:$0xff]
        %v4019 = vld [vmem:[%s4017 + $0x8] sm:$0x3f]
        %v4020 = vld [vmem:[%s4017 + $0x10] sm:$0xff]
        %v4021 = vld [vmem:[%s4017 + $0x18] sm:$0x3f]
        %v4022 = vld [vmem:[%s4017 + $0x20] sm:$0xff]
        %v4023 = vld [vmem:[%s4017 + $0x28] sm:$0x3f]
        %v4024 = vld [vmem:[%s4017 + $0x30] sm:$0xff]
        %v4025 = vld [vmem:[%s4017 + $0x38] sm:$0x3f]
        %vm4034 = vcmask 1041408
        %v4035 = vrot.slane %v4018, 6
        %v4036 = vrot.slane %v4019, 6
        %v4037 = vsel %vm4034, %v4035, %v4036
        %v4038 = vrot.slane %v4020, 6
        %v4039 = vrot.slane %v4021, 6
        %v4040 = vsel %vm4034, %v4038, %v4039
        %v4041 = vrot.slane %v4022, 6
        %v4042 = vrot.slane %v4023, 6
        %v4043 = vsel %vm4034, %v4041, %v4042
        %v4044 = vrot.slane %v4024, 6
        %v4045 = vrot.slane %v4025, 6
        %v4046 = vsel %vm4034, %v4044, %v4045
        %vm4055 = vcmask 113666
        %4056 = vst.msk [vmem:[%s702 + $0x50] sm:$0xfc] %vm4055, %v4035
        %4057 = vst.msk [vmem:[%s702 + $0x60] sm:$0xff] %vm722, %v4037
        %4058 = vst.msk [vmem:[%s702 + $0xc0] sm:$0xfc] %vm4055, %v4038
        %4059 = vst.msk [vmem:[%s702 + $0xd0] sm:$0xff] %vm722, %v4040
        %4060 = vst.msk [vmem:[%s702 + $0x130] sm:$0xfc] %vm4055, %v4041
        %4061 = vst.msk [vmem:[%s702 + $0x140] sm:$0xff] %vm722, %v4043
        %4062 = vst.msk [vmem:[%s702 + $0x1a0] sm:$0xfc] %vm4055, %v4044
        %4063 = vst.msk [vmem:[%s702 + $0x1b0] sm:$0xff] %vm722, %v4046
        %s4064 = scalar_lea.vmem %s686, 3136 [#allocation2]
        %v4065 = vld [vmem:[%s4064] sm:$0xff]
        %v4066 = vld [vmem:[%s4064 + $0x8] sm:$0x3f]
        %v4067 = vld [vmem:[%s4064 + $0x10] sm:$0xff]
        %v4068 = vld [vmem:[%s4064 + $0x18] sm:$0x3f]
        %v4069 = vld [vmem:[%s4064 + $0x20] sm:$0xff]
        %v4070 = vld [vmem:[%s4064 + $0x28] sm:$0x3f]
        %v4071 = vld [vmem:[%s4064 + $0x30] sm:$0xff]
        %v4072 = vld [vmem:[%s4064 + $0x38] sm:$0x3f]
        %v4081 = vrot.slane %v4065, 6
        %v4082 = vrot.slane %v4066, 6
        %v4083 = vsel %vm4034, %v4081, %v4082
        %v4084 = vrot.slane %v4067, 6
        %v4085 = vrot.slane %v4068, 6
        %v4086 = vsel %vm4034, %v4084, %v4085
        %v4087 = vrot.slane %v4069, 6
        %v4088 = vrot.slane %v4070, 6
        %v4089 = vsel %vm4034, %v4087, %v4088
        %v4090 = vrot.slane %v4071, 6
        %v4091 = vrot.slane %v4072, 6
        %v4092 = vsel %vm4034, %v4090, %v4091
        %4093 = vrot.lane.b32.xlu0 %v4081, 14
        %v4094 = vpop.permute.xlu0 %4093
        %4095 = vrot.lane.b32.xlu0 %v4083, 14
        %v4096 = vpop.permute.xlu0 %4095
        %4097 = vrot.lane.b32.xlu0 %v4084, 14
        %v4098 = vpop.permute.xlu0 %4097
        %4099 = vrot.lane.b32.xlu0 %v4086, 14
        %v4100 = vpop.permute.xlu0 %4099
        %4101 = vrot.lane.b32.xlu0 %v4087, 14
        %v4102 = vpop.permute.xlu0 %4101
        %4103 = vrot.lane.b32.xlu0 %v4089, 14
        %v4104 = vpop.permute.xlu0 %4103
        %4105 = vrot.lane.b32.xlu0 %v4090, 14
        %v4106 = vpop.permute.xlu0 %4105
        %4107 = vrot.lane.b32.xlu0 %v4092, 14
        %v4108 = vpop.permute.xlu0 %4107
        %vm4117 = vcmask 228466
        %4118 = vst.msk [vmem:[%s702 + $0x50] sm:$0xfc] %vm4117, %v4094
        %4119 = vst.msk [vmem:[%s702 + $0x60] sm:$0xff] %vm773, %v4096
        %4120 = vst.msk [vmem:[%s702 + $0xc0] sm:$0xfc] %vm4117, %v4098
        %4121 = vst.msk [vmem:[%s702 + $0xd0] sm:$0xff] %vm773, %v4100
        %4122 = vst.msk [vmem:[%s702 + $0x130] sm:$0xfc] %vm4117, %v4102
        %4123 = vst.msk [vmem:[%s702 + $0x140] sm:$0xff] %vm773, %v4104
        %4124 = vst.msk [vmem:[%s702 + $0x1a0] sm:$0xfc] %vm4117, %v4106
        %4125 = vst.msk [vmem:[%s702 + $0x1b0] sm:$0xff] %vm773, %v4108
        %s4126 = scalar_lea.vmem %s686, 3200 [#allocation2]
        %v4127 = vld [vmem:[%s4126] sm:$0xff]
        %v4128 = vld [vmem:[%s4126 + $0x8] sm:$0x3f]
        %v4129 = vld [vmem:[%s4126 + $0x10] sm:$0xff]
        %v4130 = vld [vmem:[%s4126 + $0x18] sm:$0x3f]
        %v4131 = vld [vmem:[%s4126 + $0x20] sm:$0xff]
        %v4132 = vld [vmem:[%s4126 + $0x28] sm:$0x3f]
        %v4133 = vld [vmem:[%s4126 + $0x30] sm:$0xff]
        %v4134 = vld [vmem:[%s4126 + $0x38] sm:$0x3f]
        %v4143 = vrot.slane %v4127, 6
        %v4144 = vrot.slane %v4128, 6
        %v4145 = vsel %vm4034, %v4143, %v4144
        %v4146 = vrot.slane %v4129, 6
        %v4147 = vrot.slane %v4130, 6
        %v4148 = vsel %vm4034, %v4146, %v4147
        %v4149 = vrot.slane %v4131, 6
        %v4150 = vrot.slane %v4132, 6
        %v4151 = vsel %vm4034, %v4149, %v4150
        %v4152 = vrot.slane %v4133, 6
        %v4153 = vrot.slane %v4134, 6
        %v4154 = vsel %vm4034, %v4152, %v4153
        %4155 = vrot.lane.b32.xlu0 %v4143, 28
        %v4156 = vpop.permute.xlu0 %4155
        %4157 = vrot.lane.b32.xlu0 %v4145, 28
        %v4158 = vpop.permute.xlu0 %4157
        %4159 = vrot.lane.b32.xlu0 %v4146, 28
        %v4160 = vpop.permute.xlu0 %4159
        %4161 = vrot.lane.b32.xlu0 %v4148, 28
        %v4162 = vpop.permute.xlu0 %4161
        %4163 = vrot.lane.b32.xlu0 %v4149, 28
        %v4164 = vpop.permute.xlu0 %4163
        %4165 = vrot.lane.b32.xlu0 %v4151, 28
        %v4166 = vpop.permute.xlu0 %4165
        %4167 = vrot.lane.b32.xlu0 %v4152, 28
        %v4168 = vpop.permute.xlu0 %4167
        %4169 = vrot.lane.b32.xlu0 %v4154, 28
        %v4170 = vpop.permute.xlu0 %4169
        %vm4179 = vcmask 343266
        %4180 = vst.msk [vmem:[%s702 + $0x50] sm:$0xfc] %vm4179, %v4156
        %4181 = vst.msk [vmem:[%s702 + $0x60] sm:$0xff] %vm824, %v4158
        %4182 = vst.msk [vmem:[%s702 + $0xc0] sm:$0xfc] %vm4179, %v4160
        %4183 = vst.msk [vmem:[%s702 + $0xd0] sm:$0xff] %vm824, %v4162
        %4184 = vst.msk [vmem:[%s702 + $0x130] sm:$0xfc] %vm4179, %v4164
        %4185 = vst.msk [vmem:[%s702 + $0x140] sm:$0xff] %vm824, %v4166
        %4186 = vst.msk [vmem:[%s702 + $0x1a0] sm:$0xfc] %vm4179, %v4168
        %4187 = vst.msk [vmem:[%s702 + $0x1b0] sm:$0xff] %vm824, %v4170
        %s4188 = scalar_lea.vmem %s686, 3264 [#allocation2]
        %v4189 = vld [vmem:[%s4188] sm:$0xff]
        %v4190 = vld [vmem:[%s4188 + $0x8] sm:$0x3f]
        %v4191 = vld [vmem:[%s4188 + $0x10] sm:$0xff]
        %v4192 = vld [vmem:[%s4188 + $0x18] sm:$0x3f]
        %v4193 = vld [vmem:[%s4188 + $0x20] sm:$0xff]
        %v4194 = vld [vmem:[%s4188 + $0x28] sm:$0x3f]
        %v4195 = vld [vmem:[%s4188 + $0x30] sm:$0xff]
        %v4196 = vld [vmem:[%s4188 + $0x38] sm:$0x3f]
        %v4205 = vrot.slane %v4189, 6
        %v4206 = vrot.slane %v4190, 6
        %v4207 = vsel %vm4034, %v4205, %v4206
        %v4208 = vrot.slane %v4191, 6
        %v4209 = vrot.slane %v4192, 6
        %v4210 = vsel %vm4034, %v4208, %v4209
        %v4211 = vrot.slane %v4193, 6
        %v4212 = vrot.slane %v4194, 6
        %v4213 = vsel %vm4034, %v4211, %v4212
        %v4214 = vrot.slane %v4195, 6
        %v4215 = vrot.slane %v4196, 6
        %v4216 = vsel %vm4034, %v4214, %v4215
        %4217 = vrot.lane.b32.xlu0 %v4205, 42
        %v4218 = vpop.permute.xlu0 %4217
        %4219 = vrot.lane.b32.xlu0 %v4207, 42
        %v4220 = vpop.permute.xlu0 %4219
        %4221 = vrot.lane.b32.xlu0 %v4208, 42
        %v4222 = vpop.permute.xlu0 %4221
        %4223 = vrot.lane.b32.xlu0 %v4210, 42
        %v4224 = vpop.permute.xlu0 %4223
        %4225 = vrot.lane.b32.xlu0 %v4211, 42
        %v4226 = vpop.permute.xlu0 %4225
        %4227 = vrot.lane.b32.xlu0 %v4213, 42
        %v4228 = vpop.permute.xlu0 %4227
        %4229 = vrot.lane.b32.xlu0 %v4214, 42
        %v4230 = vpop.permute.xlu0 %4229
        %4231 = vrot.lane.b32.xlu0 %v4216, 42
        %v4232 = vpop.permute.xlu0 %4231
        %vm4241 = vcmask 458066
        %4242 = vst.msk [vmem:[%s702 + $0x50] sm:$0xfc] %vm4241, %v4218
        %4243 = vst.msk [vmem:[%s702 + $0x60] sm:$0xff] %vm875, %v4220
        %4244 = vst.msk [vmem:[%s702 + $0xc0] sm:$0xfc] %vm4241, %v4222
        %4245 = vst.msk [vmem:[%s702 + $0xd0] sm:$0xff] %vm875, %v4224
        %4246 = vst.msk [vmem:[%s702 + $0x130] sm:$0xfc] %vm4241, %v4226
        %4247 = vst.msk [vmem:[%s702 + $0x140] sm:$0xff] %vm875, %v4228
        %4248 = vst.msk [vmem:[%s702 + $0x1a0] sm:$0xfc] %vm4241, %v4230
        %4249 = vst.msk [vmem:[%s702 + $0x1b0] sm:$0xff] %vm875, %v4232
        %s4250 = scalar_lea.vmem %s686, 3328 [#allocation2]
        %v4251 = vld [vmem:[%s4250] sm:$0xff]
        %v4252 = vld [vmem:[%s4250 + $0x8] sm:$0x3f]
        %v4253 = vld [vmem:[%s4250 + $0x10] sm:$0xff]
        %v4254 = vld [vmem:[%s4250 + $0x18] sm:$0x3f]
        %v4255 = vld [vmem:[%s4250 + $0x20] sm:$0xff]
        %v4256 = vld [vmem:[%s4250 + $0x28] sm:$0x3f]
        %v4257 = vld [vmem:[%s4250 + $0x30] sm:$0xff]
        %v4258 = vld [vmem:[%s4250 + $0x38] sm:$0x3f]
        %v4267 = vrot.slane %v4251, 6
        %v4268 = vrot.slane %v4252, 6
        %v4269 = vsel %vm4034, %v4267, %v4268
        %v4270 = vrot.slane %v4253, 6
        %v4271 = vrot.slane %v4254, 6
        %v4272 = vsel %vm4034, %v4270, %v4271
        %v4273 = vrot.slane %v4255, 6
        %v4274 = vrot.slane %v4256, 6
        %v4275 = vsel %vm4034, %v4273, %v4274
        %v4276 = vrot.slane %v4257, 6
        %v4277 = vrot.slane %v4258, 6
        %v4278 = vsel %vm4034, %v4276, %v4277
        %4279 = vrot.lane.b32.xlu0 %v4267, 56
        %v4280 = vpop.permute.xlu0 %4279
        %4281 = vrot.lane.b32.xlu0 %v4269, 56
        %v4282 = vpop.permute.xlu0 %4281
        %4283 = vrot.lane.b32.xlu0 %v4270, 56
        %v4284 = vpop.permute.xlu0 %4283
        %4285 = vrot.lane.b32.xlu0 %v4272, 56
        %v4286 = vpop.permute.xlu0 %4285
        %4287 = vrot.lane.b32.xlu0 %v4273, 56
        %v4288 = vpop.permute.xlu0 %4287
        %4289 = vrot.lane.b32.xlu0 %v4275, 56
        %v4290 = vpop.permute.xlu0 %4289
        %4291 = vrot.lane.b32.xlu0 %v4276, 56
        %v4292 = vpop.permute.xlu0 %4291
        %4293 = vrot.lane.b32.xlu0 %v4278, 56
        %v4294 = vpop.permute.xlu0 %4293
        %vm4303 = vcmask 572866
        %4304 = vst.msk [vmem:[%s702 + $0x50] sm:$0xfc] %vm4303, %v4280
        %4305 = vst.msk [vmem:[%s702 + $0x60] sm:$0xff] %vm926, %v4282
        %4306 = vst.msk [vmem:[%s702 + $0xc0] sm:$0xfc] %vm4303, %v4284
        %4307 = vst.msk [vmem:[%s702 + $0xd0] sm:$0xff] %vm926, %v4286
        %4308 = vst.msk [vmem:[%s702 + $0x130] sm:$0xfc] %vm4303, %v4288
        %4309 = vst.msk [vmem:[%s702 + $0x140] sm:$0xff] %vm926, %v4290
        %4310 = vst.msk [vmem:[%s702 + $0x1a0] sm:$0xfc] %vm4303, %v4292
        %4311 = vst.msk [vmem:[%s702 + $0x1b0] sm:$0xff] %vm926, %v4294
        %s4312 = scalar_lea.vmem %s686, 3392 [#allocation2]
        %v4313 = vld [vmem:[%s4312] sm:$0xff]
        %v4314 = vld [vmem:[%s4312 + $0x8] sm:$0x3f]
        %v4315 = vld [vmem:[%s4312 + $0x10] sm:$0xff]
        %v4316 = vld [vmem:[%s4312 + $0x18] sm:$0x3f]
        %v4317 = vld [vmem:[%s4312 + $0x20] sm:$0xff]
        %v4318 = vld [vmem:[%s4312 + $0x28] sm:$0x3f]
        %v4319 = vld [vmem:[%s4312 + $0x30] sm:$0xff]
        %v4320 = vld [vmem:[%s4312 + $0x38] sm:$0x3f]
        %v4329 = vrot.slane %v4313, 6
        %v4330 = vrot.slane %v4314, 6
        %v4331 = vsel %vm4034, %v4329, %v4330
        %v4332 = vrot.slane %v4315, 6
        %v4333 = vrot.slane %v4316, 6
        %v4334 = vsel %vm4034, %v4332, %v4333
        %v4335 = vrot.slane %v4317, 6
        %v4336 = vrot.slane %v4318, 6
        %v4337 = vsel %vm4034, %v4335, %v4336
        %v4338 = vrot.slane %v4319, 6
        %v4339 = vrot.slane %v4320, 6
        %v4340 = vsel %vm4034, %v4338, %v4339
        %4341 = vrot.lane.b32.xlu0 %v4329, 70
        %v4342 = vpop.permute.xlu0 %4341
        %4343 = vrot.lane.b32.xlu0 %v4331, 70
        %v4344 = vpop.permute.xlu0 %4343
        %4345 = vrot.lane.b32.xlu0 %v4332, 70
        %v4346 = vpop.permute.xlu0 %4345
        %4347 = vrot.lane.b32.xlu0 %v4334, 70
        %v4348 = vpop.permute.xlu0 %4347
        %4349 = vrot.lane.b32.xlu0 %v4335, 70
        %v4350 = vpop.permute.xlu0 %4349
        %4351 = vrot.lane.b32.xlu0 %v4337, 70
        %v4352 = vpop.permute.xlu0 %4351
        %4353 = vrot.lane.b32.xlu0 %v4338, 70
        %v4354 = vpop.permute.xlu0 %4353
        %4355 = vrot.lane.b32.xlu0 %v4340, 70
        %v4356 = vpop.permute.xlu0 %4355
        %vm4365 = vcmask 687666
        %4366 = vst.msk [vmem:[%s702 + $0x50] sm:$0xfc] %vm4365, %v4342
        %4367 = vst.msk [vmem:[%s702 + $0x60] sm:$0xff] %vm977, %v4344
        %4368 = vst.msk [vmem:[%s702 + $0xc0] sm:$0xfc] %vm4365, %v4346
        %4369 = vst.msk [vmem:[%s702 + $0xd0] sm:$0xff] %vm977, %v4348
        %4370 = vst.msk [vmem:[%s702 + $0x130] sm:$0xfc] %vm4365, %v4350
        %4371 = vst.msk [vmem:[%s702 + $0x140] sm:$0xff] %vm977, %v4352
        %4372 = vst.msk [vmem:[%s702 + $0x1a0] sm:$0xfc] %vm4365, %v4354
        %4373 = vst.msk [vmem:[%s702 + $0x1b0] sm:$0xff] %vm977, %v4356
        %s4374 = scalar_lea.vmem %s686, 3456 [#allocation2]
        %v4375 = vld [vmem:[%s4374] sm:$0xff]
        %v4376 = vld [vmem:[%s4374 + $0x8] sm:$0x3f]
        %v4377 = vld [vmem:[%s4374 + $0x10] sm:$0xff]
        %v4378 = vld [vmem:[%s4374 + $0x18] sm:$0x3f]
        %v4379 = vld [vmem:[%s4374 + $0x20] sm:$0xff]
        %v4380 = vld [vmem:[%s4374 + $0x28] sm:$0x3f]
        %v4381 = vld [vmem:[%s4374 + $0x30] sm:$0xff]
        %v4382 = vld [vmem:[%s4374 + $0x38] sm:$0x3f]
        %v4391 = vrot.slane %v4375, 6
        %v4392 = vrot.slane %v4376, 6
        %v4393 = vsel %vm4034, %v4391, %v4392
        %v4394 = vrot.slane %v4377, 6
        %v4395 = vrot.slane %v4378, 6
        %v4396 = vsel %vm4034, %v4394, %v4395
        %v4397 = vrot.slane %v4379, 6
        %v4398 = vrot.slane %v4380, 6
        %v4399 = vsel %vm4034, %v4397, %v4398
        %v4400 = vrot.slane %v4381, 6
        %v4401 = vrot.slane %v4382, 6
        %v4402 = vsel %vm4034, %v4400, %v4401
        %4403 = vrot.lane.b32.xlu0 %v4391, 84
        %v4404 = vpop.permute.xlu0 %4403
        %4405 = vrot.lane.b32.xlu0 %v4393, 84
        %v4406 = vpop.permute.xlu0 %4405
        %4407 = vrot.lane.b32.xlu0 %v4394, 84
        %v4408 = vpop.permute.xlu0 %4407
        %4409 = vrot.lane.b32.xlu0 %v4396, 84
        %v4410 = vpop.permute.xlu0 %4409
        %4411 = vrot.lane.b32.xlu0 %v4397, 84
        %v4412 = vpop.permute.xlu0 %4411
        %4413 = vrot.lane.b32.xlu0 %v4399, 84
        %v4414 = vpop.permute.xlu0 %4413
        %4415 = vrot.lane.b32.xlu0 %v4400, 84
        %v4416 = vpop.permute.xlu0 %4415
        %4417 = vrot.lane.b32.xlu0 %v4402, 84
        %v4418 = vpop.permute.xlu0 %4417
        %vm4427 = vcmask 802466
        %4428 = vst.msk [vmem:[%s702 + $0x50] sm:$0xfc] %vm4427, %v4404
        %4429 = vst.msk [vmem:[%s702 + $0x60] sm:$0xff] %vm1028, %v4406
        %4430 = vst.msk [vmem:[%s702 + $0xc0] sm:$0xfc] %vm4427, %v4408
        %4431 = vst.msk [vmem:[%s702 + $0xd0] sm:$0xff] %vm1028, %v4410
        %4432 = vst.msk [vmem:[%s702 + $0x130] sm:$0xfc] %vm4427, %v4412
        %4433 = vst.msk [vmem:[%s702 + $0x140] sm:$0xff] %vm1028, %v4414
        %4434 = vst.msk [vmem:[%s702 + $0x1a0] sm:$0xfc] %vm4427, %v4416
        %4435 = vst.msk [vmem:[%s702 + $0x1b0] sm:$0xff] %vm1028, %v4418
        %s4436 = scalar_lea.vmem %s686, 3520 [#allocation2]
        %v4437 = vld [vmem:[%s4436] sm:$0xff]
        %v4438 = vld [vmem:[%s4436 + $0x8] sm:$0x3f]
        %v4439 = vld [vmem:[%s4436 + $0x10] sm:$0xff]
        %v4440 = vld [vmem:[%s4436 + $0x18] sm:$0x3f]
        %v4441 = vld [vmem:[%s4436 + $0x20] sm:$0xff]
        %v4442 = vld [vmem:[%s4436 + $0x28] sm:$0x3f]
        %v4443 = vld [vmem:[%s4436 + $0x30] sm:$0xff]
        %v4444 = vld [vmem:[%s4436 + $0x38] sm:$0x3f]
        %v4453 = vrot.slane %v4437, 6
        %v4454 = vrot.slane %v4438, 6
        %v4455 = vsel %vm4034, %v4453, %v4454
        %v4456 = vrot.slane %v4439, 6
        %v4457 = vrot.slane %v4440, 6
        %v4458 = vsel %vm4034, %v4456, %v4457
        %v4459 = vrot.slane %v4441, 6
        %v4460 = vrot.slane %v4442, 6
        %v4461 = vsel %vm4034, %v4459, %v4460
        %v4462 = vrot.slane %v4443, 6
        %v4463 = vrot.slane %v4444, 6
        %v4464 = vsel %vm4034, %v4462, %v4463
        %4465 = vrot.lane.b32.xlu0 %v4453, 98
        %v4466 = vpop.permute.xlu0 %4465
        %4467 = vrot.lane.b32.xlu0 %v4455, 98
        %v4468 = vpop.permute.xlu0 %4467
        %4469 = vrot.lane.b32.xlu0 %v4456, 98
        %v4470 = vpop.permute.xlu0 %4469
        %4471 = vrot.lane.b32.xlu0 %v4458, 98
        %v4472 = vpop.permute.xlu0 %4471
        %4473 = vrot.lane.b32.xlu0 %v4459, 98
        %v4474 = vpop.permute.xlu0 %4473
        %4475 = vrot.lane.b32.xlu0 %v4461, 98
        %v4476 = vpop.permute.xlu0 %4475
        %4477 = vrot.lane.b32.xlu0 %v4462, 98
        %v4478 = vpop.permute.xlu0 %4477
        %4479 = vrot.lane.b32.xlu0 %v4464, 98
        %v4480 = vpop.permute.xlu0 %4479
        %vm4489 = vcmask 917266
        %4490 = vst.msk [vmem:[%s702 + $0x50] sm:$0xfc] %vm4489, %v4466
        %4491 = vst.msk [vmem:[%s702 + $0x60] sm:$0xff] %vm1079, %v4468
        %4492 = vst.msk [vmem:[%s702 + $0xc0] sm:$0xfc] %vm4489, %v4470
        %4493 = vst.msk [vmem:[%s702 + $0xd0] sm:$0xff] %vm1079, %v4472
        %4494 = vst.msk [vmem:[%s702 + $0x130] sm:$0xfc] %vm4489, %v4474
        %4495 = vst.msk [vmem:[%s702 + $0x140] sm:$0xff] %vm1079, %v4476
        %4496 = vst.msk [vmem:[%s702 + $0x1a0] sm:$0xfc] %vm4489, %v4478
        %4497 = vst.msk [vmem:[%s702 + $0x1b0] sm:$0xff] %vm1079, %v4480
        %s4498 = scalar_lea.vmem %s686, 3584 [#allocation2]
        %v4499 = vld [vmem:[%s4498] sm:$0xff]
        %v4500 = vld [vmem:[%s4498 + $0x8] sm:$0x3f]
        %v4501 = vld [vmem:[%s4498 + $0x10] sm:$0xff]
        %v4502 = vld [vmem:[%s4498 + $0x18] sm:$0x3f]
        %v4503 = vld [vmem:[%s4498 + $0x20] sm:$0xff]
        %v4504 = vld [vmem:[%s4498 + $0x28] sm:$0x3f]
        %v4505 = vld [vmem:[%s4498 + $0x30] sm:$0xff]
        %v4506 = vld [vmem:[%s4498 + $0x38] sm:$0x3f]
        %v4515 = vrot.slane %v4499, 6
        %v4516 = vrot.slane %v4500, 6
        %v4517 = vsel %vm4034, %v4515, %v4516
        %v4518 = vrot.slane %v4501, 6
        %v4519 = vrot.slane %v4502, 6
        %v4520 = vsel %vm4034, %v4518, %v4519
        %v4521 = vrot.slane %v4503, 6
        %v4522 = vrot.slane %v4504, 6
        %v4523 = vsel %vm4034, %v4521, %v4522
        %v4524 = vrot.slane %v4505, 6
        %v4525 = vrot.slane %v4506, 6
        %v4526 = vsel %vm4034, %v4524, %v4525
        %4527 = vrot.lane.b32.xlu0 %v4515, 112
        %v4528 = vpop.permute.xlu0 %4527
        %4529 = vrot.lane.b32.xlu0 %v4517, 112
        %v4530 = vpop.permute.xlu0 %4529
        %4531 = vrot.lane.b32.xlu0 %v4518, 112
        %v4532 = vpop.permute.xlu0 %4531
        %4533 = vrot.lane.b32.xlu0 %v4520, 112
        %v4534 = vpop.permute.xlu0 %4533
        %4535 = vrot.lane.b32.xlu0 %v4521, 112
        %v4536 = vpop.permute.xlu0 %4535
        %4537 = vrot.lane.b32.xlu0 %v4523, 112
        %v4538 = vpop.permute.xlu0 %4537
        %4539 = vrot.lane.b32.xlu0 %v4524, 112
        %v4540 = vpop.permute.xlu0 %4539
        %4541 = vrot.lane.b32.xlu0 %v4526, 112
        %v4542 = vpop.permute.xlu0 %4541
        %vm4551 = vcmask 1032066
        %4552 = vst.msk [vmem:[%s702 + $0x50] sm:$0xfc] %vm4551, %v4528
        %4553 = vst.msk [vmem:[%s702 + $0x60] sm:$0xff] %vm1130, %v4530
        %4554 = vst.msk [vmem:[%s702 + $0xc0] sm:$0xfc] %vm4551, %v4532
        %4555 = vst.msk [vmem:[%s702 + $0xd0] sm:$0xff] %vm1130, %v4534
        %4556 = vst.msk [vmem:[%s702 + $0x130] sm:$0xfc] %vm4551, %v4536
        %4557 = vst.msk [vmem:[%s702 + $0x140] sm:$0xff] %vm1130, %v4538
        %4558 = vst.msk [vmem:[%s702 + $0x1a0] sm:$0xfc] %vm4551, %v4540
        %4559 = vst.msk [vmem:[%s702 + $0x1b0] sm:$0xff] %vm1130, %v4542
        %s4560 = scalar_lea.vmem %s686, 3648 [#allocation2]
        %v4561 = vld [vmem:[%s4560] sm:$0xff]
        %v4562 = vld [vmem:[%s4560 + $0x8] sm:$0x3f]
        %v4563 = vld [vmem:[%s4560 + $0x10] sm:$0xff]
        %v4564 = vld [vmem:[%s4560 + $0x18] sm:$0x3f]
        %v4565 = vld [vmem:[%s4560 + $0x20] sm:$0xff]
        %v4566 = vld [vmem:[%s4560 + $0x28] sm:$0x3f]
        %v4567 = vld [vmem:[%s4560 + $0x30] sm:$0xff]
        %v4568 = vld [vmem:[%s4560 + $0x38] sm:$0x3f]
        %v4577 = vrot.slane %v4561, 6
        %v4578 = vrot.slane %v4562, 6
        %v4579 = vsel %vm4034, %v4577, %v4578
        %v4580 = vrot.slane %v4563, 6
        %v4581 = vrot.slane %v4564, 6
        %v4582 = vsel %vm4034, %v4580, %v4581
        %v4583 = vrot.slane %v4565, 6
        %v4584 = vrot.slane %v4566, 6
        %v4585 = vsel %vm4034, %v4583, %v4584
        %v4586 = vrot.slane %v4567, 6
        %v4587 = vrot.slane %v4568, 6
        %v4588 = vsel %vm4034, %v4586, %v4587
        %4589 = vrot.lane.b32.xlu0 %v4577, 126
        %v4590 = vpop.permute.xlu0 %4589
        %4591 = vrot.lane.b32.xlu0 %v4579, 126
        %v4592 = vpop.permute.xlu0 %4591
        %4593 = vrot.lane.b32.xlu0 %v4580, 126
        %v4594 = vpop.permute.xlu0 %4593
        %4595 = vrot.lane.b32.xlu0 %v4582, 126
        %v4596 = vpop.permute.xlu0 %4595
        %4597 = vrot.lane.b32.xlu0 %v4583, 126
        %v4598 = vpop.permute.xlu0 %4597
        %4599 = vrot.lane.b32.xlu0 %v4585, 126
        %v4600 = vpop.permute.xlu0 %4599
        %4601 = vrot.lane.b32.xlu0 %v4586, 126
        %v4602 = vpop.permute.xlu0 %4601
        %4603 = vrot.lane.b32.xlu0 %v4588, 126
        %v4604 = vpop.permute.xlu0 %4603
        %vm4613 = vcmask 1048562
        %4614 = vst.msk [vmem:[%s702 + $0x50] sm:$0xfc] %vm4613, %v4590
        %vm4615 = vcmask 97282
        %4616 = vst.msk [vmem:[%s702 + $0x58] sm:$0xfc] %vm4615, %v4590
        %4617 = vst.msk [vmem:[%s702 + $0x60] sm:$0xff] %vm1181, %v4592
        %4618 = vst.msk [vmem:[%s702 + $0x68] sm:$0xff] %vm1183, %v4592
        %4619 = vst.msk [vmem:[%s702 + $0xc0] sm:$0xfc] %vm4613, %v4594
        %4620 = vst.msk [vmem:[%s702 + $0xc8] sm:$0xfc] %vm4615, %v4594
        %4621 = vst.msk [vmem:[%s702 + $0xd0] sm:$0xff] %vm1181, %v4596
        %4622 = vst.msk [vmem:[%s702 + $0xd8] sm:$0xff] %vm1183, %v4596
        %4623 = vst.msk [vmem:[%s702 + $0x130] sm:$0xfc] %vm4613, %v4598
        %4624 = vst.msk [vmem:[%s702 + $0x138] sm:$0xfc] %vm4615, %v4598
        %4625 = vst.msk [vmem:[%s702 + $0x140] sm:$0xff] %vm1181, %v4600
        %4626 = vst.msk [vmem:[%s702 + $0x148] sm:$0xff] %vm1183, %v4600
        %4627 = vst.msk [vmem:[%s702 + $0x1a0] sm:$0xfc] %vm4613, %v4602
        %4628 = vst.msk [vmem:[%s702 + $0x1a8] sm:$0xfc] %vm4615, %v4602
        %4629 = vst.msk [vmem:[%s702 + $0x1b0] sm:$0xff] %vm1181, %v4604
        %4630 = vst.msk [vmem:[%s702 + $0x1b8] sm:$0xff] %vm1183, %v4604
        %s4631 = scalar_lea.vmem %s686, 3712 [#allocation2]
        %v4632 = vld [vmem:[%s4631] sm:$0xff]
        %v4633 = vld [vmem:[%s4631 + $0x8] sm:$0x3f]
        %v4634 = vld [vmem:[%s4631 + $0x10] sm:$0xff]
        %v4635 = vld [vmem:[%s4631 + $0x18] sm:$0x3f]
        %v4636 = vld [vmem:[%s4631 + $0x20] sm:$0xff]
        %v4637 = vld [vmem:[%s4631 + $0x28] sm:$0x3f]
        %v4638 = vld [vmem:[%s4631 + $0x30] sm:$0xff]
        %v4639 = vld [vmem:[%s4631 + $0x38] sm:$0x3f]
        %v4648 = vrot.slane %v4632, 6
        %v4649 = vrot.slane %v4633, 6
        %v4650 = vsel %vm4034, %v4648, %v4649
        %v4651 = vrot.slane %v4634, 6
        %v4652 = vrot.slane %v4635, 6
        %v4653 = vsel %vm4034, %v4651, %v4652
        %v4654 = vrot.slane %v4636, 6
        %v4655 = vrot.slane %v4637, 6
        %v4656 = vsel %vm4034, %v4654, %v4655
        %v4657 = vrot.slane %v4638, 6
        %v4658 = vrot.slane %v4639, 6
        %v4659 = vsel %vm4034, %v4657, %v4658
        %4660 = vrot.lane.b32.xlu0 %v4648, 12
        %v4661 = vpop.permute.xlu0 %4660
        %4662 = vrot.lane.b32.xlu0 %v4650, 12
        %v4663 = vpop.permute.xlu0 %4662
        %4664 = vrot.lane.b32.xlu0 %v4651, 12
        %v4665 = vpop.permute.xlu0 %4664
        %4666 = vrot.lane.b32.xlu0 %v4653, 12
        %v4667 = vpop.permute.xlu0 %4666
        %4668 = vrot.lane.b32.xlu0 %v4654, 12
        %v4669 = vpop.permute.xlu0 %4668
        %4670 = vrot.lane.b32.xlu0 %v4656, 12
        %v4671 = vpop.permute.xlu0 %4670
        %4672 = vrot.lane.b32.xlu0 %v4657, 12
        %v4673 = vpop.permute.xlu0 %4672
        %4674 = vrot.lane.b32.xlu0 %v4659, 12
        %v4675 = vpop.permute.xlu0 %4674
        %vm4684 = vcmask 212066
        %4685 = vst.msk [vmem:[%s702 + $0x58] sm:$0xfc] %vm4684, %v4661
        %4686 = vst.msk [vmem:[%s702 + $0x68] sm:$0xff] %vm1242, %v4663
        %4687 = vst.msk [vmem:[%s702 + $0xc8] sm:$0xfc] %vm4684, %v4665
        %4688 = vst.msk [vmem:[%s702 + $0xd8] sm:$0xff] %vm1242, %v4667
        %4689 = vst.msk [vmem:[%s702 + $0x138] sm:$0xfc] %vm4684, %v4669
        %4690 = vst.msk [vmem:[%s702 + $0x148] sm:$0xff] %vm1242, %v4671
        %4691 = vst.msk [vmem:[%s702 + $0x1a8] sm:$0xfc] %vm4684, %v4673
        %4692 = vst.msk [vmem:[%s702 + $0x1b8] sm:$0xff] %vm1242, %v4675
        %s4693 = scalar_lea.vmem %s686, 3776 [#allocation2]
        %v4694 = vld [vmem:[%s4693] sm:$0xff]
        %v4695 = vld [vmem:[%s4693 + $0x8] sm:$0x3f]
        %v4696 = vld [vmem:[%s4693 + $0x10] sm:$0xff]
        %v4697 = vld [vmem:[%s4693 + $0x18] sm:$0x3f]
        %v4698 = vld [vmem:[%s4693 + $0x20] sm:$0xff]
        %v4699 = vld [vmem:[%s4693 + $0x28] sm:$0x3f]
        %v4700 = vld [vmem:[%s4693 + $0x30] sm:$0xff]
        %v4701 = vld [vmem:[%s4693 + $0x38] sm:$0x3f]
        %v4710 = vrot.slane %v4694, 6
        %v4711 = vrot.slane %v4695, 6
        %v4712 = vsel %vm4034, %v4710, %v4711
        %v4713 = vrot.slane %v4696, 6
        %v4714 = vrot.slane %v4697, 6
        %v4715 = vsel %vm4034, %v4713, %v4714
        %v4716 = vrot.slane %v4698, 6
        %v4717 = vrot.slane %v4699, 6
        %v4718 = vsel %vm4034, %v4716, %v4717
        %v4719 = vrot.slane %v4700, 6
        %v4720 = vrot.slane %v4701, 6
        %v4721 = vsel %vm4034, %v4719, %v4720
        %4722 = vrot.lane.b32.xlu0 %v4710, 26
        %v4723 = vpop.permute.xlu0 %4722
        %4724 = vrot.lane.b32.xlu0 %v4712, 26
        %v4725 = vpop.permute.xlu0 %4724
        %4726 = vrot.lane.b32.xlu0 %v4713, 26
        %v4727 = vpop.permute.xlu0 %4726
        %4728 = vrot.lane.b32.xlu0 %v4715, 26
        %v4729 = vpop.permute.xlu0 %4728
        %4730 = vrot.lane.b32.xlu0 %v4716, 26
        %v4731 = vpop.permute.xlu0 %4730
        %4732 = vrot.lane.b32.xlu0 %v4718, 26
        %v4733 = vpop.permute.xlu0 %4732
        %4734 = vrot.lane.b32.xlu0 %v4719, 26
        %v4735 = vpop.permute.xlu0 %4734
        %4736 = vrot.lane.b32.xlu0 %v4721, 26
        %v4737 = vpop.permute.xlu0 %4736
        %vm4746 = vcmask 326866
        %4747 = vst.msk [vmem:[%s702 + $0x58] sm:$0xfc] %vm4746, %v4723
        %4748 = vst.msk [vmem:[%s702 + $0x68] sm:$0xff] %vm1293, %v4725
        %4749 = vst.msk [vmem:[%s702 + $0xc8] sm:$0xfc] %vm4746, %v4727
        %4750 = vst.msk [vmem:[%s702 + $0xd8] sm:$0xff] %vm1293, %v4729
        %4751 = vst.msk [vmem:[%s702 + $0x138] sm:$0xfc] %vm4746, %v4731
        %4752 = vst.msk [vmem:[%s702 + $0x148] sm:$0xff] %vm1293, %v4733
        %4753 = vst.msk [vmem:[%s702 + $0x1a8] sm:$0xfc] %vm4746, %v4735
        %4754 = vst.msk [vmem:[%s702 + $0x1b8] sm:$0xff] %vm1293, %v4737
        %s4755 = scalar_lea.vmem %s686, 3840 [#allocation2]
        %v4756 = vld [vmem:[%s4755] sm:$0xff]
        %v4757 = vld [vmem:[%s4755 + $0x8] sm:$0x3f]
        %v4758 = vld [vmem:[%s4755 + $0x10] sm:$0xff]
        %v4759 = vld [vmem:[%s4755 + $0x18] sm:$0x3f]
        %v4760 = vld [vmem:[%s4755 + $0x20] sm:$0xff]
        %v4761 = vld [vmem:[%s4755 + $0x28] sm:$0x3f]
        %v4762 = vld [vmem:[%s4755 + $0x30] sm:$0xff]
        %v4763 = vld [vmem:[%s4755 + $0x38] sm:$0x3f]
        %v4772 = vrot.slane %v4756, 6
        %v4773 = vrot.slane %v4757, 6
        %v4774 = vsel %vm4034, %v4772, %v4773
        %v4775 = vrot.slane %v4758, 6
        %v4776 = vrot.slane %v4759, 6
        %v4777 = vsel %vm4034, %v4775, %v4776
        %v4778 = vrot.slane %v4760, 6
        %v4779 = vrot.slane %v4761, 6
        %v4780 = vsel %vm4034, %v4778, %v4779
        %v4781 = vrot.slane %v4762, 6
        %v4782 = vrot.slane %v4763, 6
        %v4783 = vsel %vm4034, %v4781, %v4782
        %4784 = vrot.lane.b32.xlu0 %v4772, 40
        %v4785 = vpop.permute.xlu0 %4784
        %4786 = vrot.lane.b32.xlu0 %v4774, 40
        %v4787 = vpop.permute.xlu0 %4786
        %4788 = vrot.lane.b32.xlu0 %v4775, 40
        %v4789 = vpop.permute.xlu0 %4788
        %4790 = vrot.lane.b32.xlu0 %v4777, 40
        %v4791 = vpop.permute.xlu0 %4790
        %4792 = vrot.lane.b32.xlu0 %v4778, 40
        %v4793 = vpop.permute.xlu0 %4792
        %4794 = vrot.lane.b32.xlu0 %v4780, 40
        %v4795 = vpop.permute.xlu0 %4794
        %4796 = vrot.lane.b32.xlu0 %v4781, 40
        %v4797 = vpop.permute.xlu0 %4796
        %4798 = vrot.lane.b32.xlu0 %v4783, 40
        %v4799 = vpop.permute.xlu0 %4798
        %vm4808 = vcmask 441666
        %4809 = vst.msk [vmem:[%s702 + $0x58] sm:$0xfc] %vm4808, %v4785
        %4810 = vst.msk [vmem:[%s702 + $0x68] sm:$0xff] %vm1344, %v4787
        %4811 = vst.msk [vmem:[%s702 + $0xc8] sm:$0xfc] %vm4808, %v4789
        %4812 = vst.msk [vmem:[%s702 + $0xd8] sm:$0xff] %vm1344, %v4791
        %4813 = vst.msk [vmem:[%s702 + $0x138] sm:$0xfc] %vm4808, %v4793
        %4814 = vst.msk [vmem:[%s702 + $0x148] sm:$0xff] %vm1344, %v4795
        %4815 = vst.msk [vmem:[%s702 + $0x1a8] sm:$0xfc] %vm4808, %v4797
        %4816 = vst.msk [vmem:[%s702 + $0x1b8] sm:$0xff] %vm1344, %v4799
        %s4817 = scalar_lea.vmem %s686, 3904 [#allocation2]
        %v4818 = vld [vmem:[%s4817] sm:$0xff]
        %v4819 = vld [vmem:[%s4817 + $0x8] sm:$0x3f]
        %v4820 = vld [vmem:[%s4817 + $0x10] sm:$0xff]
        %v4821 = vld [vmem:[%s4817 + $0x18] sm:$0x3f]
        %v4822 = vld [vmem:[%s4817 + $0x20] sm:$0xff]
        %v4823 = vld [vmem:[%s4817 + $0x28] sm:$0x3f]
        %v4824 = vld [vmem:[%s4817 + $0x30] sm:$0xff]
        %v4825 = vld [vmem:[%s4817 + $0x38] sm:$0x3f]
        %v4834 = vrot.slane %v4818, 6
        %v4835 = vrot.slane %v4819, 6
        %v4836 = vsel %vm4034, %v4834, %v4835
        %v4837 = vrot.slane %v4820, 6
        %v4838 = vrot.slane %v4821, 6
        %v4839 = vsel %vm4034, %v4837, %v4838
        %v4840 = vrot.slane %v4822, 6
        %v4841 = vrot.slane %v4823, 6
        %v4842 = vsel %vm4034, %v4840, %v4841
        %v4843 = vrot.slane %v4824, 6
        %v4844 = vrot.slane %v4825, 6
        %v4845 = vsel %vm4034, %v4843, %v4844
        %4846 = vrot.lane.b32.xlu0 %v4834, 54
        %v4847 = vpop.permute.xlu0 %4846
        %4848 = vrot.lane.b32.xlu0 %v4836, 54
        %v4849 = vpop.permute.xlu0 %4848
        %4850 = vrot.lane.b32.xlu0 %v4837, 54
        %v4851 = vpop.permute.xlu0 %4850
        %4852 = vrot.lane.b32.xlu0 %v4839, 54
        %v4853 = vpop.permute.xlu0 %4852
        %4854 = vrot.lane.b32.xlu0 %v4840, 54
        %v4855 = vpop.permute.xlu0 %4854
        %4856 = vrot.lane.b32.xlu0 %v4842, 54
        %v4857 = vpop.permute.xlu0 %4856
        %4858 = vrot.lane.b32.xlu0 %v4843, 54
        %v4859 = vpop.permute.xlu0 %4858
        %4860 = vrot.lane.b32.xlu0 %v4845, 54
        %v4861 = vpop.permute.xlu0 %4860
        %vm4870 = vcmask 556466
        %4871 = vst.msk [vmem:[%s702 + $0x58] sm:$0xfc] %vm4870, %v4847
        %4872 = vst.msk [vmem:[%s702 + $0x68] sm:$0xff] %vm1395, %v4849
        %4873 = vst.msk [vmem:[%s702 + $0xc8] sm:$0xfc] %vm4870, %v4851
        %4874 = vst.msk [vmem:[%s702 + $0xd8] sm:$0xff] %vm1395, %v4853
        %4875 = vst.msk [vmem:[%s702 + $0x138] sm:$0xfc] %vm4870, %v4855
        %4876 = vst.msk [vmem:[%s702 + $0x148] sm:$0xff] %vm1395, %v4857
        %4877 = vst.msk [vmem:[%s702 + $0x1a8] sm:$0xfc] %vm4870, %v4859
        %4878 = vst.msk [vmem:[%s702 + $0x1b8] sm:$0xff] %vm1395, %v4861
        %s4879 = scalar_lea.vmem %s686, 3968 [#allocation2]
        %v4880 = vld [vmem:[%s4879] sm:$0xff]
        %v4881 = vld [vmem:[%s4879 + $0x8] sm:$0x3f]
        %v4882 = vld [vmem:[%s4879 + $0x10] sm:$0xff]
        %v4883 = vld [vmem:[%s4879 + $0x18] sm:$0x3f]
        %v4884 = vld [vmem:[%s4879 + $0x20] sm:$0xff]
        %v4885 = vld [vmem:[%s4879 + $0x28] sm:$0x3f]
        %v4886 = vld [vmem:[%s4879 + $0x30] sm:$0xff]
        %v4887 = vld [vmem:[%s4879 + $0x38] sm:$0x3f]
        %v4896 = vrot.slane %v4880, 6
        %v4897 = vrot.slane %v4881, 6
        %v4898 = vsel %vm4034, %v4896, %v4897
        %v4899 = vrot.slane %v4882, 6
        %v4900 = vrot.slane %v4883, 6
        %v4901 = vsel %vm4034, %v4899, %v4900
        %v4902 = vrot.slane %v4884, 6
        %v4903 = vrot.slane %v4885, 6
        %v4904 = vsel %vm4034, %v4902, %v4903
        %v4905 = vrot.slane %v4886, 6
        %v4906 = vrot.slane %v4887, 6
        %v4907 = vsel %vm4034, %v4905, %v4906
        %4908 = vrot.lane.b32.xlu0 %v4896, 68
        %v4909 = vpop.permute.xlu0 %4908
        %4910 = vrot.lane.b32.xlu0 %v4898, 68
        %v4911 = vpop.permute.xlu0 %4910
        %4912 = vrot.lane.b32.xlu0 %v4899, 68
        %v4913 = vpop.permute.xlu0 %4912
        %4914 = vrot.lane.b32.xlu0 %v4901, 68
        %v4915 = vpop.permute.xlu0 %4914
        %4916 = vrot.lane.b32.xlu0 %v4902, 68
        %v4917 = vpop.permute.xlu0 %4916
        %4918 = vrot.lane.b32.xlu0 %v4904, 68
        %v4919 = vpop.permute.xlu0 %4918
        %4920 = vrot.lane.b32.xlu0 %v4905, 68
        %v4921 = vpop.permute.xlu0 %4920
        %4922 = vrot.lane.b32.xlu0 %v4907, 68
        %v4923 = vpop.permute.xlu0 %4922
        %vm4932 = vcmask 671266
        %4933 = vst.msk [vmem:[%s702 + $0x58] sm:$0xfc] %vm4932, %v4909
        %4934 = vst.msk [vmem:[%s702 + $0x68] sm:$0xff] %vm1446, %v4911
        %4935 = vst.msk [vmem:[%s702 + $0xc8] sm:$0xfc] %vm4932, %v4913
        %4936 = vst.msk [vmem:[%s702 + $0xd8] sm:$0xff] %vm1446, %v4915
        %4937 = vst.msk [vmem:[%s702 + $0x138] sm:$0xfc] %vm4932, %v4917
        %4938 = vst.msk [vmem:[%s702 + $0x148] sm:$0xff] %vm1446, %v4919
        %4939 = vst.msk [vmem:[%s702 + $0x1a8] sm:$0xfc] %vm4932, %v4921
        %4940 = vst.msk [vmem:[%s702 + $0x1b8] sm:$0xff] %vm1446, %v4923
        %s4941 = scalar_lea.vmem %s686, 4032 [#allocation2]
        %v4942 = vld [vmem:[%s4941] sm:$0xff]
        %v4943 = vld [vmem:[%s4941 + $0x8] sm:$0x3f]
        %v4944 = vld [vmem:[%s4941 + $0x10] sm:$0xff]
        %v4945 = vld [vmem:[%s4941 + $0x18] sm:$0x3f]
        %v4946 = vld [vmem:[%s4941 + $0x20] sm:$0xff]
        %v4947 = vld [vmem:[%s4941 + $0x28] sm:$0x3f]
        %v4948 = vld [vmem:[%s4941 + $0x30] sm:$0xff]
        %v4949 = vld [vmem:[%s4941 + $0x38] sm:$0x3f]
        %v4958 = vrot.slane %v4942, 6
        %v4959 = vrot.slane %v4943, 6
        %v4960 = vsel %vm4034, %v4958, %v4959
        %v4961 = vrot.slane %v4944, 6
        %v4962 = vrot.slane %v4945, 6
        %v4963 = vsel %vm4034, %v4961, %v4962
        %v4964 = vrot.slane %v4946, 6
        %v4965 = vrot.slane %v4947, 6
        %v4966 = vsel %vm4034, %v4964, %v4965
        %v4967 = vrot.slane %v4948, 6
        %v4968 = vrot.slane %v4949, 6
        %v4969 = vsel %vm4034, %v4967, %v4968
        %4970 = vrot.lane.b32.xlu0 %v4958, 82
        %v4971 = vpop.permute.xlu0 %4970
        %4972 = vrot.lane.b32.xlu0 %v4960, 82
        %v4973 = vpop.permute.xlu0 %4972
        %4974 = vrot.lane.b32.xlu0 %v4961, 82
        %v4975 = vpop.permute.xlu0 %4974
        %4976 = vrot.lane.b32.xlu0 %v4963, 82
        %v4977 = vpop.permute.xlu0 %4976
        %4978 = vrot.lane.b32.xlu0 %v4964, 82
        %v4979 = vpop.permute.xlu0 %4978
        %4980 = vrot.lane.b32.xlu0 %v4966, 82
        %v4981 = vpop.permute.xlu0 %4980
        %4982 = vrot.lane.b32.xlu0 %v4967, 82
        %v4983 = vpop.permute.xlu0 %4982
        %4984 = vrot.lane.b32.xlu0 %v4969, 82
        %v4985 = vpop.permute.xlu0 %4984
        %vm4994 = vcmask 786066
        %4995 = vst.msk [vmem:[%s702 + $0x58] sm:$0xfc] %vm4994, %v4971
        %4996 = vst.msk [vmem:[%s702 + $0x68] sm:$0xff] %vm1497, %v4973
        %4997 = vst.msk [vmem:[%s702 + $0xc8] sm:$0xfc] %vm4994, %v4975
        %4998 = vst.msk [vmem:[%s702 + $0xd8] sm:$0xff] %vm1497, %v4977
        %4999 = vst.msk [vmem:[%s702 + $0x138] sm:$0xfc] %vm4994, %v4979
        %5000 = vst.msk [vmem:[%s702 + $0x148] sm:$0xff] %vm1497, %v4981
        %5001 = vst.msk [vmem:[%s702 + $0x1a8] sm:$0xfc] %vm4994, %v4983
        %5002 = vst.msk [vmem:[%s702 + $0x1b8] sm:$0xff] %vm1497, %v4985
        %s5003 = sand.u32 %s65, 1
        %s5004 = scalar_lea.sflag [#allocation4], %s5003
        %s5005 = sand.u32 %s65, 1
        %s5006 = smul.addr %s5005, 448
        %s5007 = scalar_lea.vmem [#allocation3], %s5006
        // Predicated region
        $region63: #{tpu_custom_call.1} parent=57 // pred_check
          %p5008 = pneg %p75
        $region64: #{tpu_custom_call.1} parent=57 // pred_check_branch
          %5010 = sbr.rel (%p5008) target = $region66
        $region65: #{tpu_custom_call.1} parent=57 // pred_region
          #allocation6 [shape = 'u32[6]{0}', space=smem, size = 0x18, scoped, tag = 'DMA stride descriptor']
          %s5011 = smul.u32 4, %s19
          %s5012 = smul.u32 7, %s20
          %s5014 = ssub.s32 7168, 7168
          %5015 = vsyncadd %s5004, %s5014
          %s5016 = smul.addr %s5012, 2
          %s5017 = smul.addr %s5011, 56
          %s5018 = sadd.s32 %s5016, %s5017
          %s5019 = smul.addr %s5018, 128
          %s5020 = scalar_lea.hbm %s1, %s5019
          %s5022 = sshll.u32 1, 14
          %s5023 = sxor.u32 4294967295, %s5022
          %s5026 = sshll.u32 7, 18
          %s5027 = sxor.u32 4294967295, %s5026
          %s5028 = sand.u32 0, %s5027
          %s5030 = sor.u32 %s5028, 0
          %s5032 = sshll.u32 3, 24
          %s5033 = sxor.u32 4294967295, %s5032
          %s5034 = sand.u32 %s5030, %s5033
          %s5036 = sor.u32 %s5034, 0
          %s5037 = sshll.u32 %s5007, 4
          %s5038 = int_to_ptr.vmem [resolvable:$true] %s5037
          %5044 = sst [smem:[#allocation6]] 1792
          %s5045 = scalar_lea.smem [#allocation6], 1
          %5046 = sst [smem:[%s5045]] 7168
          %s5047 = scalar_lea.smem [#allocation6], 2
          %5048 = sst [smem:[%s5047]] 7
          %s5049 = scalar_lea.smem [#allocation6], 3
          %5050 = sst [smem:[%s5049]] 256
          %s5051 = scalar_lea.smem [#allocation6], 4
          %5052 = sst [smem:[%s5051]] 256
          %s5053 = scalar_lea.smem [#allocation6], 5
          %5054 = sst [smem:[%s5053]] 16
          %5056 = dma.general %s5038, 7168, %s5020, %s5004, [#allocation5], [#allocation6], %s5036, 0
        $region66: #{tpu_custom_call.1} parent=57 // pred_fallthru
          _
      $region58: #{tpu_custom_call.1} parent=5 // pred_fallthru
        _
      %p5057 = scmp.le.s32.totalorder 2, %s10
      // Predicated region
      $region67: #{tpu_custom_call.1} parent=5 // pred_check
        %p5058 = pneg %p5057
      $region68: #{tpu_custom_call.1} parent=5 // pred_check_branch
        %5060 = sbr.rel (%p5058) target = $region70
      $region69: #{tpu_custom_call.1} parent=5 // pred_region
        %s5061 = ssub.s32 %s10, 2
        // Predicated region
        $region71: #{tpu_custom_call.1} parent=69 // pred_check
          %p5062 = pneg %p81
        $region72: #{tpu_custom_call.1} parent=69 // pred_check_branch
          %5064 = sbr.rel (%p5062) target = $region74
        $region73: #{tpu_custom_call.1} parent=69 // pred_region
          %s5065 = sand.u32 %s66, 1
          %s5066 = scalar_lea.sflag [#allocation4], %s5065
          %s5067 = sand.u32 %s66, 1
          %s5068 = smul.addr %s5067, 448
          %s5069 = scalar_lea.vmem [#allocation3], %s5068
          %5070 = dma.done %s5066, 7168
        $region74: #{tpu_custom_call.1} parent=69 // pred_fallthru
          _
      $region70: #{tpu_custom_call.1} parent=5 // pred_fallthru
        _
    $region6: #{tpu_custom_call.1} parent=1 // loop_footer
      %s14 = sadd.s32 1, %s10
    $region7: #{tpu_custom_call.1} parent=1 // loop_footer_branch
      %9 = sbr.rel target = $region3
    $region8: #{tpu_custom_call.1} parent=1 // loop_exit
      _
    %5071 = vsyncpa [#allocation4], 1
    %s5072 = scalar_lea.sflag [#allocation4], 1
    %5073 = vsyncpa %s5072, 1

</llo_original>
